<compile_context>
chip_gen: v7x
topology: tpu7x:2x2x1
jax: 0.10.0
libtpu: 0.0.40
codegen_flags: <defaults>
</compile_context>

<pallas_src>
import jax
import jax.numpy as jnp
from jax import lax
from jax.experimental import pallas as pl
from jax.experimental.pallas import tpu as pltpu


def _make_lstm_kernel(F, H, T, B, G, Wo):
    """Builds the whole-sequence LSTM + fc kernel for static sizes.

    F: input features, H: hidden size, T: seq len, B: batch,
    G = 4*H (gate width), Wo = fc output width padded to a multiple of 128.
    Packed param rows: [0:F]=w_ih^T, [F]=bias, [F+1:F+1+H]=w_hh^T,
                       [F+1+H:F+1+2H]=w_fc^T, [F+1+2H]=b_fc.
    w_ih^T / w_hh^T / bias have their g-gate columns pre-scaled by 2 so a single
    sigmoid over the full (B, G) gates vreg recovers tanh for the g gate.
    """
    HP = lax.Precision.HIGHEST  # pinned: exact f32 semantics, stable across gens

    r_b = F
    r_whh = F + 1
    r_wfc = F + 1 + H
    r_bfc = F + 1 + 2 * H

    def kernel(x_ref, p_ref, out_ref):
        # ---- unpack the single packed parameter buffer (static row slices) ----
        wih = p_ref[0:F, 0:G]                      # (F, 4H)
        bias = p_ref[r_b:r_b + 1, 0:G]             # (1, 4H)
        whh = p_ref[r_whh:r_whh + H, 0:G]          # (H, 4H)  loaded ONCE, vreg-resident
        wfc = p_ref[r_wfc:r_wfc + H, 0:Wo]         # (H, Wo)
        bfc = p_ref[r_bfc:r_bfc + 1, 0:Wo]         # (1, Wo)

        # ---- hoisted input projection + bias for the whole sequence ----------
        # x_ref is time-major rows: (T*B, F); one MXU push for all T steps.
        xg = jnp.dot(x_ref[...], wih,
                     preferred_element_type=jnp.float32,
                     precision=HP) + bias                      # (T*B, 4H)

        # ---- t = 0 peeled: h = c = 0 -> gates = xg rows [0:B], no h@W_hh ------
        s = jax.nn.sigmoid(xg[0:B, :])             # one full-width EUP op
        i_g = s[:, 0:H]
        g_g = 2.0 * s[:, 2 * H:3 * H] - 1.0        # == tanh(raw g), exact
        o_g = s[:, 3 * H:4 * H]
        c = i_g * g_g
        h = o_g * jnp.tanh(c)

        # ---- fully-unrolled recurrence (T small; static Python indices) -------
        for t in range(1, T):
            gates = xg[t * B:(t + 1) * B, :] + jnp.dot(
                h, whh, preferred_element_type=jnp.float32, precision=HP)
            s = jax.nn.sigmoid(gates)
            i_g = s[:, 0:H]
            f_g = s[:, H:2 * H]
            g_g = 2.0 * s[:, 2 * H:3 * H] - 1.0
            o_g = s[:, 3 * H:4 * H]
            c = f_g * c + i_g * g_g
            h = o_g * jnp.tanh(c)

        # ---- fc(last hidden), lane-dense (B, Wo) store -------------------------
        out_ref[...] = jnp.dot(h, wfc,
                               preferred_element_type=jnp.float32,
                               precision=HP) + bfc

    return kernel


def lstm_predictor_forward(x, kernel_params):
    """x: (B, T, F) float32.  kernel_params from prepare_kernel_params.  -> (B, O)."""
    packed, (F, H, O, G, Wo) = kernel_params
    B, T, Fx = x.shape
    assert Fx == F

    # Layout plumbing outside the kernel: time-major rows so per-step gate slices
    # are contiguous sub-vreg reads inside the kernel.
    x_tm = jnp.transpose(x, (1, 0, 2)).reshape(T * B, F)

    vmem = pl.BlockSpec(memory_space=pltpu.MemorySpace.VMEM)
    out_pad = pl.pallas_call(
        _make_lstm_kernel(F, H, T, B, G, Wo),
        out_shape=jax.ShapeDtypeStruct((B, Wo), jnp.float32),
        in_specs=[vmem, vmem],
        out_specs=vmem,
    )(x_tm, packed)
    return out_pad[:, :O]


def lstm_predictor_ref(x, params):
    """Pure-JAX reference matching torch.nn.LSTM(batch_first) + Linear semantics."""
    HP = lax.Precision.HIGHEST
    w_ih_t, w_hh_t, b, w_fc_t, b_fc = params
    H = w_hh_t.shape[0]
    B = x.shape[0]

    def step(carry, x_t):
        h, c = carry
        gates = (jnp.dot(x_t, w_ih_t, precision=HP)
                 + jnp.dot(h, w_hh_t, precision=HP) + b)
        i = jax.nn.sigmoid(gates[:, 0:H])
        f = jax.nn.sigmoid(gates[:, H:2 * H])
        g = jnp.tanh(gates[:, 2 * H:3 * H])
        o = jax.nn.sigmoid(gates[:, 3 * H:4 * H])
        c = f * c + i * g
        h = o * jnp.tanh(c)
        return (h, c), None

    h0 = jnp.zeros((B, H), jnp.float32)
    (h_last, _), _ = lax.scan(step, (h0, h0), jnp.transpose(x, (1, 0, 2)))
    return jnp.dot(h_last, w_fc_t, precision=HP) + b_fc


def init_params(key, num_features, hidden_size, output_size):
    """PyTorch-equivalent params: uniform(-1/sqrt(H), 1/sqrt(H)), pre-transposed."""
    k = 1.0 / jnp.sqrt(jnp.float32(hidden_size))
    ks = jax.random.split(key, 6)
    w_ih = jax.random.uniform(ks[0], (4 * hidden_size, num_features),
                              jnp.float32, -k, k)
    w_hh = jax.random.uniform(ks[1], (4 * hidden_size, hidden_size),
                              jnp.float32, -k, k)
    b_ih = jax.random.uniform(ks[2], (4 * hidden_size,), jnp.float32, -k, k)
    b_hh = jax.random.uniform(ks[3], (4 * hidden_size,), jnp.float32, -k, k)
    w_fc = jax.random.uniform(ks[4], (output_size, hidden_size),
                              jnp.float32, -k, k)
    b_fc = jax.random.uniform(ks[5], (output_size,), jnp.float32, -k, k)
    return (w_ih.T,                                     # (F, 4H)
            w_hh.T,                                     # (H, 4H)
            (b_ih + b_hh).reshape(1, 4 * hidden_size),  # (1, 4H)
            w_fc.T,                                     # (H, O)
            b_fc.reshape(1, output_size))               # (1, O)


def prepare_kernel_params(params):
    """One-time offline prep:
      * scale the g-gate (3rd quarter) columns of w_ih^T / w_hh^T / bias by 2 so
        the kernel uses one full-width sigmoid (tanh(x) = 2*sigmoid(2x) - 1);
      * pad fc params to a multiple of 128 lanes;
      * pack everything into a single lane-dense f32 buffer (2 input DMAs total).
    """
    w_ih_t, w_hh_t, b, w_fc_t, b_fc = params
    F = w_ih_t.shape[0]
    H = w_hh_t.shape[0]
    G = 4 * H
    O = w_fc_t.shape[1]
    Wo = ((O + 127) // 128) * 128
    W = max(G, Wo)

    scale = jnp.concatenate([jnp.ones((2 * H,), jnp.float32),
                             2.0 * jnp.ones((H,), jnp.float32),
                             jnp.ones((H,), jnp.float32)])        # (4H,)

    def pad_lanes(a):
        return jnp.pad(a, ((0, 0), (0, W - a.shape[1])))

    packed = jnp.concatenate([
        pad_lanes(w_ih_t * scale),    # rows [0:F]
        pad_lanes(b * scale),         # row  [F]
        pad_lanes(w_hh_t * scale),    # rows [F+1 : F+1+H]
        pad_lanes(w_fc_t),            # rows [F+1+H : F+1+2H]
        pad_lanes(b_fc),              # row  [F+1+2H]
    ], axis=0).astype(jnp.float32)    # (F + 2 + 2H, W)

    return packed, (F, H, O, G, Wo)


if __name__ == "__main__":
    B, T, F = 2, 8, 4          # batch=2, seq=8, features=4 (features=[0,1,2,3])
    H, O = 32, 96              # hidden_size=32, output_size=24*4

    key = jax.random.PRNGKey(0)
    k_x, k_p = jax.random.split(key)
    x = jax.random.normal(k_x, (B, T, F), jnp.float32)
    params = init_params(k_p, F, H, O)
    packed, meta = prepare_kernel_params(params)
    kernel_params = (jax.block_until_ready(packed), meta)

    out = jax.block_until_ready(lstm_predictor_forward(x, kernel_params))
    ref = jax.block_until_ready(lstm_predictor_ref(x, params))

    assert out.shape == (B, O), out.shape
    assert jnp.allclose(out, ref, atol=1e-5, rtol=1e-5), \
        f"max err {jnp.max(jnp.abs(out - ref))}"
    print("KERNEL_OK")
</pallas_src>

<mosaic_0001>
module attributes {stable_mosaic.version = 11 : i64} {
  func.func @kernel(%arg0: memref<16x4xf32, #tpu.memory_space<vmem>>, %arg1: memref<70x128xf32, #tpu.memory_space<vmem>>, %arg2: memref<2x128xf32, #tpu.memory_space<vmem>>) attributes {dimension_semantics = [], scalar_prefetch = 0 : i64, scratch_operands = 0 : i64, tpu.core_type = #tpu.core_type<tc>} {
    %c0 = arith.constant 0 : index
    %c0_0 = arith.constant 0 : index
    %0 = vector.load %arg1[%c0, %c0_0] : memref<70x128xf32, #tpu.memory_space<vmem>>, vector<4x128xf32>
    %c4 = arith.constant 4 : index
    %c0_1 = arith.constant 0 : index
    %1 = vector.load %arg1[%c4, %c0_1] : memref<70x128xf32, #tpu.memory_space<vmem>>, vector<1x128xf32>
    %c5 = arith.constant 5 : index
    %c0_2 = arith.constant 0 : index
    %2 = vector.load %arg1[%c5, %c0_2] : memref<70x128xf32, #tpu.memory_space<vmem>>, vector<32x128xf32>
    %c37 = arith.constant 37 : index
    %c0_3 = arith.constant 0 : index
    %3 = vector.load %arg1[%c37, %c0_3] : memref<70x128xf32, #tpu.memory_space<vmem>>, vector<32x128xf32>
    %c69 = arith.constant 69 : index
    %c0_4 = arith.constant 0 : index
    %4 = vector.load %arg1[%c69, %c0_4] : memref<70x128xf32, #tpu.memory_space<vmem>>, vector<1x128xf32>
    %c0_5 = arith.constant 0 : index
    %c0_6 = arith.constant 0 : index
    %5 = vector.load %arg0[%c0_5, %c0_6] : memref<16x4xf32, #tpu.memory_space<vmem>>, vector<16x4xf32>
    %cst = arith.constant dense<0.000000e+00> : vector<16x128xf32>
    %6 = tpu.matmul %5, %0, %cst {dimension_numbers = #tpu.dot_dimension_numbers<[1], [0], [0], [1], [0, 0, 1, 1], [], []>, precision = #tpu.contract_precision<fp32>} : vector<16x4xf32>, vector<4x128xf32>, vector<16x128xf32> -> vector<16x128xf32>
    %7 = vector.broadcast %1 : vector<1x128xf32> to vector<16x128xf32>
    %8 = arith.addf %6, %7 : vector<16x128xf32>
    %9 = vector.extract_strided_slice %8 {offsets = [0, 0], sizes = [2, 128], strides = [1, 1]} : vector<16x128xf32> to vector<2x128xf32>
    %10 = arith.negf %9 : vector<2x128xf32>
    %11 = math.exp %10 : vector<2x128xf32>
    %cst_7 = arith.constant 1.000000e+00 : f32
    %12 = vector.broadcast %cst_7 : f32 to vector<2x128xf32>
    %13 = arith.addf %12, %11 : vector<2x128xf32>
    %14 = arith.divf %12, %13 : vector<2x128xf32>
    %15 = vector.extract_strided_slice %14 {offsets = [0, 0], sizes = [2, 32], strides = [1, 1]} : vector<2x128xf32> to vector<2x32xf32>
    %16 = vector.extract_strided_slice %14 {offsets = [0, 64], sizes = [2, 32], strides = [1, 1]} : vector<2x128xf32> to vector<2x32xf32>
    %cst_8 = arith.constant 2.000000e+00 : f32
    %17 = vector.broadcast %cst_8 : f32 to vector<2x32xf32>
    %18 = arith.mulf %17, %16 : vector<2x32xf32>
    %cst_9 = arith.constant 1.000000e+00 : f32
    %19 = vector.broadcast %cst_9 : f32 to vector<2x32xf32>
    %20 = arith.subf %18, %19 : vector<2x32xf32>
    %21 = vector.extract_strided_slice %14 {offsets = [0, 96], sizes = [2, 32], strides = [1, 1]} : vector<2x128xf32> to vector<2x32xf32>
    %22 = arith.mulf %15, %20 : vector<2x32xf32>
    %23 = math.tanh %22 : vector<2x32xf32>
    %24 = arith.mulf %21, %23 : vector<2x32xf32>
    %25 = vector.extract_strided_slice %8 {offsets = [2, 0], sizes = [2, 128], strides = [1, 1]} : vector<16x128xf32> to vector<2x128xf32>
    %cst_10 = arith.constant dense<0.000000e+00> : vector<2x128xf32>
    %26 = tpu.matmul %24, %2, %cst_10 {dimension_numbers = #tpu.dot_dimension_numbers<[1], [0], [0], [1], [0, 0, 1, 1], [], []>, precision = #tpu.contract_precision<fp32>} : vector<2x32xf32>, vector<32x128xf32>, vector<2x128xf32> -> vector<2x128xf32>
    %27 = arith.addf %25, %26 : vector<2x128xf32>
    %28 = arith.negf %27 : vector<2x128xf32>
    %29 = math.exp %28 : vector<2x128xf32>
    %cst_11 = arith.constant 1.000000e+00 : f32
    %30 = vector.broadcast %cst_11 : f32 to vector<2x128xf32>
    %31 = arith.addf %30, %29 : vector<2x128xf32>
    %32 = arith.divf %30, %31 : vector<2x128xf32>
    %33 = vector.extract_strided_slice %32 {offsets = [0, 0], sizes = [2, 32], strides = [1, 1]} : vector<2x128xf32> to vector<2x32xf32>
    %34 = vector.extract_strided_slice %32 {offsets = [0, 32], sizes = [2, 32], strides = [1, 1]} : vector<2x128xf32> to vector<2x32xf32>
    %35 = vector.extract_strided_slice %32 {offsets = [0, 64], sizes = [2, 32], strides = [1, 1]} : vector<2x128xf32> to vector<2x32xf32>
    %cst_12 = arith.constant 2.000000e+00 : f32
    %36 = vector.broadcast %cst_12 : f32 to vector<2x32xf32>
    %37 = arith.mulf %36, %35 : vector<2x32xf32>
    %cst_13 = arith.constant 1.000000e+00 : f32
    %38 = vector.broadcast %cst_13 : f32 to vector<2x32xf32>
    %39 = arith.subf %37, %38 : vector<2x32xf32>
    %40 = vector.extract_strided_slice %32 {offsets = [0, 96], sizes = [2, 32], strides = [1, 1]} : vector<2x128xf32> to vector<2x32xf32>
    %41 = arith.mulf %34, %22 : vector<2x32xf32>
    %42 = arith.mulf %33, %39 : vector<2x32xf32>
    %43 = arith.addf %41, %42 : vector<2x32xf32>
    %44 = math.tanh %43 : vector<2x32xf32>
    %45 = arith.mulf %40, %44 : vector<2x32xf32>
    %46 = vector.extract_strided_slice %8 {offsets = [4, 0], sizes = [2, 128], strides = [1, 1]} : vector<16x128xf32> to vector<2x128xf32>
    %cst_14 = arith.constant dense<0.000000e+00> : vector<2x128xf32>
    %47 = tpu.matmul %45, %2, %cst_14 {dimension_numbers = #tpu.dot_dimension_numbers<[1], [0], [0], [1], [0, 0, 1, 1], [], []>, precision = #tpu.contract_precision<fp32>} : vector<2x32xf32>, vector<32x128xf32>, vector<2x128xf32> -> vector<2x128xf32>
    %48 = arith.addf %46, %47 : vector<2x128xf32>
    %49 = arith.negf %48 : vector<2x128xf32>
    %50 = math.exp %49 : vector<2x128xf32>
    %cst_15 = arith.constant 1.000000e+00 : f32
    %51 = vector.broadcast %cst_15 : f32 to vector<2x128xf32>
    %52 = arith.addf %51, %50 : vector<2x128xf32>
    %53 = arith.divf %51, %52 : vector<2x128xf32>
    %54 = vector.extract_strided_slice %53 {offsets = [0, 0], sizes = [2, 32], strides = [1, 1]} : vector<2x128xf32> to vector<2x32xf32>
    %55 = vector.extract_strided_slice %53 {offsets = [0, 32], sizes = [2, 32], strides = [1, 1]} : vector<2x128xf32> to vector<2x32xf32>
    %56 = vector.extract_strided_slice %53 {offsets = [0, 64], sizes = [2, 32], strides = [1, 1]} : vector<2x128xf32> to vector<2x32xf32>
    %cst_16 = arith.constant 2.000000e+00 : f32
    %57 = vector.broadcast %cst_16 : f32 to vector<2x32xf32>
    %58 = arith.mulf %57, %56 : vector<2x32xf32>
    %cst_17 = arith.constant 1.000000e+00 : f32
    %59 = vector.broadcast %cst_17 : f32 to vector<2x32xf32>
    %60 = arith.subf %58, %59 : vector<2x32xf32>
    %61 = vector.extract_strided_slice %53 {offsets = [0, 96], sizes = [2, 32], strides = [1, 1]} : vector<2x128xf32> to vector<2x32xf32>
    %62 = arith.mulf %55, %43 : vector<2x32xf32>
    %63 = arith.mulf %54, %60 : vector<2x32xf32>
    %64 = arith.addf %62, %63 : vector<2x32xf32>
    %65 = math.tanh %64 : vector<2x32xf32>
    %66 = arith.mulf %61, %65 : vector<2x32xf32>
    %67 = vector.extract_strided_slice %8 {offsets = [6, 0], sizes = [2, 128], strides = [1, 1]} : vector<16x128xf32> to vector<2x128xf32>
    %cst_18 = arith.constant dense<0.000000e+00> : vector<2x128xf32>
    %68 = tpu.matmul %66, %2, %cst_18 {dimension_numbers = #tpu.dot_dimension_numbers<[1], [0], [0], [1], [0, 0, 1, 1], [], []>, precision = #tpu.contract_precision<fp32>} : vector<2x32xf32>, vector<32x128xf32>, vector<2x128xf32> -> vector<2x128xf32>
    %69 = arith.addf %67, %68 : vector<2x128xf32>
    %70 = arith.negf %69 : vector<2x128xf32>
    %71 = math.exp %70 : vector<2x128xf32>
    %cst_19 = arith.constant 1.000000e+00 : f32
    %72 = vector.broadcast %cst_19 : f32 to vector<2x128xf32>
    %73 = arith.addf %72, %71 : vector<2x128xf32>
    %74 = arith.divf %72, %73 : vector<2x128xf32>
    %75 = vector.extract_strided_slice %74 {offsets = [0, 0], sizes = [2, 32], strides = [1, 1]} : vector<2x128xf32> to vector<2x32xf32>
    %76 = vector.extract_strided_slice %74 {offsets = [0, 32], sizes = [2, 32], strides = [1, 1]} : vector<2x128xf32> to vector<2x32xf32>
    %77 = vector.extract_strided_slice %74 {offsets = [0, 64], sizes = [2, 32], strides = [1, 1]} : vector<2x128xf32> to vector<2x32xf32>
    %cst_20 = arith.constant 2.000000e+00 : f32
    %78 = vector.broadcast %cst_20 : f32 to vector<2x32xf32>
    %79 = arith.mulf %78, %77 : vector<2x32xf32>
    %cst_21 = arith.constant 1.000000e+00 : f32
    %80 = vector.broadcast %cst_21 : f32 to vector<2x32xf32>
    %81 = arith.subf %79, %80 : vector<2x32xf32>
    %82 = vector.extract_strided_slice %74 {offsets = [0, 96], sizes = [2, 32], strides = [1, 1]} : vector<2x128xf32> to vector<2x32xf32>
    %83 = arith.mulf %76, %64 : vector<2x32xf32>
    %84 = arith.mulf %75, %81 : vector<2x32xf32>
    %85 = arith.addf %83, %84 : vector<2x32xf32>
    %86 = math.tanh %85 : vector<2x32xf32>
    %87 = arith.mulf %82, %86 : vector<2x32xf32>
    %88 = vector.extract_strided_slice %8 {offsets = [8, 0], sizes = [2, 128], strides = [1, 1]} : vector<16x128xf32> to vector<2x128xf32>
    %cst_22 = arith.constant dense<0.000000e+00> : vector<2x128xf32>
    %89 = tpu.matmul %87, %2, %cst_22 {dimension_numbers = #tpu.dot_dimension_numbers<[1], [0], [0], [1], [0, 0, 1, 1], [], []>, precision = #tpu.contract_precision<fp32>} : vector<2x32xf32>, vector<32x128xf32>, vector<2x128xf32> -> vector<2x128xf32>
    %90 = arith.addf %88, %89 : vector<2x128xf32>
    %91 = arith.negf %90 : vector<2x128xf32>
    %92 = math.exp %91 : vector<2x128xf32>
    %cst_23 = arith.constant 1.000000e+00 : f32
    %93 = vector.broadcast %cst_23 : f32 to vector<2x128xf32>
    %94 = arith.addf %93, %92 : vector<2x128xf32>
    %95 = arith.divf %93, %94 : vector<2x128xf32>
    %96 = vector.extract_strided_slice %95 {offsets = [0, 0], sizes = [2, 32], strides = [1, 1]} : vector<2x128xf32> to vector<2x32xf32>
    %97 = vector.extract_strided_slice %95 {offsets = [0, 32], sizes = [2, 32], strides = [1, 1]} : vector<2x128xf32> to vector<2x32xf32>
    %98 = vector.extract_strided_slice %95 {offsets = [0, 64], sizes = [2, 32], strides = [1, 1]} : vector<2x128xf32> to vector<2x32xf32>
    %cst_24 = arith.constant 2.000000e+00 : f32
    %99 = vector.broadcast %cst_24 : f32 to vector<2x32xf32>
    %100 = arith.mulf %99, %98 : vector<2x32xf32>
    %cst_25 = arith.constant 1.000000e+00 : f32
    %101 = vector.broadcast %cst_25 : f32 to vector<2x32xf32>
    %102 = arith.subf %100, %101 : vector<2x32xf32>
    %103 = vector.extract_strided_slice %95 {offsets = [0, 96], sizes = [2, 32], strides = [1, 1]} : vector<2x128xf32> to vector<2x32xf32>
    %104 = arith.mulf %97, %85 : vector<2x32xf32>
    %105 = arith.mulf %96, %102 : vector<2x32xf32>
    %106 = arith.addf %104, %105 : vector<2x32xf32>
    %107 = math.tanh %106 : vector<2x32xf32>
    %108 = arith.mulf %103, %107 : vector<2x32xf32>
    %109 = vector.extract_strided_slice %8 {offsets = [10, 0], sizes = [2, 128], strides = [1, 1]} : vector<16x128xf32> to vector<2x128xf32>
    %cst_26 = arith.constant dense<0.000000e+00> : vector<2x128xf32>
    %110 = tpu.matmul %108, %2, %cst_26 {dimension_numbers = #tpu.dot_dimension_numbers<[1], [0], [0], [1], [0, 0, 1, 1], [], []>, precision = #tpu.contract_precision<fp32>} : vector<2x32xf32>, vector<32x128xf32>, vector<2x128xf32> -> vector<2x128xf32>
    %111 = arith.addf %109, %110 : vector<2x128xf32>
    %112 = arith.negf %111 : vector<2x128xf32>
    %113 = math.exp %112 : vector<2x128xf32>
    %cst_27 = arith.constant 1.000000e+00 : f32
    %114 = vector.broadcast %cst_27 : f32 to vector<2x128xf32>
    %115 = arith.addf %114, %113 : vector<2x128xf32>
    %116 = arith.divf %114, %115 : vector<2x128xf32>
    %117 = vector.extract_strided_slice %116 {offsets = [0, 0], sizes = [2, 32], strides = [1, 1]} : vector<2x128xf32> to vector<2x32xf32>
    %118 = vector.extract_strided_slice %116 {offsets = [0, 32], sizes = [2, 32], strides = [1, 1]} : vector<2x128xf32> to vector<2x32xf32>
    %119 = vector.extract_strided_slice %116 {offsets = [0, 64], sizes = [2, 32], strides = [1, 1]} : vector<2x128xf32> to vector<2x32xf32>
    %cst_28 = arith.constant 2.000000e+00 : f32
    %120 = vector.broadcast %cst_28 : f32 to vector<2x32xf32>
    %121 = arith.mulf %120, %119 : vector<2x32xf32>
    %cst_29 = arith.constant 1.000000e+00 : f32
    %122 = vector.broadcast %cst_29 : f32 to vector<2x32xf32>
    %123 = arith.subf %121, %122 : vector<2x32xf32>
    %124 = vector.extract_strided_slice %116 {offsets = [0, 96], sizes = [2, 32], strides = [1, 1]} : vector<2x128xf32> to vector<2x32xf32>
    %125 = arith.mulf %118, %106 : vector<2x32xf32>
    %126 = arith.mulf %117, %123 : vector<2x32xf32>
    %127 = arith.addf %125, %126 : vector<2x32xf32>
    %128 = math.tanh %127 : vector<2x32xf32>
    %129 = arith.mulf %124, %128 : vector<2x32xf32>
    %130 = vector.extract_strided_slice %8 {offsets = [12, 0], sizes = [2, 128], strides = [1, 1]} : vector<16x128xf32> to vector<2x128xf32>
    %cst_30 = arith.constant dense<0.000000e+00> : vector<2x128xf32>
    %131 = tpu.matmul %129, %2, %cst_30 {dimension_numbers = #tpu.dot_dimension_numbers<[1], [0], [0], [1], [0, 0, 1, 1], [], []>, precision = #tpu.contract_precision<fp32>} : vector<2x32xf32>, vector<32x128xf32>, vector<2x128xf32> -> vector<2x128xf32>
    %132 = arith.addf %130, %131 : vector<2x128xf32>
    %133 = arith.negf %132 : vector<2x128xf32>
    %134 = math.exp %133 : vector<2x128xf32>
    %cst_31 = arith.constant 1.000000e+00 : f32
    %135 = vector.broadcast %cst_31 : f32 to vector<2x128xf32>
    %136 = arith.addf %135, %134 : vector<2x128xf32>
    %137 = arith.divf %135, %136 : vector<2x128xf32>
    %138 = vector.extract_strided_slice %137 {offsets = [0, 0], sizes = [2, 32], strides = [1, 1]} : vector<2x128xf32> to vector<2x32xf32>
    %139 = vector.extract_strided_slice %137 {offsets = [0, 32], sizes = [2, 32], strides = [1, 1]} : vector<2x128xf32> to vector<2x32xf32>
    %140 = vector.extract_strided_slice %137 {offsets = [0, 64], sizes = [2, 32], strides = [1, 1]} : vector<2x128xf32> to vector<2x32xf32>
    %cst_32 = arith.constant 2.000000e+00 : f32
    %141 = vector.broadcast %cst_32 : f32 to vector<2x32xf32>
    %142 = arith.mulf %141, %140 : vector<2x32xf32>
    %cst_33 = arith.constant 1.000000e+00 : f32
    %143 = vector.broadcast %cst_33 : f32 to vector<2x32xf32>
    %144 = arith.subf %142, %143 : vector<2x32xf32>
    %145 = vector.extract_strided_slice %137 {offsets = [0, 96], sizes = [2, 32], strides = [1, 1]} : vector<2x128xf32> to vector<2x32xf32>
    %146 = arith.mulf %139, %127 : vector<2x32xf32>
    %147 = arith.mulf %138, %144 : vector<2x32xf32>
    %148 = arith.addf %146, %147 : vector<2x32xf32>
    %149 = math.tanh %148 : vector<2x32xf32>
    %150 = arith.mulf %145, %149 : vector<2x32xf32>
    %151 = vector.extract_strided_slice %8 {offsets = [14, 0], sizes = [2, 128], strides = [1, 1]} : vector<16x128xf32> to vector<2x128xf32>
    %cst_34 = arith.constant dense<0.000000e+00> : vector<2x128xf32>
    %152 = tpu.matmul %150, %2, %cst_34 {dimension_numbers = #tpu.dot_dimension_numbers<[1], [0], [0], [1], [0, 0, 1, 1], [], []>, precision = #tpu.contract_precision<fp32>} : vector<2x32xf32>, vector<32x128xf32>, vector<2x128xf32> -> vector<2x128xf32>
    %153 = arith.addf %151, %152 : vector<2x128xf32>
    %154 = arith.negf %153 : vector<2x128xf32>
    %155 = math.exp %154 : vector<2x128xf32>
    %cst_35 = arith.constant 1.000000e+00 : f32
    %156 = vector.broadcast %cst_35 : f32 to vector<2x128xf32>
    %157 = arith.addf %156, %155 : vector<2x128xf32>
    %158 = arith.divf %156, %157 : vector<2x128xf32>
    %159 = vector.extract_strided_slice %158 {offsets = [0, 0], sizes = [2, 32], strides = [1, 1]} : vector<2x128xf32> to vector<2x32xf32>
    %160 = vector.extract_strided_slice %158 {offsets = [0, 32], sizes = [2, 32], strides = [1, 1]} : vector<2x128xf32> to vector<2x32xf32>
    %161 = vector.extract_strided_slice %158 {offsets = [0, 64], sizes = [2, 32], strides = [1, 1]} : vector<2x128xf32> to vector<2x32xf32>
    %cst_36 = arith.constant 2.000000e+00 : f32
    %162 = vector.broadcast %cst_36 : f32 to vector<2x32xf32>
    %163 = arith.mulf %162, %161 : vector<2x32xf32>
    %cst_37 = arith.constant 1.000000e+00 : f32
    %164 = vector.broadcast %cst_37 : f32 to vector<2x32xf32>
    %165 = arith.subf %163, %164 : vector<2x32xf32>
    %166 = vector.extract_strided_slice %158 {offsets = [0, 96], sizes = [2, 32], strides = [1, 1]} : vector<2x128xf32> to vector<2x32xf32>
    %167 = arith.mulf %160, %148 : vector<2x32xf32>
    %168 = arith.mulf %159, %165 : vector<2x32xf32>
    %169 = arith.addf %167, %168 : vector<2x32xf32>
    %170 = math.tanh %169 : vector<2x32xf32>
    %171 = arith.mulf %166, %170 : vector<2x32xf32>
    %cst_38 = arith.constant dense<0.000000e+00> : vector<2x128xf32>
    %172 = tpu.matmul %171, %3, %cst_38 {dimension_numbers = #tpu.dot_dimension_numbers<[1], [0], [0], [1], [0, 0, 1, 1], [], []>, precision = #tpu.contract_precision<fp32>} : vector<2x32xf32>, vector<32x128xf32>, vector<2x128xf32> -> vector<2x128xf32>
    %173 = vector.broadcast %4 : vector<1x128xf32> to vector<2x128xf32>
    %174 = arith.addf %172, %173 : vector<2x128xf32>
    %c0_39 = arith.constant 0 : index
    %c0_40 = arith.constant 0 : index
    %175 = vector.load %arg2[%c0_39, %c0_40] : memref<2x128xf32, #tpu.memory_space<vmem>>, vector<2x128xf32>
    tpu.vector_store %arg2[%c0_39, %c0_40], %174 {strides = array<i32>} : memref<2x128xf32, #tpu.memory_space<vmem>>, vector<2x128xf32>,
    return
  }
}

</mosaic_0001>

<llo_original>
// kernel: tpu_custom_call.1
$region0: #{tpu_custom_call.1}
  #allocation0 [shape = 'u32[]', space=smem, size = 0x4, offset = 0x4, fixed_abs, tag = 'smem constant byte address 0x4 - core index']
  #allocation1 [shape = 'u32[144,128]{1,0:T(1,128)}', space=vmem, size = 0x12000, scoped, tag = 'internal scratch']
  %s0 = inlined_call_operand.vmem [shape: f32[16,4], index: 0, kind: input, shape index: {}]
  %s1 = inlined_call_operand.hbm [shape: f32[70,128], index: 1, kind: input, shape index: {}]
  %s2 = inlined_call_operand.hbm [shape: f32[2,128], index: 2, kind: output, shape index: {}]
  %s3 = sld [smem:[#allocation0]]
  $region22: #{tpu_custom_call.1} parent=0
    _
  %s5 = ssub.s32 1, %s3
  %s6 = scalar_select 0, %s5, %s3
  $region1: #{tpu_custom_call.1} parent=0
    #allocation2 [shape = 'u8[36864]{0}', space=vmem, size = 0x9000, scoped, tag = 'input window, operand 1, single buffered']
    #allocation3 [shape = 's32[1]{0}', space=sflag, size = 0x4, scoped, tag = 'scoped memory for tpu_custom_call.1']
    #allocation4 [shape = 's32[1]{0}', space=sflag, size = 0x4, scoped, tag = 'scoped memory for tpu_custom_call.1']
    #allocation5 [shape = 'u8[1024]{0}', space=vmem, size = 0x400, scoped, tag = 'output window, operand 0, single buffered']
    %7 = vsyncpa [#allocation3], 0
    %8 = vsyncpa [#allocation4], 0
    // Predicated region
    $region2: #{tpu_custom_call.1} parent=1 // pred_check
      _
    $region3: #{tpu_custom_call.1} parent=1 // pred_check_branch
      %10 = sbr.rel (0) target = $region5
    $region4: #{tpu_custom_call.1} parent=1 // pred_region
      _
    $region5: #{tpu_custom_call.1} parent=1 // pred_fallthru
      _
    // Predicated region
    $region6: #{tpu_custom_call.1} parent=1 // pred_check
      _
    $region7: #{tpu_custom_call.1} parent=1 // pred_check_branch
      %12 = sbr.rel (0) target = $region9
    $region8: #{tpu_custom_call.1} parent=1 // pred_region
      %s14 = ssub.s32 1152, 1152
      %15 = vsyncadd [#allocation3], %s14
      %s16 = sshll.u32 [#allocation2], 4
      %s17 = int_to_ptr.vmem [resolvable:$true] %s16
      %22 = dma.hbm_to_vmem [thread:$0]  %s1, 1152, %s17, [#allocation3], 128, 128, 8
    $region9: #{tpu_custom_call.1} parent=1 // pred_fallthru
      _
    // Predicated region
    $region10: #{tpu_custom_call.1} parent=1 // pred_check
      _
    $region11: #{tpu_custom_call.1} parent=1 // pred_check_branch
      %24 = sbr.rel (0) target = $region13
    $region12: #{tpu_custom_call.1} parent=1 // pred_region
      %25 = dma.done [#allocation3], 1152
    $region13: #{tpu_custom_call.1} parent=1 // pred_fallthru
      _
    %v26 = vld [vmem:[#allocation2] sm:$0xf]
    %v27 = vld [vmem:[#allocation2 + $0x4] sm:$0x1]
    %v28 = vld [vmem:[#allocation2 + $0x5] sm:$0xff]
    %v29 = vld [vmem:[#allocation2 + $0xd] sm:$0xff]
    %v30 = vld [vmem:[#allocation2 + $0x15] sm:$0xff]
    %v31 = vld [vmem:[#allocation2 + $0x1d] sm:$0xff]
    %v32 = vld [vmem:[#allocation2 + $0x25] sm:$0xff]
    %v33 = vld [vmem:[#allocation2 + $0x2d] sm:$0xff]
    %v34 = vld [vmem:[#allocation2 + $0x35] sm:$0xff]
    %v35 = vld [vmem:[#allocation2 + $0x3d] sm:$0xff]
    %v36 = vld [vmem:[#allocation2 + $0x45] sm:$0x1]
    %v37 = vld [vmem:[%s0] sm:$0xff]
    %v38 = vld [vmem:[%s0 + $0x8] sm:$0xff]
    %v39 = vlaneseq
    %v40 = vshrl.u32 %v39, 7
    %v41 = vsub.s32 0, %v40
    %v42 = vrot.slane %v27, %v41
    %vm43 = vcmask 31744
    %v45 = vsel %vm43, %v37, 0
    %v48 = vsel %vm43, %v38, 0
    %vm50 = vcmask 1043456
    %v52 = vsel %vm50, %v26, 0
    %54 = vmatprep.subr.mxu0 0.0
    %v55 = vand.u32 %v52, 4294901760
    %56 = vmatpush1.msra.mxu0 %v55
    %57 = vmatprep.subr.mxu0 0.0
    %58 = vmatpush1.msra.mxu0 0.0
    %59 = vmatprep.subr.mxu0 0.0
    %60 = vmatpush1.msra.mxu0 0.0
    %61 = vmatprep.subr.mxu0 0.0
    %62 = vmatpush1.msra.mxu0 0.0
    %63 = vmatprep.subr.mxu0 0.0
    %64 = vmatpush1.msra.mxu0 0.0
    %65 = vmatprep.subr.mxu0 0.0
    %66 = vmatpush1.msra.mxu0 0.0
    %67 = vmatprep.subr.mxu0 0.0
    %68 = vmatpush1.msra.mxu0 0.0
    %69 = vmatprep.subr.mxu0 0.0
    %70 = vmatpush1.msra.mxu0 0.0
    %71 = vmatprep.subr.mxu0 0.0
    %72 = vmatpush1.msra.mxu0 0.0
    %73 = vmatprep.subr.mxu0 0.0
    %74 = vmatpush1.msra.mxu0 0.0
    %75 = vmatprep.subr.mxu0 0.0
    %76 = vmatpush1.msra.mxu0 0.0
    %77 = vmatprep.subr.mxu0 0.0
    %78 = vmatpush1.msra.mxu0 0.0
    %79 = vmatprep.subr.mxu0 0.0
    %80 = vmatpush1.msra.mxu0 0.0
    %81 = vmatprep.subr.mxu0 0.0
    %82 = vmatpush1.msra.mxu0 0.0
    %83 = vmatprep.subr.mxu0 0.0
    %84 = vmatpush1.msra.mxu0 0.0
    %85 = vmatprep.subr.mxu0 0.0
    %86 = vmatpush1.msra.mxu0 0.0
    %87 = vmatprep.subr.mxu0 0.0
    %88 = vmatpush1.msra.mxu0 0.0
    %89 = vmatprep.subr.mxu0 0.0
    %90 = vmatpush1.msra.mxu0 0.0
    %91 = vmatprep.subr.mxu0 0.0
    %92 = vmatpush1.msra.mxu0 0.0
    %93 = vmatprep.subr.mxu0 0.0
    %94 = vmatpush1.msra.mxu0 0.0
    %95 = vmatprep.subr.mxu0 0.0
    %96 = vmatpush1.msra.mxu0 0.0
    %97 = vmatprep.subr.mxu0 0.0
    %98 = vmatpush1.msra.mxu0 0.0
    %99 = vmatprep.subr.mxu0 0.0
    %100 = vmatpush1.msra.mxu0 0.0
    %101 = vmatprep.subr.mxu0 0.0
    %102 = vmatpush1.msra.mxu0 0.0
    %103 = vmatprep.subr.mxu0 0.0
    %104 = vmatpush1.msra.mxu0 0.0
    %105 = vmatprep.subr.mxu0 0.0
    %106 = vmatpush1.msra.mxu0 0.0
    %107 = vmatprep.subr.mxu0 0.0
    %108 = vmatpush1.msra.mxu0 0.0
    %109 = vmatprep.subr.mxu0 0.0
    %110 = vmatpush1.msra.mxu0 0.0
    %111 = vmatprep.subr.mxu0 0.0
    %112 = vmatpush1.msra.mxu0 0.0
    %113 = vmatprep.subr.mxu0 0.0
    %114 = vmatpush1.msra.mxu0 0.0
    %115 = vmatprep.subr.mxu0 0.0
    %116 = vmatpush1.msra.mxu0 0.0
    %117 = vmatprep.subr.mxu0 0.0
    %118 = vmatpush1.msra.mxu0 0.0
    %119 = vmatprep.mubr.f32.mxu0 0.0
    %v120 = vand.u32 %v45, 4294901760
    %v121 = vsub.f32 %v45, %v120
    %v122 = vand.u32 %v121, 4294901760
    %v123 = vsub.f32 %v121, %v122
    %v124 = vand.u32 %v123, 4294901760
    %125 = vmatmul.mubr.f32.gmra.mrb[0].mxu0 %v124
    %v126 = vpop.f32.mrb[0].mxu0
    %v127 = vadd.f32 %v42, %v126
    %v128 = vpop.f32.mrb[0].mxu0
    %129 = vmatprep.mubr.f32.mxu0 0.0
    %v130 = vand.u32 %v48, 4294901760
    %v131 = vsub.f32 %v48, %v130
    %v132 = vand.u32 %v131, 4294901760
    %v133 = vsub.f32 %v131, %v132
    %v134 = vand.u32 %v133, 4294901760
    %135 = vmatmul.mubr.f32.gmra.mrb[0].mxu0 %v134
    %v136 = vpop.f32.mrb[0].mxu0
    %v137 = vadd.f32 %v42, %v136
    %v138 = vpop.f32.mrb[0].mxu0
    %139 = vdwg.mxu0
    %140 = vmatprep.subr.mxu0 0.0
    %v141 = vand.u32 %v52, 4294901760
    %v142 = vsub.f32 %v52, %v141
    %v143 = vand.u32 %v142, 4294901760
    %v144 = vsub.f32 %v142, %v143
    %v145 = vand.u32 %v144, 4294901760
    %146 = vmatpush1.msra.mxu0 %v145
    %147 = vmatprep.subr.mxu0 0.0
    %148 = vmatpush1.msra.mxu0 0.0
    %149 = vmatprep.subr.mxu0 0.0
    %150 = vmatpush1.msra.mxu0 0.0
    %151 = vmatprep.subr.mxu0 0.0
    %152 = vmatpush1.msra.mxu0 0.0
    %153 = vmatprep.subr.mxu0 0.0
    %154 = vmatpush1.msra.mxu0 0.0
    %155 = vmatprep.subr.mxu0 0.0
    %156 = vmatpush1.msra.mxu0 0.0
    %157 = vmatprep.subr.mxu0 0.0
    %158 = vmatpush1.msra.mxu0 0.0
    %159 = vmatprep.subr.mxu0 0.0
    %160 = vmatpush1.msra.mxu0 0.0
    %161 = vmatprep.subr.mxu0 0.0
    %162 = vmatpush1.msra.mxu0 0.0
    %163 = vmatprep.subr.mxu0 0.0
    %164 = vmatpush1.msra.mxu0 0.0
    %165 = vmatprep.subr.mxu0 0.0
    %166 = vmatpush1.msra.mxu0 0.0
    %167 = vmatprep.subr.mxu0 0.0
    %168 = vmatpush1.msra.mxu0 0.0
    %169 = vmatprep.subr.mxu0 0.0
    %170 = vmatpush1.msra.mxu0 0.0
    %171 = vmatprep.subr.mxu0 0.0
    %172 = vmatpush1.msra.mxu0 0.0
    %173 = vmatprep.subr.mxu0 0.0
    %174 = vmatpush1.msra.mxu0 0.0
    %175 = vmatprep.subr.mxu0 0.0
    %176 = vmatpush1.msra.mxu0 0.0
    %177 = vmatprep.subr.mxu0 0.0
    %178 = vmatpush1.msra.mxu0 0.0
    %179 = vmatprep.subr.mxu0 0.0
    %180 = vmatpush1.msra.mxu0 0.0
    %181 = vmatprep.subr.mxu0 0.0
    %182 = vmatpush1.msra.mxu0 0.0
    %183 = vmatprep.subr.mxu0 0.0
    %184 = vmatpush1.msra.mxu0 0.0
    %185 = vmatprep.subr.mxu0 0.0
    %186 = vmatpush1.msra.mxu0 0.0
    %187 = vmatprep.subr.mxu0 0.0
    %188 = vmatpush1.msra.mxu0 0.0
    %189 = vmatprep.subr.mxu0 0.0
    %190 = vmatpush1.msra.mxu0 0.0
    %191 = vmatprep.subr.mxu0 0.0
    %192 = vmatpush1.msra.mxu0 0.0
    %193 = vmatprep.subr.mxu0 0.0
    %194 = vmatpush1.msra.mxu0 0.0
    %195 = vmatprep.subr.mxu0 0.0
    %196 = vmatpush1.msra.mxu0 0.0
    %197 = vmatprep.subr.mxu0 0.0
    %198 = vmatpush1.msra.mxu0 0.0
    %199 = vmatprep.subr.mxu0 0.0
    %200 = vmatpush1.msra.mxu0 0.0
    %201 = vmatprep.subr.mxu0 0.0
    %202 = vmatpush1.msra.mxu0 0.0
    %203 = vmatprep.subr.mxu0 0.0
    %204 = vmatpush1.msra.mxu0 0.0
    %205 = vmatprep.subr.mxu0 0.0
    %206 = vmatpush1.msra.mxu0 0.0
    %207 = vmatprep.subr.mxu0 0.0
    %208 = vmatpush1.msra.mxu0 0.0
    %209 = vmatprep.mubr.f32.mxu0 0.0
    %v210 = vand.u32 %v45, 4294901760
    %211 = vmatmul.mubr.f32.gmra.mrb[0].mxu0 %v210
    %v212 = vpop.f32.mrb[0].mxu0
    %v213 = vadd.f32 %v127, %v212
    %v214 = vpop.f32.mrb[0].mxu0
    %215 = vmatprep.mubr.f32.mxu0 0.0
    %v216 = vand.u32 %v48, 4294901760
    %217 = vmatmul.mubr.f32.gmra.mrb[0].mxu0 %v216
    %v218 = vpop.f32.mrb[0].mxu0
    %v219 = vadd.f32 %v137, %v218
    %v220 = vpop.f32.mrb[0].mxu0
    %221 = vdwg.mxu0
    %222 = vmatprep.subr.mxu0 0.0
    %v223 = vand.u32 %v52, 4294901760
    %v224 = vsub.f32 %v52, %v223
    %225 = vmatpush1.msra.mxu0 %v224
    %226 = vmatprep.subr.mxu0 0.0
    %227 = vmatpush1.msra.mxu0 0.0
    %228 = vmatprep.subr.mxu0 0.0
    %229 = vmatpush1.msra.mxu0 0.0
    %230 = vmatprep.subr.mxu0 0.0
    %231 = vmatpush1.msra.mxu0 0.0
    %232 = vmatprep.subr.mxu0 0.0
    %233 = vmatpush1.msra.mxu0 0.0
    %234 = vmatprep.subr.mxu0 0.0
    %235 = vmatpush1.msra.mxu0 0.0
    %236 = vmatprep.subr.mxu0 0.0
    %237 = vmatpush1.msra.mxu0 0.0
    %238 = vmatprep.subr.mxu0 0.0
    %239 = vmatpush1.msra.mxu0 0.0
    %240 = vmatprep.subr.mxu0 0.0
    %241 = vmatpush1.msra.mxu0 0.0
    %242 = vmatprep.subr.mxu0 0.0
    %243 = vmatpush1.msra.mxu0 0.0
    %244 = vmatprep.subr.mxu0 0.0
    %245 = vmatpush1.msra.mxu0 0.0
    %246 = vmatprep.subr.mxu0 0.0
    %247 = vmatpush1.msra.mxu0 0.0
    %248 = vmatprep.subr.mxu0 0.0
    %249 = vmatpush1.msra.mxu0 0.0
    %250 = vmatprep.subr.mxu0 0.0
    %251 = vmatpush1.msra.mxu0 0.0
    %252 = vmatprep.subr.mxu0 0.0
    %253 = vmatpush1.msra.mxu0 0.0
    %254 = vmatprep.subr.mxu0 0.0
    %255 = vmatpush1.msra.mxu0 0.0
    %256 = vmatprep.subr.mxu0 0.0
    %257 = vmatpush1.msra.mxu0 0.0
    %258 = vmatprep.subr.mxu0 0.0
    %259 = vmatpush1.msra.mxu0 0.0
    %260 = vmatprep.subr.mxu0 0.0
    %261 = vmatpush1.msra.mxu0 0.0
    %262 = vmatprep.subr.mxu0 0.0
    %263 = vmatpush1.msra.mxu0 0.0
    %264 = vmatprep.subr.mxu0 0.0
    %265 = vmatpush1.msra.mxu0 0.0
    %266 = vmatprep.subr.mxu0 0.0
    %267 = vmatpush1.msra.mxu0 0.0
    %268 = vmatprep.subr.mxu0 0.0
    %269 = vmatpush1.msra.mxu0 0.0
    %270 = vmatprep.subr.mxu0 0.0
    %271 = vmatpush1.msra.mxu0 0.0
    %272 = vmatprep.subr.mxu0 0.0
    %273 = vmatpush1.msra.mxu0 0.0
    %274 = vmatprep.subr.mxu0 0.0
    %275 = vmatpush1.msra.mxu0 0.0
    %276 = vmatprep.subr.mxu0 0.0
    %277 = vmatpush1.msra.mxu0 0.0
    %278 = vmatprep.subr.mxu0 0.0
    %279 = vmatpush1.msra.mxu0 0.0
    %280 = vmatprep.subr.mxu0 0.0
    %281 = vmatpush1.msra.mxu0 0.0
    %282 = vmatprep.subr.mxu0 0.0
    %283 = vmatpush1.msra.mxu0 0.0
    %284 = vmatprep.subr.mxu0 0.0
    %285 = vmatpush1.msra.mxu0 0.0
    %286 = vmatprep.subr.mxu0 0.0
    %287 = vmatpush1.msra.mxu0 0.0
    %288 = vmatprep.mubr.f32.mxu0 0.0
    %v289 = vand.u32 %v45, 4294901760
    %v290 = vsub.f32 %v45, %v289
    %291 = vmatmul.mubr.f32.gmra.mrb[0].mxu0 %v290
    %v292 = vpop.f32.mrb[0].mxu0
    %v293 = vadd.f32 %v213, %v292
    %v294 = vpop.f32.mrb[0].mxu0
    %295 = vmatprep.mubr.f32.mxu0 0.0
    %v296 = vand.u32 %v48, 4294901760
    %v297 = vsub.f32 %v48, %v296
    %298 = vmatmul.mubr.f32.gmra.mrb[0].mxu0 %v297
    %v299 = vpop.f32.mrb[0].mxu0
    %v300 = vadd.f32 %v219, %v299
    %v301 = vpop.f32.mrb[0].mxu0
    %302 = vdwg.mxu0
    %303 = vmatprep.subr.mxu0 0.0
    %v304 = vand.u32 %v52, 4294901760
    %305 = vmatpush1.msra.mxu0 %v304
    %306 = vmatprep.subr.mxu0 0.0
    %307 = vmatpush1.msra.mxu0 0.0
    %308 = vmatprep.subr.mxu0 0.0
    %309 = vmatpush1.msra.mxu0 0.0
    %310 = vmatprep.subr.mxu0 0.0
    %311 = vmatpush1.msra.mxu0 0.0
    %312 = vmatprep.subr.mxu0 0.0
    %313 = vmatpush1.msra.mxu0 0.0
    %314 = vmatprep.subr.mxu0 0.0
    %315 = vmatpush1.msra.mxu0 0.0
    %316 = vmatprep.subr.mxu0 0.0
    %317 = vmatpush1.msra.mxu0 0.0
    %318 = vmatprep.subr.mxu0 0.0
    %319 = vmatpush1.msra.mxu0 0.0
    %320 = vmatprep.subr.mxu0 0.0
    %321 = vmatpush1.msra.mxu0 0.0
    %322 = vmatprep.subr.mxu0 0.0
    %323 = vmatpush1.msra.mxu0 0.0
    %324 = vmatprep.subr.mxu0 0.0
    %325 = vmatpush1.msra.mxu0 0.0
    %326 = vmatprep.subr.mxu0 0.0
    %327 = vmatpush1.msra.mxu0 0.0
    %328 = vmatprep.subr.mxu0 0.0
    %329 = vmatpush1.msra.mxu0 0.0
    %330 = vmatprep.subr.mxu0 0.0
    %331 = vmatpush1.msra.mxu0 0.0
    %332 = vmatprep.subr.mxu0 0.0
    %333 = vmatpush1.msra.mxu0 0.0
    %334 = vmatprep.subr.mxu0 0.0
    %335 = vmatpush1.msra.mxu0 0.0
    %336 = vmatprep.subr.mxu0 0.0
    %337 = vmatpush1.msra.mxu0 0.0
    %338 = vmatprep.subr.mxu0 0.0
    %339 = vmatpush1.msra.mxu0 0.0
    %340 = vmatprep.subr.mxu0 0.0
    %341 = vmatpush1.msra.mxu0 0.0
    %342 = vmatprep.subr.mxu0 0.0
    %343 = vmatpush1.msra.mxu0 0.0
    %344 = vmatprep.subr.mxu0 0.0
    %345 = vmatpush1.msra.mxu0 0.0
    %346 = vmatprep.subr.mxu0 0.0
    %347 = vmatpush1.msra.mxu0 0.0
    %348 = vmatprep.subr.mxu0 0.0
    %349 = vmatpush1.msra.mxu0 0.0
    %350 = vmatprep.subr.mxu0 0.0
    %351 = vmatpush1.msra.mxu0 0.0
    %352 = vmatprep.subr.mxu0 0.0
    %353 = vmatpush1.msra.mxu0 0.0
    %354 = vmatprep.subr.mxu0 0.0
    %355 = vmatpush1.msra.mxu0 0.0
    %356 = vmatprep.subr.mxu0 0.0
    %357 = vmatpush1.msra.mxu0 0.0
    %358 = vmatprep.subr.mxu0 0.0
    %359 = vmatpush1.msra.mxu0 0.0
    %360 = vmatprep.subr.mxu0 0.0
    %361 = vmatpush1.msra.mxu0 0.0
    %362 = vmatprep.subr.mxu0 0.0
    %363 = vmatpush1.msra.mxu0 0.0
    %364 = vmatprep.subr.mxu0 0.0
    %365 = vmatpush1.msra.mxu0 0.0
    %366 = vmatprep.subr.mxu0 0.0
    %367 = vmatpush1.msra.mxu0 0.0
    %368 = vmatprep.mubr.f32.mxu0 0.0
    %v369 = vand.u32 %v45, 4294901760
    %v370 = vsub.f32 %v45, %v369
    %v371 = vand.u32 %v370, 4294901760
    %372 = vmatmul.mubr.f32.gmra.mrb[0].mxu0 %v371
    %v373 = vpop.f32.mrb[0].mxu0
    %v374 = vadd.f32 %v293, %v373
    %v375 = vpop.f32.mrb[0].mxu0
    %376 = vmatprep.mubr.f32.mxu0 0.0
    %v377 = vand.u32 %v48, 4294901760
    %v378 = vsub.f32 %v48, %v377
    %v379 = vand.u32 %v378, 4294901760
    %380 = vmatmul.mubr.f32.gmra.mrb[0].mxu0 %v379
    %v381 = vpop.f32.mrb[0].mxu0
    %v382 = vadd.f32 %v300, %v381
    %v383 = vpop.f32.mrb[0].mxu0
    %384 = vdwg.mxu0
    %385 = vmatprep.subr.mxu0 0.0
    %v386 = vand.u32 %v52, 4294901760
    %v387 = vsub.f32 %v52, %v386
    %v388 = vand.u32 %v387, 4294901760
    %389 = vmatpush1.msra.mxu0 %v388
    %390 = vmatprep.subr.mxu0 0.0
    %391 = vmatpush1.msra.mxu0 0.0
    %392 = vmatprep.subr.mxu0 0.0
    %393 = vmatpush1.msra.mxu0 0.0
    %394 = vmatprep.subr.mxu0 0.0
    %395 = vmatpush1.msra.mxu0 0.0
    %396 = vmatprep.subr.mxu0 0.0
    %397 = vmatpush1.msra.mxu0 0.0
    %398 = vmatprep.subr.mxu0 0.0
    %399 = vmatpush1.msra.mxu0 0.0
    %400 = vmatprep.subr.mxu0 0.0
    %401 = vmatpush1.msra.mxu0 0.0
    %402 = vmatprep.subr.mxu0 0.0
    %403 = vmatpush1.msra.mxu0 0.0
    %404 = vmatprep.subr.mxu0 0.0
    %405 = vmatpush1.msra.mxu0 0.0
    %406 = vmatprep.subr.mxu0 0.0
    %407 = vmatpush1.msra.mxu0 0.0
    %408 = vmatprep.subr.mxu0 0.0
    %409 = vmatpush1.msra.mxu0 0.0
    %410 = vmatprep.subr.mxu0 0.0
    %411 = vmatpush1.msra.mxu0 0.0
    %412 = vmatprep.subr.mxu0 0.0
    %413 = vmatpush1.msra.mxu0 0.0
    %414 = vmatprep.subr.mxu0 0.0
    %415 = vmatpush1.msra.mxu0 0.0
    %416 = vmatprep.subr.mxu0 0.0
    %417 = vmatpush1.msra.mxu0 0.0
    %418 = vmatprep.subr.mxu0 0.0
    %419 = vmatpush1.msra.mxu0 0.0
    %420 = vmatprep.subr.mxu0 0.0
    %421 = vmatpush1.msra.mxu0 0.0
    %422 = vmatprep.subr.mxu0 0.0
    %423 = vmatpush1.msra.mxu0 0.0
    %424 = vmatprep.subr.mxu0 0.0
    %425 = vmatpush1.msra.mxu0 0.0
    %426 = vmatprep.subr.mxu0 0.0
    %427 = vmatpush1.msra.mxu0 0.0
    %428 = vmatprep.subr.mxu0 0.0
    %429 = vmatpush1.msra.mxu0 0.0
    %430 = vmatprep.subr.mxu0 0.0
    %431 = vmatpush1.msra.mxu0 0.0
    %432 = vmatprep.subr.mxu0 0.0
    %433 = vmatpush1.msra.mxu0 0.0
    %434 = vmatprep.subr.mxu0 0.0
    %435 = vmatpush1.msra.mxu0 0.0
    %436 = vmatprep.subr.mxu0 0.0
    %437 = vmatpush1.msra.mxu0 0.0
    %438 = vmatprep.subr.mxu0 0.0
    %439 = vmatpush1.msra.mxu0 0.0
    %440 = vmatprep.subr.mxu0 0.0
    %441 = vmatpush1.msra.mxu0 0.0
    %442 = vmatprep.subr.mxu0 0.0
    %443 = vmatpush1.msra.mxu0 0.0
    %444 = vmatprep.subr.mxu0 0.0
    %445 = vmatpush1.msra.mxu0 0.0
    %446 = vmatprep.subr.mxu0 0.0
    %447 = vmatpush1.msra.mxu0 0.0
    %448 = vmatprep.subr.mxu0 0.0
    %449 = vmatpush1.msra.mxu0 0.0
    %450 = vmatprep.subr.mxu0 0.0
    %451 = vmatpush1.msra.mxu0 0.0
    %452 = vmatprep.mubr.f32.mxu0 0.0
    %v453 = vand.u32 %v45, 4294901760
    %454 = vmatmul.mubr.f32.gmra.mrb[0].mxu0 %v453
    %v455 = vpop.f32.mrb[0].mxu0
    %v456 = vadd.f32 %v374, %v455
    %v457 = vpop.f32.mrb[0].mxu0
    %458 = vmatprep.mubr.f32.mxu0 0.0
    %v459 = vand.u32 %v48, 4294901760
    %460 = vmatmul.mubr.f32.gmra.mrb[0].mxu0 %v459
    %v461 = vpop.f32.mrb[0].mxu0
    %v462 = vadd.f32 %v382, %v461
    %v463 = vpop.f32.mrb[0].mxu0
    %464 = vdwg.mxu0
    %465 = vmatprep.subr.mxu0 0.0
    %v466 = vand.u32 %v52, 4294901760
    %467 = vmatpush1.msra.mxu0 %v466
    %468 = vmatprep.subr.mxu0 0.0
    %469 = vmatpush1.msra.mxu0 0.0
    %470 = vmatprep.subr.mxu0 0.0
    %471 = vmatpush1.msra.mxu0 0.0
    %472 = vmatprep.subr.mxu0 0.0
    %473 = vmatpush1.msra.mxu0 0.0
    %474 = vmatprep.subr.mxu0 0.0
    %475 = vmatpush1.msra.mxu0 0.0
    %476 = vmatprep.subr.mxu0 0.0
    %477 = vmatpush1.msra.mxu0 0.0
    %478 = vmatprep.subr.mxu0 0.0
    %479 = vmatpush1.msra.mxu0 0.0
    %480 = vmatprep.subr.mxu0 0.0
    %481 = vmatpush1.msra.mxu0 0.0
    %482 = vmatprep.subr.mxu0 0.0
    %483 = vmatpush1.msra.mxu0 0.0
    %484 = vmatprep.subr.mxu0 0.0
    %485 = vmatpush1.msra.mxu0 0.0
    %486 = vmatprep.subr.mxu0 0.0
    %487 = vmatpush1.msra.mxu0 0.0
    %488 = vmatprep.subr.mxu0 0.0
    %489 = vmatpush1.msra.mxu0 0.0
    %490 = vmatprep.subr.mxu0 0.0
    %491 = vmatpush1.msra.mxu0 0.0
    %492 = vmatprep.subr.mxu0 0.0
    %493 = vmatpush1.msra.mxu0 0.0
    %494 = vmatprep.subr.mxu0 0.0
    %495 = vmatpush1.msra.mxu0 0.0
    %496 = vmatprep.subr.mxu0 0.0
    %497 = vmatpush1.msra.mxu0 0.0
    %498 = vmatprep.subr.mxu0 0.0
    %499 = vmatpush1.msra.mxu0 0.0
    %500 = vmatprep.subr.mxu0 0.0
    %501 = vmatpush1.msra.mxu0 0.0
    %502 = vmatprep.subr.mxu0 0.0
    %503 = vmatpush1.msra.mxu0 0.0
    %504 = vmatprep.subr.mxu0 0.0
    %505 = vmatpush1.msra.mxu0 0.0
    %506 = vmatprep.subr.mxu0 0.0
    %507 = vmatpush1.msra.mxu0 0.0
    %508 = vmatprep.subr.mxu0 0.0
    %509 = vmatpush1.msra.mxu0 0.0
    %510 = vmatprep.subr.mxu0 0.0
    %511 = vmatpush1.msra.mxu0 0.0
    %512 = vmatprep.subr.mxu0 0.0
    %513 = vmatpush1.msra.mxu0 0.0
    %514 = vmatprep.subr.mxu0 0.0
    %515 = vmatpush1.msra.mxu0 0.0
    %516 = vmatprep.subr.mxu0 0.0
    %517 = vmatpush1.msra.mxu0 0.0
    %518 = vmatprep.subr.mxu0 0.0
    %519 = vmatpush1.msra.mxu0 0.0
    %520 = vmatprep.subr.mxu0 0.0
    %521 = vmatpush1.msra.mxu0 0.0
    %522 = vmatprep.subr.mxu0 0.0
    %523 = vmatpush1.msra.mxu0 0.0
    %524 = vmatprep.subr.mxu0 0.0
    %525 = vmatpush1.msra.mxu0 0.0
    %526 = vmatprep.subr.mxu0 0.0
    %527 = vmatpush1.msra.mxu0 0.0
    %528 = vmatprep.subr.mxu0 0.0
    %529 = vmatpush1.msra.mxu0 0.0
    %530 = vmatprep.mubr.f32.mxu0 0.0
    %v531 = vand.u32 %v45, 4294901760
    %532 = vmatmul.mubr.f32.gmra.mrb[0].mxu0 %v531
    %v533 = vpop.f32.mrb[0].mxu0
    %v534 = vadd.f32 %v456, %v533
    %v535 = vpop.f32.mrb[0].mxu0
    %536 = vmatprep.mubr.f32.mxu0 0.0
    %v537 = vand.u32 %v48, 4294901760
    %538 = vmatmul.mubr.f32.gmra.mrb[0].mxu0 %v537
    %v539 = vpop.f32.mrb[0].mxu0
    %v540 = vadd.f32 %v462, %v539
    %v541 = vpop.f32.mrb[0].mxu0
    %542 = vdwg.mxu0
    %v543 = vxor.u32 %v534, 2147483648
    %v544 = vmul.f32 %v543, 1.442695
    %v545 = vpow.pop %v544
    %v546 = vadd.f32 %v545, 1.0
    %v547 = vrcp.pop %v546
    %v548 = vmul.f32 1.0, %v547
    %v549 = vmul.f32 %v548, 2.0
    %v550 = vsub.f32 %v549, 1.0
    %552 = vrot.lane.b32.xlu0 %v550, 64
    %v553 = vpop.permute.xlu0 %552
    %v555 = vmul.f32 %v548, %v553
    %v556 = vtanh.pop %v555
    %558 = vrot.lane.b32.xlu0 %v556, 96
    %v559 = vpop.permute.xlu0 %558
    %v561 = vmul.f32 %v548, %v559
    %563 = vrot.lane.b32.xlu0 %v561, 32
    %v564 = vpop.permute.xlu0 %563
    %vm565 = vcmask 261120
    %v566 = vsel %vm565, %v564, 0
    %568 = vmatprep.subr.mxu0 0.0
    %v569 = vand.u32 %v28, 4294901760
    %570 = vmatpush1.msra.mxu0 %v569
    %571 = vmatprep.subr.mxu0 0.0
    %v572 = vand.u32 %v29, 4294901760
    %573 = vmatpush1.msra.mxu0 %v572
    %574 = vmatprep.subr.mxu0 0.0
    %v575 = vand.u32 %v30, 4294901760
    %576 = vmatpush1.msra.mxu0 %v575
    %577 = vmatprep.subr.mxu0 0.0
    %v578 = vand.u32 %v31, 4294901760
    %579 = vmatpush1.msra.mxu0 %v578
    %580 = vmatprep.subr.mxu0 0.0
    %581 = vmatpush1.msra.mxu0 0.0
    %582 = vmatprep.subr.mxu0 0.0
    %583 = vmatpush1.msra.mxu0 0.0
    %584 = vmatprep.subr.mxu0 0.0
    %585 = vmatpush1.msra.mxu0 0.0
    %586 = vmatprep.subr.mxu0 0.0
    %587 = vmatpush1.msra.mxu0 0.0
    %588 = vmatprep.subr.mxu0 0.0
    %589 = vmatpush1.msra.mxu0 0.0
    %590 = vmatprep.subr.mxu0 0.0
    %591 = vmatpush1.msra.mxu0 0.0
    %592 = vmatprep.subr.mxu0 0.0
    %593 = vmatpush1.msra.mxu0 0.0
    %594 = vmatprep.subr.mxu0 0.0
    %595 = vmatpush1.msra.mxu0 0.0
    %596 = vmatprep.subr.mxu0 0.0
    %597 = vmatpush1.msra.mxu0 0.0
    %598 = vmatprep.subr.mxu0 0.0
    %599 = vmatpush1.msra.mxu0 0.0
    %600 = vmatprep.subr.mxu0 0.0
    %601 = vmatpush1.msra.mxu0 0.0
    %602 = vmatprep.subr.mxu0 0.0
    %603 = vmatpush1.msra.mxu0 0.0
    %604 = vmatprep.subr.mxu0 0.0
    %605 = vmatpush1.msra.mxu0 0.0
    %606 = vmatprep.subr.mxu0 0.0
    %607 = vmatpush1.msra.mxu0 0.0
    %608 = vmatprep.subr.mxu0 0.0
    %609 = vmatpush1.msra.mxu0 0.0
    %610 = vmatprep.subr.mxu0 0.0
    %611 = vmatpush1.msra.mxu0 0.0
    %612 = vmatprep.subr.mxu0 0.0
    %613 = vmatpush1.msra.mxu0 0.0
    %614 = vmatprep.subr.mxu0 0.0
    %615 = vmatpush1.msra.mxu0 0.0
    %616 = vmatprep.subr.mxu0 0.0
    %617 = vmatpush1.msra.mxu0 0.0
    %618 = vmatprep.subr.mxu0 0.0
    %619 = vmatpush1.msra.mxu0 0.0
    %620 = vmatprep.subr.mxu0 0.0
    %621 = vmatpush1.msra.mxu0 0.0
    %622 = vmatprep.subr.mxu0 0.0
    %623 = vmatpush1.msra.mxu0 0.0
    %624 = vmatprep.subr.mxu0 0.0
    %625 = vmatpush1.msra.mxu0 0.0
    %626 = vmatprep.subr.mxu0 0.0
    %627 = vmatpush1.msra.mxu0 0.0
    %628 = vmatprep.subr.mxu0 0.0
    %629 = vmatpush1.msra.mxu0 0.0
    %630 = vmatprep.subr.mxu0 0.0
    %631 = vmatpush1.msra.mxu0 0.0
    %632 = vmatprep.subr.mxu0 0.0
    %633 = vmatpush1.msra.mxu0 0.0
    %634 = vmatprep.subr.mxu0 0.0
    %635 = vmatpush1.msra.mxu0 0.0
    %636 = vmatprep.mubr.f32.mxu0 0.0
    %v637 = vand.u32 %v566, 4294901760
    %v638 = vsub.f32 %v566, %v637
    %v639 = vand.u32 %v638, 4294901760
    %v640 = vsub.f32 %v638, %v639
    %v641 = vand.u32 %v640, 4294901760
    %642 = vmatmul.mubr.f32.gmra.mrb[0].mxu0 %v641
    %v643 = vpop.f32.mrb[0].mxu0
    %v644 = vadd.f32 0.0, %v643
    %v645 = vpop.f32.mrb[0].mxu0
    %646 = vdwg.mxu0
    %647 = vmatprep.subr.mxu0 0.0
    %v648 = vand.u32 %v28, 4294901760
    %v649 = vsub.f32 %v28, %v648
    %v650 = vand.u32 %v649, 4294901760
    %v651 = vsub.f32 %v649, %v650
    %v652 = vand.u32 %v651, 4294901760
    %653 = vmatpush1.msra.mxu0 %v652
    %654 = vmatprep.subr.mxu0 0.0
    %v655 = vand.u32 %v29, 4294901760
    %v656 = vsub.f32 %v29, %v655
    %v657 = vand.u32 %v656, 4294901760
    %v658 = vsub.f32 %v656, %v657
    %v659 = vand.u32 %v658, 4294901760
    %660 = vmatpush1.msra.mxu0 %v659
    %661 = vmatprep.subr.mxu0 0.0
    %v662 = vand.u32 %v30, 4294901760
    %v663 = vsub.f32 %v30, %v662
    %v664 = vand.u32 %v663, 4294901760
    %v665 = vsub.f32 %v663, %v664
    %v666 = vand.u32 %v665, 4294901760
    %667 = vmatpush1.msra.mxu0 %v666
    %668 = vmatprep.subr.mxu0 0.0
    %v669 = vand.u32 %v31, 4294901760
    %v670 = vsub.f32 %v31, %v669
    %v671 = vand.u32 %v670, 4294901760
    %v672 = vsub.f32 %v670, %v671
    %v673 = vand.u32 %v672, 4294901760
    %674 = vmatpush1.msra.mxu0 %v673
    %675 = vmatprep.subr.mxu0 0.0
    %676 = vmatpush1.msra.mxu0 0.0
    %677 = vmatprep.subr.mxu0 0.0
    %678 = vmatpush1.msra.mxu0 0.0
    %679 = vmatprep.subr.mxu0 0.0
    %680 = vmatpush1.msra.mxu0 0.0
    %681 = vmatprep.subr.mxu0 0.0
    %682 = vmatpush1.msra.mxu0 0.0
    %683 = vmatprep.subr.mxu0 0.0
    %684 = vmatpush1.msra.mxu0 0.0
    %685 = vmatprep.subr.mxu0 0.0
    %686 = vmatpush1.msra.mxu0 0.0
    %687 = vmatprep.subr.mxu0 0.0
    %688 = vmatpush1.msra.mxu0 0.0
    %689 = vmatprep.subr.mxu0 0.0
    %690 = vmatpush1.msra.mxu0 0.0
    %691 = vmatprep.subr.mxu0 0.0
    %692 = vmatpush1.msra.mxu0 0.0
    %693 = vmatprep.subr.mxu0 0.0
    %694 = vmatpush1.msra.mxu0 0.0
    %695 = vmatprep.subr.mxu0 0.0
    %696 = vmatpush1.msra.mxu0 0.0
    %697 = vmatprep.subr.mxu0 0.0
    %698 = vmatpush1.msra.mxu0 0.0
    %699 = vmatprep.subr.mxu0 0.0
    %700 = vmatpush1.msra.mxu0 0.0
    %701 = vmatprep.subr.mxu0 0.0
    %702 = vmatpush1.msra.mxu0 0.0
    %703 = vmatprep.subr.mxu0 0.0
    %704 = vmatpush1.msra.mxu0 0.0
    %705 = vmatprep.subr.mxu0 0.0
    %706 = vmatpush1.msra.mxu0 0.0
    %707 = vmatprep.subr.mxu0 0.0
    %708 = vmatpush1.msra.mxu0 0.0
    %709 = vmatprep.subr.mxu0 0.0
    %710 = vmatpush1.msra.mxu0 0.0
    %711 = vmatprep.subr.mxu0 0.0
    %712 = vmatpush1.msra.mxu0 0.0
    %713 = vmatprep.subr.mxu0 0.0
    %714 = vmatpush1.msra.mxu0 0.0
    %715 = vmatprep.subr.mxu0 0.0
    %716 = vmatpush1.msra.mxu0 0.0
    %717 = vmatprep.subr.mxu0 0.0
    %718 = vmatpush1.msra.mxu0 0.0
    %719 = vmatprep.subr.mxu0 0.0
    %720 = vmatpush1.msra.mxu0 0.0
    %721 = vmatprep.subr.mxu0 0.0
    %722 = vmatpush1.msra.mxu0 0.0
    %723 = vmatprep.subr.mxu0 0.0
    %724 = vmatpush1.msra.mxu0 0.0
    %725 = vmatprep.subr.mxu0 0.0
    %726 = vmatpush1.msra.mxu0 0.0
    %727 = vmatprep.subr.mxu0 0.0
    %728 = vmatpush1.msra.mxu0 0.0
    %729 = vmatprep.subr.mxu0 0.0
    %730 = vmatpush1.msra.mxu0 0.0
    %731 = vmatprep.mubr.f32.mxu0 0.0
    %v732 = vand.u32 %v566, 4294901760
    %733 = vmatmul.mubr.f32.gmra.mrb[0].mxu0 %v732
    %v734 = vpop.f32.mrb[0].mxu0
    %v735 = vadd.f32 %v644, %v734
    %v736 = vpop.f32.mrb[0].mxu0
    %737 = vdwg.mxu0
    %738 = vmatprep.subr.mxu0 0.0
    %v739 = vand.u32 %v28, 4294901760
    %v740 = vsub.f32 %v28, %v739
    %741 = vmatpush1.msra.mxu0 %v740
    %742 = vmatprep.subr.mxu0 0.0
    %v743 = vand.u32 %v29, 4294901760
    %v744 = vsub.f32 %v29, %v743
    %745 = vmatpush1.msra.mxu0 %v744
    %746 = vmatprep.subr.mxu0 0.0
    %v747 = vand.u32 %v30, 4294901760
    %v748 = vsub.f32 %v30, %v747
    %749 = vmatpush1.msra.mxu0 %v748
    %750 = vmatprep.subr.mxu0 0.0
    %v751 = vand.u32 %v31, 4294901760
    %v752 = vsub.f32 %v31, %v751
    %753 = vmatpush1.msra.mxu0 %v752
    %754 = vmatprep.subr.mxu0 0.0
    %755 = vmatpush1.msra.mxu0 0.0
    %756 = vmatprep.subr.mxu0 0.0
    %757 = vmatpush1.msra.mxu0 0.0
    %758 = vmatprep.subr.mxu0 0.0
    %759 = vmatpush1.msra.mxu0 0.0
    %760 = vmatprep.subr.mxu0 0.0
    %761 = vmatpush1.msra.mxu0 0.0
    %762 = vmatprep.subr.mxu0 0.0
    %763 = vmatpush1.msra.mxu0 0.0
    %764 = vmatprep.subr.mxu0 0.0
    %765 = vmatpush1.msra.mxu0 0.0
    %766 = vmatprep.subr.mxu0 0.0
    %767 = vmatpush1.msra.mxu0 0.0
    %768 = vmatprep.subr.mxu0 0.0
    %769 = vmatpush1.msra.mxu0 0.0
    %770 = vmatprep.subr.mxu0 0.0
    %771 = vmatpush1.msra.mxu0 0.0
    %772 = vmatprep.subr.mxu0 0.0
    %773 = vmatpush1.msra.mxu0 0.0
    %774 = vmatprep.subr.mxu0 0.0
    %775 = vmatpush1.msra.mxu0 0.0
    %776 = vmatprep.subr.mxu0 0.0
    %777 = vmatpush1.msra.mxu0 0.0
    %778 = vmatprep.subr.mxu0 0.0
    %779 = vmatpush1.msra.mxu0 0.0
    %780 = vmatprep.subr.mxu0 0.0
    %781 = vmatpush1.msra.mxu0 0.0
    %782 = vmatprep.subr.mxu0 0.0
    %783 = vmatpush1.msra.mxu0 0.0
    %784 = vmatprep.subr.mxu0 0.0
    %785 = vmatpush1.msra.mxu0 0.0
    %786 = vmatprep.subr.mxu0 0.0
    %787 = vmatpush1.msra.mxu0 0.0
    %788 = vmatprep.subr.mxu0 0.0
    %789 = vmatpush1.msra.mxu0 0.0
    %790 = vmatprep.subr.mxu0 0.0
    %791 = vmatpush1.msra.mxu0 0.0
    %792 = vmatprep.subr.mxu0 0.0
    %793 = vmatpush1.msra.mxu0 0.0
    %794 = vmatprep.subr.mxu0 0.0
    %795 = vmatpush1.msra.mxu0 0.0
    %796 = vmatprep.subr.mxu0 0.0
    %797 = vmatpush1.msra.mxu0 0.0
    %798 = vmatprep.subr.mxu0 0.0
    %799 = vmatpush1.msra.mxu0 0.0
    %800 = vmatprep.subr.mxu0 0.0
    %801 = vmatpush1.msra.mxu0 0.0
    %802 = vmatprep.subr.mxu0 0.0
    %803 = vmatpush1.msra.mxu0 0.0
    %804 = vmatprep.subr.mxu0 0.0
    %805 = vmatpush1.msra.mxu0 0.0
    %806 = vmatprep.subr.mxu0 0.0
    %807 = vmatpush1.msra.mxu0 0.0
    %808 = vmatprep.subr.mxu0 0.0
    %809 = vmatpush1.msra.mxu0 0.0
    %810 = vmatprep.mubr.f32.mxu0 0.0
    %v811 = vand.u32 %v566, 4294901760
    %v812 = vsub.f32 %v566, %v811
    %813 = vmatmul.mubr.f32.gmra.mrb[0].mxu0 %v812
    %v814 = vpop.f32.mrb[0].mxu0
    %v815 = vadd.f32 %v735, %v814
    %v816 = vpop.f32.mrb[0].mxu0
    %817 = vdwg.mxu0
    %818 = vmatprep.subr.mxu0 0.0
    %v819 = vand.u32 %v28, 4294901760
    %820 = vmatpush1.msra.mxu0 %v819
    %821 = vmatprep.subr.mxu0 0.0
    %v822 = vand.u32 %v29, 4294901760
    %823 = vmatpush1.msra.mxu0 %v822
    %824 = vmatprep.subr.mxu0 0.0
    %v825 = vand.u32 %v30, 4294901760
    %826 = vmatpush1.msra.mxu0 %v825
    %827 = vmatprep.subr.mxu0 0.0
    %v828 = vand.u32 %v31, 4294901760
    %829 = vmatpush1.msra.mxu0 %v828
    %830 = vmatprep.subr.mxu0 0.0
    %831 = vmatpush1.msra.mxu0 0.0
    %832 = vmatprep.subr.mxu0 0.0
    %833 = vmatpush1.msra.mxu0 0.0
    %834 = vmatprep.subr.mxu0 0.0
    %835 = vmatpush1.msra.mxu0 0.0
    %836 = vmatprep.subr.mxu0 0.0
    %837 = vmatpush1.msra.mxu0 0.0
    %838 = vmatprep.subr.mxu0 0.0
    %839 = vmatpush1.msra.mxu0 0.0
    %840 = vmatprep.subr.mxu0 0.0
    %841 = vmatpush1.msra.mxu0 0.0
    %842 = vmatprep.subr.mxu0 0.0
    %843 = vmatpush1.msra.mxu0 0.0
    %844 = vmatprep.subr.mxu0 0.0
    %845 = vmatpush1.msra.mxu0 0.0
    %846 = vmatprep.subr.mxu0 0.0
    %847 = vmatpush1.msra.mxu0 0.0
    %848 = vmatprep.subr.mxu0 0.0
    %849 = vmatpush1.msra.mxu0 0.0
    %850 = vmatprep.subr.mxu0 0.0
    %851 = vmatpush1.msra.mxu0 0.0
    %852 = vmatprep.subr.mxu0 0.0
    %853 = vmatpush1.msra.mxu0 0.0
    %854 = vmatprep.subr.mxu0 0.0
    %855 = vmatpush1.msra.mxu0 0.0
    %856 = vmatprep.subr.mxu0 0.0
    %857 = vmatpush1.msra.mxu0 0.0
    %858 = vmatprep.subr.mxu0 0.0
    %859 = vmatpush1.msra.mxu0 0.0
    %860 = vmatprep.subr.mxu0 0.0
    %861 = vmatpush1.msra.mxu0 0.0
    %862 = vmatprep.subr.mxu0 0.0
    %863 = vmatpush1.msra.mxu0 0.0
    %864 = vmatprep.subr.mxu0 0.0
    %865 = vmatpush1.msra.mxu0 0.0
    %866 = vmatprep.subr.mxu0 0.0
    %867 = vmatpush1.msra.mxu0 0.0
    %868 = vmatprep.subr.mxu0 0.0
    %869 = vmatpush1.msra.mxu0 0.0
    %870 = vmatprep.subr.mxu0 0.0
    %871 = vmatpush1.msra.mxu0 0.0
    %872 = vmatprep.subr.mxu0 0.0
    %873 = vmatpush1.msra.mxu0 0.0
    %874 = vmatprep.subr.mxu0 0.0
    %875 = vmatpush1.msra.mxu0 0.0
    %876 = vmatprep.subr.mxu0 0.0
    %877 = vmatpush1.msra.mxu0 0.0
    %878 = vmatprep.subr.mxu0 0.0
    %879 = vmatpush1.msra.mxu0 0.0
    %880 = vmatprep.subr.mxu0 0.0
    %881 = vmatpush1.msra.mxu0 0.0
    %882 = vmatprep.subr.mxu0 0.0
    %883 = vmatpush1.msra.mxu0 0.0
    %884 = vmatprep.subr.mxu0 0.0
    %885 = vmatpush1.msra.mxu0 0.0
    %886 = vmatprep.mubr.f32.mxu0 0.0
    %v887 = vand.u32 %v566, 4294901760
    %v888 = vsub.f32 %v566, %v887
    %v889 = vand.u32 %v888, 4294901760
    %890 = vmatmul.mubr.f32.gmra.mrb[0].mxu0 %v889
    %v891 = vpop.f32.mrb[0].mxu0
    %v892 = vadd.f32 %v815, %v891
    %v893 = vpop.f32.mrb[0].mxu0
    %894 = vdwg.mxu0
    %895 = vmatprep.subr.mxu0 0.0
    %v896 = vand.u32 %v28, 4294901760
    %v897 = vsub.f32 %v28, %v896
    %v898 = vand.u32 %v897, 4294901760
    %899 = vmatpush1.msra.mxu0 %v898
    %900 = vmatprep.subr.mxu0 0.0
    %v901 = vand.u32 %v29, 4294901760
    %v902 = vsub.f32 %v29, %v901
    %v903 = vand.u32 %v902, 4294901760
    %904 = vmatpush1.msra.mxu0 %v903
    %905 = vmatprep.subr.mxu0 0.0
    %v906 = vand.u32 %v30, 4294901760
    %v907 = vsub.f32 %v30, %v906
    %v908 = vand.u32 %v907, 4294901760
    %909 = vmatpush1.msra.mxu0 %v908
    %910 = vmatprep.subr.mxu0 0.0
    %v911 = vand.u32 %v31, 4294901760
    %v912 = vsub.f32 %v31, %v911
    %v913 = vand.u32 %v912, 4294901760
    %914 = vmatpush1.msra.mxu0 %v913
    %915 = vmatprep.subr.mxu0 0.0
    %916 = vmatpush1.msra.mxu0 0.0
    %917 = vmatprep.subr.mxu0 0.0
    %918 = vmatpush1.msra.mxu0 0.0
    %919 = vmatprep.subr.mxu0 0.0
    %920 = vmatpush1.msra.mxu0 0.0
    %921 = vmatprep.subr.mxu0 0.0
    %922 = vmatpush1.msra.mxu0 0.0
    %923 = vmatprep.subr.mxu0 0.0
    %924 = vmatpush1.msra.mxu0 0.0
    %925 = vmatprep.subr.mxu0 0.0
    %926 = vmatpush1.msra.mxu0 0.0
    %927 = vmatprep.subr.mxu0 0.0
    %928 = vmatpush1.msra.mxu0 0.0
    %929 = vmatprep.subr.mxu0 0.0
    %930 = vmatpush1.msra.mxu0 0.0
    %931 = vmatprep.subr.mxu0 0.0
    %932 = vmatpush1.msra.mxu0 0.0
    %933 = vmatprep.subr.mxu0 0.0
    %934 = vmatpush1.msra.mxu0 0.0
    %935 = vmatprep.subr.mxu0 0.0
    %936 = vmatpush1.msra.mxu0 0.0
    %937 = vmatprep.subr.mxu0 0.0
    %938 = vmatpush1.msra.mxu0 0.0
    %939 = vmatprep.subr.mxu0 0.0
    %940 = vmatpush1.msra.mxu0 0.0
    %941 = vmatprep.subr.mxu0 0.0
    %942 = vmatpush1.msra.mxu0 0.0
    %943 = vmatprep.subr.mxu0 0.0
    %944 = vmatpush1.msra.mxu0 0.0
    %945 = vmatprep.subr.mxu0 0.0
    %946 = vmatpush1.msra.mxu0 0.0
    %947 = vmatprep.subr.mxu0 0.0
    %948 = vmatpush1.msra.mxu0 0.0
    %949 = vmatprep.subr.mxu0 0.0
    %950 = vmatpush1.msra.mxu0 0.0
    %951 = vmatprep.subr.mxu0 0.0
    %952 = vmatpush1.msra.mxu0 0.0
    %953 = vmatprep.subr.mxu0 0.0
    %954 = vmatpush1.msra.mxu0 0.0
    %955 = vmatprep.subr.mxu0 0.0
    %956 = vmatpush1.msra.mxu0 0.0
    %957 = vmatprep.subr.mxu0 0.0
    %958 = vmatpush1.msra.mxu0 0.0
    %959 = vmatprep.subr.mxu0 0.0
    %960 = vmatpush1.msra.mxu0 0.0
    %961 = vmatprep.subr.mxu0 0.0
    %962 = vmatpush1.msra.mxu0 0.0
    %963 = vmatprep.subr.mxu0 0.0
    %964 = vmatpush1.msra.mxu0 0.0
    %965 = vmatprep.subr.mxu0 0.0
    %966 = vmatpush1.msra.mxu0 0.0
    %967 = vmatprep.subr.mxu0 0.0
    %968 = vmatpush1.msra.mxu0 0.0
    %969 = vmatprep.subr.mxu0 0.0
    %970 = vmatpush1.msra.mxu0 0.0
    %971 = vmatprep.mubr.f32.mxu0 0.0
    %v972 = vand.u32 %v566, 4294901760
    %973 = vmatmul.mubr.f32.gmra.mrb[0].mxu0 %v972
    %v974 = vpop.f32.mrb[0].mxu0
    %v975 = vadd.f32 %v892, %v974
    %v976 = vpop.f32.mrb[0].mxu0
    %977 = vdwg.mxu0
    %978 = vmatprep.subr.mxu0 0.0
    %v979 = vand.u32 %v28, 4294901760
    %980 = vmatpush1.msra.mxu0 %v979
    %981 = vmatprep.subr.mxu0 0.0
    %v982 = vand.u32 %v29, 4294901760
    %983 = vmatpush1.msra.mxu0 %v982
    %984 = vmatprep.subr.mxu0 0.0
    %v985 = vand.u32 %v30, 4294901760
    %986 = vmatpush1.msra.mxu0 %v985
    %987 = vmatprep.subr.mxu0 0.0
    %v988 = vand.u32 %v31, 4294901760
    %989 = vmatpush1.msra.mxu0 %v988
    %990 = vmatprep.subr.mxu0 0.0
    %991 = vmatpush1.msra.mxu0 0.0
    %992 = vmatprep.subr.mxu0 0.0
    %993 = vmatpush1.msra.mxu0 0.0
    %994 = vmatprep.subr.mxu0 0.0
    %995 = vmatpush1.msra.mxu0 0.0
    %996 = vmatprep.subr.mxu0 0.0
    %997 = vmatpush1.msra.mxu0 0.0
    %998 = vmatprep.subr.mxu0 0.0
    %999 = vmatpush1.msra.mxu0 0.0
    %1000 = vmatprep.subr.mxu0 0.0
    %1001 = vmatpush1.msra.mxu0 0.0
    %1002 = vmatprep.subr.mxu0 0.0
    %1003 = vmatpush1.msra.mxu0 0.0
    %1004 = vmatprep.subr.mxu0 0.0
    %1005 = vmatpush1.msra.mxu0 0.0
    %1006 = vmatprep.subr.mxu0 0.0
    %1007 = vmatpush1.msra.mxu0 0.0
    %1008 = vmatprep.subr.mxu0 0.0
    %1009 = vmatpush1.msra.mxu0 0.0
    %1010 = vmatprep.subr.mxu0 0.0
    %1011 = vmatpush1.msra.mxu0 0.0
    %1012 = vmatprep.subr.mxu0 0.0
    %1013 = vmatpush1.msra.mxu0 0.0
    %1014 = vmatprep.subr.mxu0 0.0
    %1015 = vmatpush1.msra.mxu0 0.0
    %1016 = vmatprep.subr.mxu0 0.0
    %1017 = vmatpush1.msra.mxu0 0.0
    %1018 = vmatprep.subr.mxu0 0.0
    %1019 = vmatpush1.msra.mxu0 0.0
    %1020 = vmatprep.subr.mxu0 0.0
    %1021 = vmatpush1.msra.mxu0 0.0
    %1022 = vmatprep.subr.mxu0 0.0
    %1023 = vmatpush1.msra.mxu0 0.0
    %1024 = vmatprep.subr.mxu0 0.0
    %1025 = vmatpush1.msra.mxu0 0.0
    %1026 = vmatprep.subr.mxu0 0.0
    %1027 = vmatpush1.msra.mxu0 0.0
    %1028 = vmatprep.subr.mxu0 0.0
    %1029 = vmatpush1.msra.mxu0 0.0
    %1030 = vmatprep.subr.mxu0 0.0
    %1031 = vmatpush1.msra.mxu0 0.0
    %1032 = vmatprep.subr.mxu0 0.0
    %1033 = vmatpush1.msra.mxu0 0.0
    %1034 = vmatprep.subr.mxu0 0.0
    %1035 = vmatpush1.msra.mxu0 0.0
    %1036 = vmatprep.subr.mxu0 0.0
    %1037 = vmatpush1.msra.mxu0 0.0
    %1038 = vmatprep.subr.mxu0 0.0
    %1039 = vmatpush1.msra.mxu0 0.0
    %1040 = vmatprep.subr.mxu0 0.0
    %1041 = vmatpush1.msra.mxu0 0.0
    %1042 = vmatprep.subr.mxu0 0.0
    %1043 = vmatpush1.msra.mxu0 0.0
    %1044 = vmatprep.subr.mxu0 0.0
    %1045 = vmatpush1.msra.mxu0 0.0
    %1046 = vmatprep.mubr.f32.mxu0 0.0
    %v1047 = vand.u32 %v566, 4294901760
    %1048 = vmatmul.mubr.f32.gmra.mrb[0].mxu0 %v1047
    %v1049 = vpop.f32.mrb[0].mxu0
    %v1050 = vadd.f32 %v975, %v1049
    %v1051 = vpop.f32.mrb[0].mxu0
    %1052 = vdwg.mxu0
    %v1054 = vrot.slane %v1050, 6
    %v1056 = vadd.f32 %v534, %v1054
    %v1057 = vxor.u32 %v1056, 2147483648
    %v1058 = vmul.f32 %v1057, 1.442695
    %v1059 = vpow.pop %v1058
    %v1060 = vadd.f32 %v1059, 1.0
    %v1061 = vrcp.pop %v1060
    %v1062 = vmul.f32 1.0, %v1061
    %v1063 = vmul.f32 %v1062, 2.0
    %v1064 = vsub.f32 %v1063, 1.0
    %v1066 = vrot.slane %v555, 6
    %1067 = vrot.lane.b32.xlu0 %v1066, 32
    %v1068 = vpop.permute.xlu0 %1067
    %v1070 = vmul.f32 %v1062, %v1068
    %1072 = vrot.lane.b32.xlu0 %v1064, 64
    %v1073 = vpop.permute.xlu0 %1072
    %v1075 = vmul.f32 %v1062, %v1073
    %1077 = vrot.lane.b32.xlu0 %v1075, 32
    %v1078 = vpop.permute.xlu0 %1077
    %v1080 = vadd.f32 %v1070, %v1078
    %v1081 = vtanh.pop %v1080
    %1083 = vrot.lane.b32.xlu0 %v1081, 64
    %v1084 = vpop.permute.xlu0 %1083
    %v1086 = vmul.f32 %v1062, %v1084
    %v1088 = vrot.slane %v1086, 2
    %1089 = vrot.lane.b32.xlu0 %v1088, 32
    %v1090 = vpop.permute.xlu0 %1089
    %v1091 = vsel %vm565, %v1090, 0
    %1093 = vmatprep.subr.mxu0 0.0
    %v1094 = vand.u32 %v28, 4294901760
    %1095 = vmatpush1.msra.mxu0 %v1094
    %1096 = vmatprep.subr.mxu0 0.0
    %v1097 = vand.u32 %v29, 4294901760
    %1098 = vmatpush1.msra.mxu0 %v1097
    %1099 = vmatprep.subr.mxu0 0.0
    %v1100 = vand.u32 %v30, 4294901760
    %1101 = vmatpush1.msra.mxu0 %v1100
    %1102 = vmatprep.subr.mxu0 0.0
    %v1103 = vand.u32 %v31, 4294901760
    %1104 = vmatpush1.msra.mxu0 %v1103
    %1105 = vmatprep.subr.mxu0 0.0
    %1106 = vmatpush1.msra.mxu0 0.0
    %1107 = vmatprep.subr.mxu0 0.0
    %1108 = vmatpush1.msra.mxu0 0.0
    %1109 = vmatprep.subr.mxu0 0.0
    %1110 = vmatpush1.msra.mxu0 0.0
    %1111 = vmatprep.subr.mxu0 0.0
    %1112 = vmatpush1.msra.mxu0 0.0
    %1113 = vmatprep.subr.mxu0 0.0
    %1114 = vmatpush1.msra.mxu0 0.0
    %1115 = vmatprep.subr.mxu0 0.0
    %1116 = vmatpush1.msra.mxu0 0.0
    %1117 = vmatprep.subr.mxu0 0.0
    %1118 = vmatpush1.msra.mxu0 0.0
    %1119 = vmatprep.subr.mxu0 0.0
    %1120 = vmatpush1.msra.mxu0 0.0
    %1121 = vmatprep.subr.mxu0 0.0
    %1122 = vmatpush1.msra.mxu0 0.0
    %1123 = vmatprep.subr.mxu0 0.0
    %1124 = vmatpush1.msra.mxu0 0.0
    %1125 = vmatprep.subr.mxu0 0.0
    %1126 = vmatpush1.msra.mxu0 0.0
    %1127 = vmatprep.subr.mxu0 0.0
    %1128 = vmatpush1.msra.mxu0 0.0
    %1129 = vmatprep.subr.mxu0 0.0
    %1130 = vmatpush1.msra.mxu0 0.0
    %1131 = vmatprep.subr.mxu0 0.0
    %1132 = vmatpush1.msra.mxu0 0.0
    %1133 = vmatprep.subr.mxu0 0.0
    %1134 = vmatpush1.msra.mxu0 0.0
    %1135 = vmatprep.subr.mxu0 0.0
    %1136 = vmatpush1.msra.mxu0 0.0
    %1137 = vmatprep.subr.mxu0 0.0
    %1138 = vmatpush1.msra.mxu0 0.0
    %1139 = vmatprep.subr.mxu0 0.0
    %1140 = vmatpush1.msra.mxu0 0.0
    %1141 = vmatprep.subr.mxu0 0.0
    %1142 = vmatpush1.msra.mxu0 0.0
    %1143 = vmatprep.subr.mxu0 0.0
    %1144 = vmatpush1.msra.mxu0 0.0
    %1145 = vmatprep.subr.mxu0 0.0
    %1146 = vmatpush1.msra.mxu0 0.0
    %1147 = vmatprep.subr.mxu0 0.0
    %1148 = vmatpush1.msra.mxu0 0.0
    %1149 = vmatprep.subr.mxu0 0.0
    %1150 = vmatpush1.msra.mxu0 0.0
    %1151 = vmatprep.subr.mxu0 0.0
    %1152 = vmatpush1.msra.mxu0 0.0
    %1153 = vmatprep.subr.mxu0 0.0
    %1154 = vmatpush1.msra.mxu0 0.0
    %1155 = vmatprep.subr.mxu0 0.0
    %1156 = vmatpush1.msra.mxu0 0.0
    %1157 = vmatprep.subr.mxu0 0.0
    %1158 = vmatpush1.msra.mxu0 0.0
    %1159 = vmatprep.subr.mxu0 0.0
    %1160 = vmatpush1.msra.mxu0 0.0
    %1161 = vmatprep.mubr.f32.mxu0 0.0
    %v1162 = vand.u32 %v1091, 4294901760
    %v1163 = vsub.f32 %v1091, %v1162
    %v1164 = vand.u32 %v1163, 4294901760
    %v1165 = vsub.f32 %v1163, %v1164
    %v1166 = vand.u32 %v1165, 4294901760
    %1167 = vmatmul.mubr.f32.gmra.mrb[0].mxu0 %v1166
    %v1168 = vpop.f32.mrb[0].mxu0
    %v1169 = vadd.f32 0.0, %v1168
    %v1170 = vpop.f32.mrb[0].mxu0
    %1171 = vdwg.mxu0
    %1172 = vmatprep.subr.mxu0 0.0
    %v1173 = vand.u32 %v28, 4294901760
    %v1174 = vsub.f32 %v28, %v1173
    %v1175 = vand.u32 %v1174, 4294901760
    %v1176 = vsub.f32 %v1174, %v1175
    %v1177 = vand.u32 %v1176, 4294901760
    %1178 = vmatpush1.msra.mxu0 %v1177
    %1179 = vmatprep.subr.mxu0 0.0
    %v1180 = vand.u32 %v29, 4294901760
    %v1181 = vsub.f32 %v29, %v1180
    %v1182 = vand.u32 %v1181, 4294901760
    %v1183 = vsub.f32 %v1181, %v1182
    %v1184 = vand.u32 %v1183, 4294901760
    %1185 = vmatpush1.msra.mxu0 %v1184
    %1186 = vmatprep.subr.mxu0 0.0
    %v1187 = vand.u32 %v30, 4294901760
    %v1188 = vsub.f32 %v30, %v1187
    %v1189 = vand.u32 %v1188, 4294901760
    %v1190 = vsub.f32 %v1188, %v1189
    %v1191 = vand.u32 %v1190, 4294901760
    %1192 = vmatpush1.msra.mxu0 %v1191
    %1193 = vmatprep.subr.mxu0 0.0
    %v1194 = vand.u32 %v31, 4294901760
    %v1195 = vsub.f32 %v31, %v1194
    %v1196 = vand.u32 %v1195, 4294901760
    %v1197 = vsub.f32 %v1195, %v1196
    %v1198 = vand.u32 %v1197, 4294901760
    %1199 = vmatpush1.msra.mxu0 %v1198
    %1200 = vmatprep.subr.mxu0 0.0
    %1201 = vmatpush1.msra.mxu0 0.0
    %1202 = vmatprep.subr.mxu0 0.0
    %1203 = vmatpush1.msra.mxu0 0.0
    %1204 = vmatprep.subr.mxu0 0.0
    %1205 = vmatpush1.msra.mxu0 0.0
    %1206 = vmatprep.subr.mxu0 0.0
    %1207 = vmatpush1.msra.mxu0 0.0
    %1208 = vmatprep.subr.mxu0 0.0
    %1209 = vmatpush1.msra.mxu0 0.0
    %1210 = vmatprep.subr.mxu0 0.0
    %1211 = vmatpush1.msra.mxu0 0.0
    %1212 = vmatprep.subr.mxu0 0.0
    %1213 = vmatpush1.msra.mxu0 0.0
    %1214 = vmatprep.subr.mxu0 0.0
    %1215 = vmatpush1.msra.mxu0 0.0
    %1216 = vmatprep.subr.mxu0 0.0
    %1217 = vmatpush1.msra.mxu0 0.0
    %1218 = vmatprep.subr.mxu0 0.0
    %1219 = vmatpush1.msra.mxu0 0.0
    %1220 = vmatprep.subr.mxu0 0.0
    %1221 = vmatpush1.msra.mxu0 0.0
    %1222 = vmatprep.subr.mxu0 0.0
    %1223 = vmatpush1.msra.mxu0 0.0
    %1224 = vmatprep.subr.mxu0 0.0
    %1225 = vmatpush1.msra.mxu0 0.0
    %1226 = vmatprep.subr.mxu0 0.0
    %1227 = vmatpush1.msra.mxu0 0.0
    %1228 = vmatprep.subr.mxu0 0.0
    %1229 = vmatpush1.msra.mxu0 0.0
    %1230 = vmatprep.subr.mxu0 0.0
    %1231 = vmatpush1.msra.mxu0 0.0
    %1232 = vmatprep.subr.mxu0 0.0
    %1233 = vmatpush1.msra.mxu0 0.0
    %1234 = vmatprep.subr.mxu0 0.0
    %1235 = vmatpush1.msra.mxu0 0.0
    %1236 = vmatprep.subr.mxu0 0.0
    %1237 = vmatpush1.msra.mxu0 0.0
    %1238 = vmatprep.subr.mxu0 0.0
    %1239 = vmatpush1.msra.mxu0 0.0
    %1240 = vmatprep.subr.mxu0 0.0
    %1241 = vmatpush1.msra.mxu0 0.0
    %1242 = vmatprep.subr.mxu0 0.0
    %1243 = vmatpush1.msra.mxu0 0.0
    %1244 = vmatprep.subr.mxu0 0.0
    %1245 = vmatpush1.msra.mxu0 0.0
    %1246 = vmatprep.subr.mxu0 0.0
    %1247 = vmatpush1.msra.mxu0 0.0
    %1248 = vmatprep.subr.mxu0 0.0
    %1249 = vmatpush1.msra.mxu0 0.0
    %1250 = vmatprep.subr.mxu0 0.0
    %1251 = vmatpush1.msra.mxu0 0.0
    %1252 = vmatprep.subr.mxu0 0.0
    %1253 = vmatpush1.msra.mxu0 0.0
    %1254 = vmatprep.subr.mxu0 0.0
    %1255 = vmatpush1.msra.mxu0 0.0
    %1256 = vmatprep.mubr.f32.mxu0 0.0
    %v1257 = vand.u32 %v1091, 4294901760
    %1258 = vmatmul.mubr.f32.gmra.mrb[0].mxu0 %v1257
    %v1259 = vpop.f32.mrb[0].mxu0
    %v1260 = vadd.f32 %v1169, %v1259
    %v1261 = vpop.f32.mrb[0].mxu0
    %1262 = vdwg.mxu0
    %1263 = vmatprep.subr.mxu0 0.0
    %v1264 = vand.u32 %v28, 4294901760
    %v1265 = vsub.f32 %v28, %v1264
    %1266 = vmatpush1.msra.mxu0 %v1265
    %1267 = vmatprep.subr.mxu0 0.0
    %v1268 = vand.u32 %v29, 4294901760
    %v1269 = vsub.f32 %v29, %v1268
    %1270 = vmatpush1.msra.mxu0 %v1269
    %1271 = vmatprep.subr.mxu0 0.0
    %v1272 = vand.u32 %v30, 4294901760
    %v1273 = vsub.f32 %v30, %v1272
    %1274 = vmatpush1.msra.mxu0 %v1273
    %1275 = vmatprep.subr.mxu0 0.0
    %v1276 = vand.u32 %v31, 4294901760
    %v1277 = vsub.f32 %v31, %v1276
    %1278 = vmatpush1.msra.mxu0 %v1277
    %1279 = vmatprep.subr.mxu0 0.0
    %1280 = vmatpush1.msra.mxu0 0.0
    %1281 = vmatprep.subr.mxu0 0.0
    %1282 = vmatpush1.msra.mxu0 0.0
    %1283 = vmatprep.subr.mxu0 0.0
    %1284 = vmatpush1.msra.mxu0 0.0
    %1285 = vmatprep.subr.mxu0 0.0
    %1286 = vmatpush1.msra.mxu0 0.0
    %1287 = vmatprep.subr.mxu0 0.0
    %1288 = vmatpush1.msra.mxu0 0.0
    %1289 = vmatprep.subr.mxu0 0.0
    %1290 = vmatpush1.msra.mxu0 0.0
    %1291 = vmatprep.subr.mxu0 0.0
    %1292 = vmatpush1.msra.mxu0 0.0
    %1293 = vmatprep.subr.mxu0 0.0
    %1294 = vmatpush1.msra.mxu0 0.0
    %1295 = vmatprep.subr.mxu0 0.0
    %1296 = vmatpush1.msra.mxu0 0.0
    %1297 = vmatprep.subr.mxu0 0.0
    %1298 = vmatpush1.msra.mxu0 0.0
    %1299 = vmatprep.subr.mxu0 0.0
    %1300 = vmatpush1.msra.mxu0 0.0
    %1301 = vmatprep.subr.mxu0 0.0
    %1302 = vmatpush1.msra.mxu0 0.0
    %1303 = vmatprep.subr.mxu0 0.0
    %1304 = vmatpush1.msra.mxu0 0.0
    %1305 = vmatprep.subr.mxu0 0.0
    %1306 = vmatpush1.msra.mxu0 0.0
    %1307 = vmatprep.subr.mxu0 0.0
    %1308 = vmatpush1.msra.mxu0 0.0
    %1309 = vmatprep.subr.mxu0 0.0
    %1310 = vmatpush1.msra.mxu0 0.0
    %1311 = vmatprep.subr.mxu0 0.0
    %1312 = vmatpush1.msra.mxu0 0.0
    %1313 = vmatprep.subr.mxu0 0.0
    %1314 = vmatpush1.msra.mxu0 0.0
    %1315 = vmatprep.subr.mxu0 0.0
    %1316 = vmatpush1.msra.mxu0 0.0
    %1317 = vmatprep.subr.mxu0 0.0
    %1318 = vmatpush1.msra.mxu0 0.0
    %1319 = vmatprep.subr.mxu0 0.0
    %1320 = vmatpush1.msra.mxu0 0.0
    %1321 = vmatprep.subr.mxu0 0.0
    %1322 = vmatpush1.msra.mxu0 0.0
    %1323 = vmatprep.subr.mxu0 0.0
    %1324 = vmatpush1.msra.mxu0 0.0
    %1325 = vmatprep.subr.mxu0 0.0
    %1326 = vmatpush1.msra.mxu0 0.0
    %1327 = vmatprep.subr.mxu0 0.0
    %1328 = vmatpush1.msra.mxu0 0.0
    %1329 = vmatprep.subr.mxu0 0.0
    %1330 = vmatpush1.msra.mxu0 0.0
    %1331 = vmatprep.subr.mxu0 0.0
    %1332 = vmatpush1.msra.mxu0 0.0
    %1333 = vmatprep.subr.mxu0 0.0
    %1334 = vmatpush1.msra.mxu0 0.0
    %1335 = vmatprep.mubr.f32.mxu0 0.0
    %v1336 = vand.u32 %v1091, 4294901760
    %v1337 = vsub.f32 %v1091, %v1336
    %1338 = vmatmul.mubr.f32.gmra.mrb[0].mxu0 %v1337
    %v1339 = vpop.f32.mrb[0].mxu0
    %v1340 = vadd.f32 %v1260, %v1339
    %v1341 = vpop.f32.mrb[0].mxu0
    %1342 = vdwg.mxu0
    %1343 = vmatprep.subr.mxu0 0.0
    %v1344 = vand.u32 %v28, 4294901760
    %1345 = vmatpush1.msra.mxu0 %v1344
    %1346 = vmatprep.subr.mxu0 0.0
    %v1347 = vand.u32 %v29, 4294901760
    %1348 = vmatpush1.msra.mxu0 %v1347
    %1349 = vmatprep.subr.mxu0 0.0
    %v1350 = vand.u32 %v30, 4294901760
    %1351 = vmatpush1.msra.mxu0 %v1350
    %1352 = vmatprep.subr.mxu0 0.0
    %v1353 = vand.u32 %v31, 4294901760
    %1354 = vmatpush1.msra.mxu0 %v1353
    %1355 = vmatprep.subr.mxu0 0.0
    %1356 = vmatpush1.msra.mxu0 0.0
    %1357 = vmatprep.subr.mxu0 0.0
    %1358 = vmatpush1.msra.mxu0 0.0
    %1359 = vmatprep.subr.mxu0 0.0
    %1360 = vmatpush1.msra.mxu0 0.0
    %1361 = vmatprep.subr.mxu0 0.0
    %1362 = vmatpush1.msra.mxu0 0.0
    %1363 = vmatprep.subr.mxu0 0.0
    %1364 = vmatpush1.msra.mxu0 0.0
    %1365 = vmatprep.subr.mxu0 0.0
    %1366 = vmatpush1.msra.mxu0 0.0
    %1367 = vmatprep.subr.mxu0 0.0
    %1368 = vmatpush1.msra.mxu0 0.0
    %1369 = vmatprep.subr.mxu0 0.0
    %1370 = vmatpush1.msra.mxu0 0.0
    %1371 = vmatprep.subr.mxu0 0.0
    %1372 = vmatpush1.msra.mxu0 0.0
    %1373 = vmatprep.subr.mxu0 0.0
    %1374 = vmatpush1.msra.mxu0 0.0
    %1375 = vmatprep.subr.mxu0 0.0
    %1376 = vmatpush1.msra.mxu0 0.0
    %1377 = vmatprep.subr.mxu0 0.0
    %1378 = vmatpush1.msra.mxu0 0.0
    %1379 = vmatprep.subr.mxu0 0.0
    %1380 = vmatpush1.msra.mxu0 0.0
    %1381 = vmatprep.subr.mxu0 0.0
    %1382 = vmatpush1.msra.mxu0 0.0
    %1383 = vmatprep.subr.mxu0 0.0
    %1384 = vmatpush1.msra.mxu0 0.0
    %1385 = vmatprep.subr.mxu0 0.0
    %1386 = vmatpush1.msra.mxu0 0.0
    %1387 = vmatprep.subr.mxu0 0.0
    %1388 = vmatpush1.msra.mxu0 0.0
    %1389 = vmatprep.subr.mxu0 0.0
    %1390 = vmatpush1.msra.mxu0 0.0
    %1391 = vmatprep.subr.mxu0 0.0
    %1392 = vmatpush1.msra.mxu0 0.0
    %1393 = vmatprep.subr.mxu0 0.0
    %1394 = vmatpush1.msra.mxu0 0.0
    %1395 = vmatprep.subr.mxu0 0.0
    %1396 = vmatpush1.msra.mxu0 0.0
    %1397 = vmatprep.subr.mxu0 0.0
    %1398 = vmatpush1.msra.mxu0 0.0
    %1399 = vmatprep.subr.mxu0 0.0
    %1400 = vmatpush1.msra.mxu0 0.0
    %1401 = vmatprep.subr.mxu0 0.0
    %1402 = vmatpush1.msra.mxu0 0.0
    %1403 = vmatprep.subr.mxu0 0.0
    %1404 = vmatpush1.msra.mxu0 0.0
    %1405 = vmatprep.subr.mxu0 0.0
    %1406 = vmatpush1.msra.mxu0 0.0
    %1407 = vmatprep.subr.mxu0 0.0
    %1408 = vmatpush1.msra.mxu0 0.0
    %1409 = vmatprep.subr.mxu0 0.0
    %1410 = vmatpush1.msra.mxu0 0.0
    %1411 = vmatprep.mubr.f32.mxu0 0.0
    %v1412 = vand.u32 %v1091, 4294901760
    %v1413 = vsub.f32 %v1091, %v1412
    %v1414 = vand.u32 %v1413, 4294901760
    %1415 = vmatmul.mubr.f32.gmra.mrb[0].mxu0 %v1414
    %v1416 = vpop.f32.mrb[0].mxu0
    %v1417 = vadd.f32 %v1340, %v1416
    %v1418 = vpop.f32.mrb[0].mxu0
    %1419 = vdwg.mxu0
    %1420 = vmatprep.subr.mxu0 0.0
    %v1421 = vand.u32 %v28, 4294901760
    %v1422 = vsub.f32 %v28, %v1421
    %v1423 = vand.u32 %v1422, 4294901760
    %1424 = vmatpush1.msra.mxu0 %v1423
    %1425 = vmatprep.subr.mxu0 0.0
    %v1426 = vand.u32 %v29, 4294901760
    %v1427 = vsub.f32 %v29, %v1426
    %v1428 = vand.u32 %v1427, 4294901760
    %1429 = vmatpush1.msra.mxu0 %v1428
    %1430 = vmatprep.subr.mxu0 0.0
    %v1431 = vand.u32 %v30, 4294901760
    %v1432 = vsub.f32 %v30, %v1431
    %v1433 = vand.u32 %v1432, 4294901760
    %1434 = vmatpush1.msra.mxu0 %v1433
    %1435 = vmatprep.subr.mxu0 0.0
    %v1436 = vand.u32 %v31, 4294901760
    %v1437 = vsub.f32 %v31, %v1436
    %v1438 = vand.u32 %v1437, 4294901760
    %1439 = vmatpush1.msra.mxu0 %v1438
    %1440 = vmatprep.subr.mxu0 0.0
    %1441 = vmatpush1.msra.mxu0 0.0
    %1442 = vmatprep.subr.mxu0 0.0
    %1443 = vmatpush1.msra.mxu0 0.0
    %1444 = vmatprep.subr.mxu0 0.0
    %1445 = vmatpush1.msra.mxu0 0.0
    %1446 = vmatprep.subr.mxu0 0.0
    %1447 = vmatpush1.msra.mxu0 0.0
    %1448 = vmatprep.subr.mxu0 0.0
    %1449 = vmatpush1.msra.mxu0 0.0
    %1450 = vmatprep.subr.mxu0 0.0
    %1451 = vmatpush1.msra.mxu0 0.0
    %1452 = vmatprep.subr.mxu0 0.0
    %1453 = vmatpush1.msra.mxu0 0.0
    %1454 = vmatprep.subr.mxu0 0.0
    %1455 = vmatpush1.msra.mxu0 0.0
    %1456 = vmatprep.subr.mxu0 0.0
    %1457 = vmatpush1.msra.mxu0 0.0
    %1458 = vmatprep.subr.mxu0 0.0
    %1459 = vmatpush1.msra.mxu0 0.0
    %1460 = vmatprep.subr.mxu0 0.0
    %1461 = vmatpush1.msra.mxu0 0.0
    %1462 = vmatprep.subr.mxu0 0.0
    %1463 = vmatpush1.msra.mxu0 0.0
    %1464 = vmatprep.subr.mxu0 0.0
    %1465 = vmatpush1.msra.mxu0 0.0
    %1466 = vmatprep.subr.mxu0 0.0
    %1467 = vmatpush1.msra.mxu0 0.0
    %1468 = vmatprep.subr.mxu0 0.0
    %1469 = vmatpush1.msra.mxu0 0.0
    %1470 = vmatprep.subr.mxu0 0.0
    %1471 = vmatpush1.msra.mxu0 0.0
    %1472 = vmatprep.subr.mxu0 0.0
    %1473 = vmatpush1.msra.mxu0 0.0
    %1474 = vmatprep.subr.mxu0 0.0
    %1475 = vmatpush1.msra.mxu0 0.0
    %1476 = vmatprep.subr.mxu0 0.0
    %1477 = vmatpush1.msra.mxu0 0.0
    %1478 = vmatprep.subr.mxu0 0.0
    %1479 = vmatpush1.msra.mxu0 0.0
    %1480 = vmatprep.subr.mxu0 0.0
    %1481 = vmatpush1.msra.mxu0 0.0
    %1482 = vmatprep.subr.mxu0 0.0
    %1483 = vmatpush1.msra.mxu0 0.0
    %1484 = vmatprep.subr.mxu0 0.0
    %1485 = vmatpush1.msra.mxu0 0.0
    %1486 = vmatprep.subr.mxu0 0.0
    %1487 = vmatpush1.msra.mxu0 0.0
    %1488 = vmatprep.subr.mxu0 0.0
    %1489 = vmatpush1.msra.mxu0 0.0
    %1490 = vmatprep.subr.mxu0 0.0
    %1491 = vmatpush1.msra.mxu0 0.0
    %1492 = vmatprep.subr.mxu0 0.0
    %1493 = vmatpush1.msra.mxu0 0.0
    %1494 = vmatprep.subr.mxu0 0.0
    %1495 = vmatpush1.msra.mxu0 0.0
    %1496 = vmatprep.mubr.f32.mxu0 0.0
    %v1497 = vand.u32 %v1091, 4294901760
    %1498 = vmatmul.mubr.f32.gmra.mrb[0].mxu0 %v1497
    %v1499 = vpop.f32.mrb[0].mxu0
    %v1500 = vadd.f32 %v1417, %v1499
    %v1501 = vpop.f32.mrb[0].mxu0
    %1502 = vdwg.mxu0
    %1503 = vmatprep.subr.mxu0 0.0
    %v1504 = vand.u32 %v28, 4294901760
    %1505 = vmatpush1.msra.mxu0 %v1504
    %1506 = vmatprep.subr.mxu0 0.0
    %v1507 = vand.u32 %v29, 4294901760
    %1508 = vmatpush1.msra.mxu0 %v1507
    %1509 = vmatprep.subr.mxu0 0.0
    %v1510 = vand.u32 %v30, 4294901760
    %1511 = vmatpush1.msra.mxu0 %v1510
    %1512 = vmatprep.subr.mxu0 0.0
    %v1513 = vand.u32 %v31, 4294901760
    %1514 = vmatpush1.msra.mxu0 %v1513
    %1515 = vmatprep.subr.mxu0 0.0
    %1516 = vmatpush1.msra.mxu0 0.0
    %1517 = vmatprep.subr.mxu0 0.0
    %1518 = vmatpush1.msra.mxu0 0.0
    %1519 = vmatprep.subr.mxu0 0.0
    %1520 = vmatpush1.msra.mxu0 0.0
    %1521 = vmatprep.subr.mxu0 0.0
    %1522 = vmatpush1.msra.mxu0 0.0
    %1523 = vmatprep.subr.mxu0 0.0
    %1524 = vmatpush1.msra.mxu0 0.0
    %1525 = vmatprep.subr.mxu0 0.0
    %1526 = vmatpush1.msra.mxu0 0.0
    %1527 = vmatprep.subr.mxu0 0.0
    %1528 = vmatpush1.msra.mxu0 0.0
    %1529 = vmatprep.subr.mxu0 0.0
    %1530 = vmatpush1.msra.mxu0 0.0
    %1531 = vmatprep.subr.mxu0 0.0
    %1532 = vmatpush1.msra.mxu0 0.0
    %1533 = vmatprep.subr.mxu0 0.0
    %1534 = vmatpush1.msra.mxu0 0.0
    %1535 = vmatprep.subr.mxu0 0.0
    %1536 = vmatpush1.msra.mxu0 0.0
    %1537 = vmatprep.subr.mxu0 0.0
    %1538 = vmatpush1.msra.mxu0 0.0
    %1539 = vmatprep.subr.mxu0 0.0
    %1540 = vmatpush1.msra.mxu0 0.0
    %1541 = vmatprep.subr.mxu0 0.0
    %1542 = vmatpush1.msra.mxu0 0.0
    %1543 = vmatprep.subr.mxu0 0.0
    %1544 = vmatpush1.msra.mxu0 0.0
    %1545 = vmatprep.subr.mxu0 0.0
    %1546 = vmatpush1.msra.mxu0 0.0
    %1547 = vmatprep.subr.mxu0 0.0
    %1548 = vmatpush1.msra.mxu0 0.0
    %1549 = vmatprep.subr.mxu0 0.0
    %1550 = vmatpush1.msra.mxu0 0.0
    %1551 = vmatprep.subr.mxu0 0.0
    %1552 = vmatpush1.msra.mxu0 0.0
    %1553 = vmatprep.subr.mxu0 0.0
    %1554 = vmatpush1.msra.mxu0 0.0
    %1555 = vmatprep.subr.mxu0 0.0
    %1556 = vmatpush1.msra.mxu0 0.0
    %1557 = vmatprep.subr.mxu0 0.0
    %1558 = vmatpush1.msra.mxu0 0.0
    %1559 = vmatprep.subr.mxu0 0.0
    %1560 = vmatpush1.msra.mxu0 0.0
    %1561 = vmatprep.subr.mxu0 0.0
    %1562 = vmatpush1.msra.mxu0 0.0
    %1563 = vmatprep.subr.mxu0 0.0
    %1564 = vmatpush1.msra.mxu0 0.0
    %1565 = vmatprep.subr.mxu0 0.0
    %1566 = vmatpush1.msra.mxu0 0.0
    %1567 = vmatprep.subr.mxu0 0.0
    %1568 = vmatpush1.msra.mxu0 0.0
    %1569 = vmatprep.subr.mxu0 0.0
    %1570 = vmatpush1.msra.mxu0 0.0
    %1571 = vmatprep.mubr.f32.mxu0 0.0
    %v1572 = vand.u32 %v1091, 4294901760
    %1573 = vmatmul.mubr.f32.gmra.mrb[0].mxu0 %v1572
    %v1574 = vpop.f32.mrb[0].mxu0
    %v1575 = vadd.f32 %v1500, %v1574
    %v1576 = vpop.f32.mrb[0].mxu0
    %1577 = vdwg.mxu0
    %v1579 = vrot.slane %v1575, 4
    %v1581 = vadd.f32 %v534, %v1579
    %v1582 = vxor.u32 %v1581, 2147483648
    %v1583 = vmul.f32 %v1582, 1.442695
    %v1584 = vpow.pop %v1583
    %v1585 = vadd.f32 %v1584, 1.0
    %v1586 = vrcp.pop %v1585
    %v1587 = vmul.f32 1.0, %v1586
    %v1588 = vmul.f32 %v1587, 2.0
    %v1589 = vsub.f32 %v1588, 1.0
    %v1591 = vrot.slane %v1080, 6
    %v1593 = vmul.f32 %v1587, %v1591
    %1595 = vrot.lane.b32.xlu0 %v1589, 64
    %v1596 = vpop.permute.xlu0 %1595
    %v1598 = vmul.f32 %v1587, %v1596
    %1600 = vrot.lane.b32.xlu0 %v1598, 32
    %v1601 = vpop.permute.xlu0 %1600
    %v1603 = vadd.f32 %v1593, %v1601
    %v1604 = vtanh.pop %v1603
    %1606 = vrot.lane.b32.xlu0 %v1604, 64
    %v1607 = vpop.permute.xlu0 %1606
    %v1609 = vmul.f32 %v1587, %v1607
    %v1611 = vrot.slane %v1609, 4
    %1612 = vrot.lane.b32.xlu0 %v1611, 32
    %v1613 = vpop.permute.xlu0 %1612
    %v1614 = vsel %vm565, %v1613, 0
    %1616 = vmatprep.subr.mxu0 0.0
    %v1617 = vand.u32 %v28, 4294901760
    %1618 = vmatpush1.msra.mxu0 %v1617
    %1619 = vmatprep.subr.mxu0 0.0
    %v1620 = vand.u32 %v29, 4294901760
    %1621 = vmatpush1.msra.mxu0 %v1620
    %1622 = vmatprep.subr.mxu0 0.0
    %v1623 = vand.u32 %v30, 4294901760
    %1624 = vmatpush1.msra.mxu0 %v1623
    %1625 = vmatprep.subr.mxu0 0.0
    %v1626 = vand.u32 %v31, 4294901760
    %1627 = vmatpush1.msra.mxu0 %v1626
    %1628 = vmatprep.subr.mxu0 0.0
    %1629 = vmatpush1.msra.mxu0 0.0
    %1630 = vmatprep.subr.mxu0 0.0
    %1631 = vmatpush1.msra.mxu0 0.0
    %1632 = vmatprep.subr.mxu0 0.0
    %1633 = vmatpush1.msra.mxu0 0.0
    %1634 = vmatprep.subr.mxu0 0.0
    %1635 = vmatpush1.msra.mxu0 0.0
    %1636 = vmatprep.subr.mxu0 0.0
    %1637 = vmatpush1.msra.mxu0 0.0
    %1638 = vmatprep.subr.mxu0 0.0
    %1639 = vmatpush1.msra.mxu0 0.0
    %1640 = vmatprep.subr.mxu0 0.0
    %1641 = vmatpush1.msra.mxu0 0.0
    %1642 = vmatprep.subr.mxu0 0.0
    %1643 = vmatpush1.msra.mxu0 0.0
    %1644 = vmatprep.subr.mxu0 0.0
    %1645 = vmatpush1.msra.mxu0 0.0
    %1646 = vmatprep.subr.mxu0 0.0
    %1647 = vmatpush1.msra.mxu0 0.0
    %1648 = vmatprep.subr.mxu0 0.0
    %1649 = vmatpush1.msra.mxu0 0.0
    %1650 = vmatprep.subr.mxu0 0.0
    %1651 = vmatpush1.msra.mxu0 0.0
    %1652 = vmatprep.subr.mxu0 0.0
    %1653 = vmatpush1.msra.mxu0 0.0
    %1654 = vmatprep.subr.mxu0 0.0
    %1655 = vmatpush1.msra.mxu0 0.0
    %1656 = vmatprep.subr.mxu0 0.0
    %1657 = vmatpush1.msra.mxu0 0.0
    %1658 = vmatprep.subr.mxu0 0.0
    %1659 = vmatpush1.msra.mxu0 0.0
    %1660 = vmatprep.subr.mxu0 0.0
    %1661 = vmatpush1.msra.mxu0 0.0
    %1662 = vmatprep.subr.mxu0 0.0
    %1663 = vmatpush1.msra.mxu0 0.0
    %1664 = vmatprep.subr.mxu0 0.0
    %1665 = vmatpush1.msra.mxu0 0.0
    %1666 = vmatprep.subr.mxu0 0.0
    %1667 = vmatpush1.msra.mxu0 0.0
    %1668 = vmatprep.subr.mxu0 0.0
    %1669 = vmatpush1.msra.mxu0 0.0
    %1670 = vmatprep.subr.mxu0 0.0
    %1671 = vmatpush1.msra.mxu0 0.0
    %1672 = vmatprep.subr.mxu0 0.0
    %1673 = vmatpush1.msra.mxu0 0.0
    %1674 = vmatprep.subr.mxu0 0.0
    %1675 = vmatpush1.msra.mxu0 0.0
    %1676 = vmatprep.subr.mxu0 0.0
    %1677 = vmatpush1.msra.mxu0 0.0
    %1678 = vmatprep.subr.mxu0 0.0
    %1679 = vmatpush1.msra.mxu0 0.0
    %1680 = vmatprep.subr.mxu0 0.0
    %1681 = vmatpush1.msra.mxu0 0.0
    %1682 = vmatprep.subr.mxu0 0.0
    %1683 = vmatpush1.msra.mxu0 0.0
    %1684 = vmatprep.mubr.f32.mxu0 0.0
    %v1685 = vand.u32 %v1614, 4294901760
    %v1686 = vsub.f32 %v1614, %v1685
    %v1687 = vand.u32 %v1686, 4294901760
    %v1688 = vsub.f32 %v1686, %v1687
    %v1689 = vand.u32 %v1688, 4294901760
    %1690 = vmatmul.mubr.f32.gmra.mrb[0].mxu0 %v1689
    %v1691 = vpop.f32.mrb[0].mxu0
    %v1692 = vadd.f32 0.0, %v1691
    %v1693 = vpop.f32.mrb[0].mxu0
    %1694 = vdwg.mxu0
    %1695 = vmatprep.subr.mxu0 0.0
    %v1696 = vand.u32 %v28, 4294901760
    %v1697 = vsub.f32 %v28, %v1696
    %v1698 = vand.u32 %v1697, 4294901760
    %v1699 = vsub.f32 %v1697, %v1698
    %v1700 = vand.u32 %v1699, 4294901760
    %1701 = vmatpush1.msra.mxu0 %v1700
    %1702 = vmatprep.subr.mxu0 0.0
    %v1703 = vand.u32 %v29, 4294901760
    %v1704 = vsub.f32 %v29, %v1703
    %v1705 = vand.u32 %v1704, 4294901760
    %v1706 = vsub.f32 %v1704, %v1705
    %v1707 = vand.u32 %v1706, 4294901760
    %1708 = vmatpush1.msra.mxu0 %v1707
    %1709 = vmatprep.subr.mxu0 0.0
    %v1710 = vand.u32 %v30, 4294901760
    %v1711 = vsub.f32 %v30, %v1710
    %v1712 = vand.u32 %v1711, 4294901760
    %v1713 = vsub.f32 %v1711, %v1712
    %v1714 = vand.u32 %v1713, 4294901760
    %1715 = vmatpush1.msra.mxu0 %v1714
    %1716 = vmatprep.subr.mxu0 0.0
    %v1717 = vand.u32 %v31, 4294901760
    %v1718 = vsub.f32 %v31, %v1717
    %v1719 = vand.u32 %v1718, 4294901760
    %v1720 = vsub.f32 %v1718, %v1719
    %v1721 = vand.u32 %v1720, 4294901760
    %1722 = vmatpush1.msra.mxu0 %v1721
    %1723 = vmatprep.subr.mxu0 0.0
    %1724 = vmatpush1.msra.mxu0 0.0
    %1725 = vmatprep.subr.mxu0 0.0
    %1726 = vmatpush1.msra.mxu0 0.0
    %1727 = vmatprep.subr.mxu0 0.0
    %1728 = vmatpush1.msra.mxu0 0.0
    %1729 = vmatprep.subr.mxu0 0.0
    %1730 = vmatpush1.msra.mxu0 0.0
    %1731 = vmatprep.subr.mxu0 0.0
    %1732 = vmatpush1.msra.mxu0 0.0
    %1733 = vmatprep.subr.mxu0 0.0
    %1734 = vmatpush1.msra.mxu0 0.0
    %1735 = vmatprep.subr.mxu0 0.0
    %1736 = vmatpush1.msra.mxu0 0.0
    %1737 = vmatprep.subr.mxu0 0.0
    %1738 = vmatpush1.msra.mxu0 0.0
    %1739 = vmatprep.subr.mxu0 0.0
    %1740 = vmatpush1.msra.mxu0 0.0
    %1741 = vmatprep.subr.mxu0 0.0
    %1742 = vmatpush1.msra.mxu0 0.0
    %1743 = vmatprep.subr.mxu0 0.0
    %1744 = vmatpush1.msra.mxu0 0.0
    %1745 = vmatprep.subr.mxu0 0.0
    %1746 = vmatpush1.msra.mxu0 0.0
    %1747 = vmatprep.subr.mxu0 0.0
    %1748 = vmatpush1.msra.mxu0 0.0
    %1749 = vmatprep.subr.mxu0 0.0
    %1750 = vmatpush1.msra.mxu0 0.0
    %1751 = vmatprep.subr.mxu0 0.0
    %1752 = vmatpush1.msra.mxu0 0.0
    %1753 = vmatprep.subr.mxu0 0.0
    %1754 = vmatpush1.msra.mxu0 0.0
    %1755 = vmatprep.subr.mxu0 0.0
    %1756 = vmatpush1.msra.mxu0 0.0
    %1757 = vmatprep.subr.mxu0 0.0
    %1758 = vmatpush1.msra.mxu0 0.0
    %1759 = vmatprep.subr.mxu0 0.0
    %1760 = vmatpush1.msra.mxu0 0.0
    %1761 = vmatprep.subr.mxu0 0.0
    %1762 = vmatpush1.msra.mxu0 0.0
    %1763 = vmatprep.subr.mxu0 0.0
    %1764 = vmatpush1.msra.mxu0 0.0
    %1765 = vmatprep.subr.mxu0 0.0
    %1766 = vmatpush1.msra.mxu0 0.0
    %1767 = vmatprep.subr.mxu0 0.0
    %1768 = vmatpush1.msra.mxu0 0.0
    %1769 = vmatprep.subr.mxu0 0.0
    %1770 = vmatpush1.msra.mxu0 0.0
    %1771 = vmatprep.subr.mxu0 0.0
    %1772 = vmatpush1.msra.mxu0 0.0
    %1773 = vmatprep.subr.mxu0 0.0
    %1774 = vmatpush1.msra.mxu0 0.0
    %1775 = vmatprep.subr.mxu0 0.0
    %1776 = vmatpush1.msra.mxu0 0.0
    %1777 = vmatprep.subr.mxu0 0.0
    %1778 = vmatpush1.msra.mxu0 0.0
    %1779 = vmatprep.mubr.f32.mxu0 0.0
    %v1780 = vand.u32 %v1614, 4294901760
    %1781 = vmatmul.mubr.f32.gmra.mrb[0].mxu0 %v1780
    %v1782 = vpop.f32.mrb[0].mxu0
    %v1783 = vadd.f32 %v1692, %v1782
    %v1784 = vpop.f32.mrb[0].mxu0
    %1785 = vdwg.mxu0
    %1786 = vmatprep.subr.mxu0 0.0
    %v1787 = vand.u32 %v28, 4294901760
    %v1788 = vsub.f32 %v28, %v1787
    %1789 = vmatpush1.msra.mxu0 %v1788
    %1790 = vmatprep.subr.mxu0 0.0
    %v1791 = vand.u32 %v29, 4294901760
    %v1792 = vsub.f32 %v29, %v1791
    %1793 = vmatpush1.msra.mxu0 %v1792
    %1794 = vmatprep.subr.mxu0 0.0
    %v1795 = vand.u32 %v30, 4294901760
    %v1796 = vsub.f32 %v30, %v1795
    %1797 = vmatpush1.msra.mxu0 %v1796
    %1798 = vmatprep.subr.mxu0 0.0
    %v1799 = vand.u32 %v31, 4294901760
    %v1800 = vsub.f32 %v31, %v1799
    %1801 = vmatpush1.msra.mxu0 %v1800
    %1802 = vmatprep.subr.mxu0 0.0
    %1803 = vmatpush1.msra.mxu0 0.0
    %1804 = vmatprep.subr.mxu0 0.0
    %1805 = vmatpush1.msra.mxu0 0.0
    %1806 = vmatprep.subr.mxu0 0.0
    %1807 = vmatpush1.msra.mxu0 0.0
    %1808 = vmatprep.subr.mxu0 0.0
    %1809 = vmatpush1.msra.mxu0 0.0
    %1810 = vmatprep.subr.mxu0 0.0
    %1811 = vmatpush1.msra.mxu0 0.0
    %1812 = vmatprep.subr.mxu0 0.0
    %1813 = vmatpush1.msra.mxu0 0.0
    %1814 = vmatprep.subr.mxu0 0.0
    %1815 = vmatpush1.msra.mxu0 0.0
    %1816 = vmatprep.subr.mxu0 0.0
    %1817 = vmatpush1.msra.mxu0 0.0
    %1818 = vmatprep.subr.mxu0 0.0
    %1819 = vmatpush1.msra.mxu0 0.0
    %1820 = vmatprep.subr.mxu0 0.0
    %1821 = vmatpush1.msra.mxu0 0.0
    %1822 = vmatprep.subr.mxu0 0.0
    %1823 = vmatpush1.msra.mxu0 0.0
    %1824 = vmatprep.subr.mxu0 0.0
    %1825 = vmatpush1.msra.mxu0 0.0
    %1826 = vmatprep.subr.mxu0 0.0
    %1827 = vmatpush1.msra.mxu0 0.0
    %1828 = vmatprep.subr.mxu0 0.0
    %1829 = vmatpush1.msra.mxu0 0.0
    %1830 = vmatprep.subr.mxu0 0.0
    %1831 = vmatpush1.msra.mxu0 0.0
    %1832 = vmatprep.subr.mxu0 0.0
    %1833 = vmatpush1.msra.mxu0 0.0
    %1834 = vmatprep.subr.mxu0 0.0
    %1835 = vmatpush1.msra.mxu0 0.0
    %1836 = vmatprep.subr.mxu0 0.0
    %1837 = vmatpush1.msra.mxu0 0.0
    %1838 = vmatprep.subr.mxu0 0.0
    %1839 = vmatpush1.msra.mxu0 0.0
    %1840 = vmatprep.subr.mxu0 0.0
    %1841 = vmatpush1.msra.mxu0 0.0
    %1842 = vmatprep.subr.mxu0 0.0
    %1843 = vmatpush1.msra.mxu0 0.0
    %1844 = vmatprep.subr.mxu0 0.0
    %1845 = vmatpush1.msra.mxu0 0.0
    %1846 = vmatprep.subr.mxu0 0.0
    %1847 = vmatpush1.msra.mxu0 0.0
    %1848 = vmatprep.subr.mxu0 0.0
    %1849 = vmatpush1.msra.mxu0 0.0
    %1850 = vmatprep.subr.mxu0 0.0
    %1851 = vmatpush1.msra.mxu0 0.0
    %1852 = vmatprep.subr.mxu0 0.0
    %1853 = vmatpush1.msra.mxu0 0.0
    %1854 = vmatprep.subr.mxu0 0.0
    %1855 = vmatpush1.msra.mxu0 0.0
    %1856 = vmatprep.subr.mxu0 0.0
    %1857 = vmatpush1.msra.mxu0 0.0
    %1858 = vmatprep.mubr.f32.mxu0 0.0
    %v1859 = vand.u32 %v1614, 4294901760
    %v1860 = vsub.f32 %v1614, %v1859
    %1861 = vmatmul.mubr.f32.gmra.mrb[0].mxu0 %v1860
    %v1862 = vpop.f32.mrb[0].mxu0
    %v1863 = vadd.f32 %v1783, %v1862
    %v1864 = vpop.f32.mrb[0].mxu0
    %1865 = vdwg.mxu0
    %1866 = vmatprep.subr.mxu0 0.0
    %v1867 = vand.u32 %v28, 4294901760
    %1868 = vmatpush1.msra.mxu0 %v1867
    %1869 = vmatprep.subr.mxu0 0.0
    %v1870 = vand.u32 %v29, 4294901760
    %1871 = vmatpush1.msra.mxu0 %v1870
    %1872 = vmatprep.subr.mxu0 0.0
    %v1873 = vand.u32 %v30, 4294901760
    %1874 = vmatpush1.msra.mxu0 %v1873
    %1875 = vmatprep.subr.mxu0 0.0
    %v1876 = vand.u32 %v31, 4294901760
    %1877 = vmatpush1.msra.mxu0 %v1876
    %1878 = vmatprep.subr.mxu0 0.0
    %1879 = vmatpush1.msra.mxu0 0.0
    %1880 = vmatprep.subr.mxu0 0.0
    %1881 = vmatpush1.msra.mxu0 0.0
    %1882 = vmatprep.subr.mxu0 0.0
    %1883 = vmatpush1.msra.mxu0 0.0
    %1884 = vmatprep.subr.mxu0 0.0
    %1885 = vmatpush1.msra.mxu0 0.0
    %1886 = vmatprep.subr.mxu0 0.0
    %1887 = vmatpush1.msra.mxu0 0.0
    %1888 = vmatprep.subr.mxu0 0.0
    %1889 = vmatpush1.msra.mxu0 0.0
    %1890 = vmatprep.subr.mxu0 0.0
    %1891 = vmatpush1.msra.mxu0 0.0
    %1892 = vmatprep.subr.mxu0 0.0
    %1893 = vmatpush1.msra.mxu0 0.0
    %1894 = vmatprep.subr.mxu0 0.0
    %1895 = vmatpush1.msra.mxu0 0.0
    %1896 = vmatprep.subr.mxu0 0.0
    %1897 = vmatpush1.msra.mxu0 0.0
    %1898 = vmatprep.subr.mxu0 0.0
    %1899 = vmatpush1.msra.mxu0 0.0
    %1900 = vmatprep.subr.mxu0 0.0
    %1901 = vmatpush1.msra.mxu0 0.0
    %1902 = vmatprep.subr.mxu0 0.0
    %1903 = vmatpush1.msra.mxu0 0.0
    %1904 = vmatprep.subr.mxu0 0.0
    %1905 = vmatpush1.msra.mxu0 0.0
    %1906 = vmatprep.subr.mxu0 0.0
    %1907 = vmatpush1.msra.mxu0 0.0
    %1908 = vmatprep.subr.mxu0 0.0
    %1909 = vmatpush1.msra.mxu0 0.0
    %1910 = vmatprep.subr.mxu0 0.0
    %1911 = vmatpush1.msra.mxu0 0.0
    %1912 = vmatprep.subr.mxu0 0.0
    %1913 = vmatpush1.msra.mxu0 0.0
    %1914 = vmatprep.subr.mxu0 0.0
    %1915 = vmatpush1.msra.mxu0 0.0
    %1916 = vmatprep.subr.mxu0 0.0
    %1917 = vmatpush1.msra.mxu0 0.0
    %1918 = vmatprep.subr.mxu0 0.0
    %1919 = vmatpush1.msra.mxu0 0.0
    %1920 = vmatprep.subr.mxu0 0.0
    %1921 = vmatpush1.msra.mxu0 0.0
    %1922 = vmatprep.subr.mxu0 0.0
    %1923 = vmatpush1.msra.mxu0 0.0
    %1924 = vmatprep.subr.mxu0 0.0
    %1925 = vmatpush1.msra.mxu0 0.0
    %1926 = vmatprep.subr.mxu0 0.0
    %1927 = vmatpush1.msra.mxu0 0.0
    %1928 = vmatprep.subr.mxu0 0.0
    %1929 = vmatpush1.msra.mxu0 0.0
    %1930 = vmatprep.subr.mxu0 0.0
    %1931 = vmatpush1.msra.mxu0 0.0
    %1932 = vmatprep.subr.mxu0 0.0
    %1933 = vmatpush1.msra.mxu0 0.0
    %1934 = vmatprep.mubr.f32.mxu0 0.0
    %v1935 = vand.u32 %v1614, 4294901760
    %v1936 = vsub.f32 %v1614, %v1935
    %v1937 = vand.u32 %v1936, 4294901760
    %1938 = vmatmul.mubr.f32.gmra.mrb[0].mxu0 %v1937
    %v1939 = vpop.f32.mrb[0].mxu0
    %v1940 = vadd.f32 %v1863, %v1939
    %v1941 = vpop.f32.mrb[0].mxu0
    %1942 = vdwg.mxu0
    %1943 = vmatprep.subr.mxu0 0.0
    %v1944 = vand.u32 %v28, 4294901760
    %v1945 = vsub.f32 %v28, %v1944
    %v1946 = vand.u32 %v1945, 4294901760
    %1947 = vmatpush1.msra.mxu0 %v1946
    %1948 = vmatprep.subr.mxu0 0.0
    %v1949 = vand.u32 %v29, 4294901760
    %v1950 = vsub.f32 %v29, %v1949
    %v1951 = vand.u32 %v1950, 4294901760
    %1952 = vmatpush1.msra.mxu0 %v1951
    %1953 = vmatprep.subr.mxu0 0.0
    %v1954 = vand.u32 %v30, 4294901760
    %v1955 = vsub.f32 %v30, %v1954
    %v1956 = vand.u32 %v1955, 4294901760
    %1957 = vmatpush1.msra.mxu0 %v1956
    %1958 = vmatprep.subr.mxu0 0.0
    %v1959 = vand.u32 %v31, 4294901760
    %v1960 = vsub.f32 %v31, %v1959
    %v1961 = vand.u32 %v1960, 4294901760
    %1962 = vmatpush1.msra.mxu0 %v1961
    %1963 = vmatprep.subr.mxu0 0.0
    %1964 = vmatpush1.msra.mxu0 0.0
    %1965 = vmatprep.subr.mxu0 0.0
    %1966 = vmatpush1.msra.mxu0 0.0
    %1967 = vmatprep.subr.mxu0 0.0
    %1968 = vmatpush1.msra.mxu0 0.0
    %1969 = vmatprep.subr.mxu0 0.0
    %1970 = vmatpush1.msra.mxu0 0.0
    %1971 = vmatprep.subr.mxu0 0.0
    %1972 = vmatpush1.msra.mxu0 0.0
    %1973 = vmatprep.subr.mxu0 0.0
    %1974 = vmatpush1.msra.mxu0 0.0
    %1975 = vmatprep.subr.mxu0 0.0
    %1976 = vmatpush1.msra.mxu0 0.0
    %1977 = vmatprep.subr.mxu0 0.0
    %1978 = vmatpush1.msra.mxu0 0.0
    %1979 = vmatprep.subr.mxu0 0.0
    %1980 = vmatpush1.msra.mxu0 0.0
    %1981 = vmatprep.subr.mxu0 0.0
    %1982 = vmatpush1.msra.mxu0 0.0
    %1983 = vmatprep.subr.mxu0 0.0
    %1984 = vmatpush1.msra.mxu0 0.0
    %1985 = vmatprep.subr.mxu0 0.0
    %1986 = vmatpush1.msra.mxu0 0.0
    %1987 = vmatprep.subr.mxu0 0.0
    %1988 = vmatpush1.msra.mxu0 0.0
    %1989 = vmatprep.subr.mxu0 0.0
    %1990 = vmatpush1.msra.mxu0 0.0
    %1991 = vmatprep.subr.mxu0 0.0
    %1992 = vmatpush1.msra.mxu0 0.0
    %1993 = vmatprep.subr.mxu0 0.0
    %1994 = vmatpush1.msra.mxu0 0.0
    %1995 = vmatprep.subr.mxu0 0.0
    %1996 = vmatpush1.msra.mxu0 0.0
    %1997 = vmatprep.subr.mxu0 0.0
    %1998 = vmatpush1.msra.mxu0 0.0
    %1999 = vmatprep.subr.mxu0 0.0
    %2000 = vmatpush1.msra.mxu0 0.0
    %2001 = vmatprep.subr.mxu0 0.0
    %2002 = vmatpush1.msra.mxu0 0.0
    %2003 = vmatprep.subr.mxu0 0.0
    %2004 = vmatpush1.msra.mxu0 0.0
    %2005 = vmatprep.subr.mxu0 0.0
    %2006 = vmatpush1.msra.mxu0 0.0
    %2007 = vmatprep.subr.mxu0 0.0
    %2008 = vmatpush1.msra.mxu0 0.0
    %2009 = vmatprep.subr.mxu0 0.0
    %2010 = vmatpush1.msra.mxu0 0.0
    %2011 = vmatprep.subr.mxu0 0.0
    %2012 = vmatpush1.msra.mxu0 0.0
    %2013 = vmatprep.subr.mxu0 0.0
    %2014 = vmatpush1.msra.mxu0 0.0
    %2015 = vmatprep.subr.mxu0 0.0
    %2016 = vmatpush1.msra.mxu0 0.0
    %2017 = vmatprep.subr.mxu0 0.0
    %2018 = vmatpush1.msra.mxu0 0.0
    %2019 = vmatprep.mubr.f32.mxu0 0.0
    %v2020 = vand.u32 %v1614, 4294901760
    %2021 = vmatmul.mubr.f32.gmra.mrb[0].mxu0 %v2020
    %v2022 = vpop.f32.mrb[0].mxu0
    %v2023 = vadd.f32 %v1940, %v2022
    %v2024 = vpop.f32.mrb[0].mxu0
    %2025 = vdwg.mxu0
    %2026 = vmatprep.subr.mxu0 0.0
    %v2027 = vand.u32 %v28, 4294901760
    %2028 = vmatpush1.msra.mxu0 %v2027
    %2029 = vmatprep.subr.mxu0 0.0
    %v2030 = vand.u32 %v29, 4294901760
    %2031 = vmatpush1.msra.mxu0 %v2030
    %2032 = vmatprep.subr.mxu0 0.0
    %v2033 = vand.u32 %v30, 4294901760
    %2034 = vmatpush1.msra.mxu0 %v2033
    %2035 = vmatprep.subr.mxu0 0.0
    %v2036 = vand.u32 %v31, 4294901760
    %2037 = vmatpush1.msra.mxu0 %v2036
    %2038 = vmatprep.subr.mxu0 0.0
    %2039 = vmatpush1.msra.mxu0 0.0
    %2040 = vmatprep.subr.mxu0 0.0
    %2041 = vmatpush1.msra.mxu0 0.0
    %2042 = vmatprep.subr.mxu0 0.0
    %2043 = vmatpush1.msra.mxu0 0.0
    %2044 = vmatprep.subr.mxu0 0.0
    %2045 = vmatpush1.msra.mxu0 0.0
    %2046 = vmatprep.subr.mxu0 0.0
    %2047 = vmatpush1.msra.mxu0 0.0
    %2048 = vmatprep.subr.mxu0 0.0
    %2049 = vmatpush1.msra.mxu0 0.0
    %2050 = vmatprep.subr.mxu0 0.0
    %2051 = vmatpush1.msra.mxu0 0.0
    %2052 = vmatprep.subr.mxu0 0.0
    %2053 = vmatpush1.msra.mxu0 0.0
    %2054 = vmatprep.subr.mxu0 0.0
    %2055 = vmatpush1.msra.mxu0 0.0
    %2056 = vmatprep.subr.mxu0 0.0
    %2057 = vmatpush1.msra.mxu0 0.0
    %2058 = vmatprep.subr.mxu0 0.0
    %2059 = vmatpush1.msra.mxu0 0.0
    %2060 = vmatprep.subr.mxu0 0.0
    %2061 = vmatpush1.msra.mxu0 0.0
    %2062 = vmatprep.subr.mxu0 0.0
    %2063 = vmatpush1.msra.mxu0 0.0
    %2064 = vmatprep.subr.mxu0 0.0
    %2065 = vmatpush1.msra.mxu0 0.0
    %2066 = vmatprep.subr.mxu0 0.0
    %2067 = vmatpush1.msra.mxu0 0.0
    %2068 = vmatprep.subr.mxu0 0.0
    %2069 = vmatpush1.msra.mxu0 0.0
    %2070 = vmatprep.subr.mxu0 0.0
    %2071 = vmatpush1.msra.mxu0 0.0
    %2072 = vmatprep.subr.mxu0 0.0
    %2073 = vmatpush1.msra.mxu0 0.0
    %2074 = vmatprep.subr.mxu0 0.0
    %2075 = vmatpush1.msra.mxu0 0.0
    %2076 = vmatprep.subr.mxu0 0.0
    %2077 = vmatpush1.msra.mxu0 0.0
    %2078 = vmatprep.subr.mxu0 0.0
    %2079 = vmatpush1.msra.mxu0 0.0
    %2080 = vmatprep.subr.mxu0 0.0
    %2081 = vmatpush1.msra.mxu0 0.0
    %2082 = vmatprep.subr.mxu0 0.0
    %2083 = vmatpush1.msra.mxu0 0.0
    %2084 = vmatprep.subr.mxu0 0.0
    %2085 = vmatpush1.msra.mxu0 0.0
    %2086 = vmatprep.subr.mxu0 0.0
    %2087 = vmatpush1.msra.mxu0 0.0
    %2088 = vmatprep.subr.mxu0 0.0
    %2089 = vmatpush1.msra.mxu0 0.0
    %2090 = vmatprep.subr.mxu0 0.0
    %2091 = vmatpush1.msra.mxu0 0.0
    %2092 = vmatprep.subr.mxu0 0.0
    %2093 = vmatpush1.msra.mxu0 0.0
    %2094 = vmatprep.mubr.f32.mxu0 0.0
    %v2095 = vand.u32 %v1614, 4294901760
    %2096 = vmatmul.mubr.f32.gmra.mrb[0].mxu0 %v2095
    %v2097 = vpop.f32.mrb[0].mxu0
    %v2098 = vadd.f32 %v2023, %v2097
    %v2099 = vpop.f32.mrb[0].mxu0
    %2100 = vdwg.mxu0
    %v2102 = vrot.slane %v2098, 2
    %v2104 = vadd.f32 %v534, %v2102
    %v2105 = vxor.u32 %v2104, 2147483648
    %v2106 = vmul.f32 %v2105, 1.442695
    %v2107 = vpow.pop %v2106
    %v2108 = vadd.f32 %v2107, 1.0
    %v2109 = vrcp.pop %v2108
    %v2110 = vmul.f32 1.0, %v2109
    %v2111 = vmul.f32 %v2110, 2.0
    %v2112 = vsub.f32 %v2111, 1.0
    %v2114 = vrot.slane %v1603, 6
    %v2116 = vmul.f32 %v2110, %v2114
    %2118 = vrot.lane.b32.xlu0 %v2112, 64
    %v2119 = vpop.permute.xlu0 %2118
    %v2121 = vmul.f32 %v2110, %v2119
    %2123 = vrot.lane.b32.xlu0 %v2121, 32
    %v2124 = vpop.permute.xlu0 %2123
    %v2126 = vadd.f32 %v2116, %v2124
    %v2127 = vtanh.pop %v2126
    %2129 = vrot.lane.b32.xlu0 %v2127, 64
    %v2130 = vpop.permute.xlu0 %2129
    %v2132 = vmul.f32 %v2110, %v2130
    %v2134 = vrot.slane %v2132, 6
    %2135 = vrot.lane.b32.xlu0 %v2134, 32
    %v2136 = vpop.permute.xlu0 %2135
    %v2137 = vsel %vm565, %v2136, 0
    %2139 = vmatprep.subr.mxu0 0.0
    %v2140 = vand.u32 %v28, 4294901760
    %2141 = vmatpush1.msra.mxu0 %v2140
    %2142 = vmatprep.subr.mxu0 0.0
    %v2143 = vand.u32 %v29, 4294901760
    %2144 = vmatpush1.msra.mxu0 %v2143
    %2145 = vmatprep.subr.mxu0 0.0
    %v2146 = vand.u32 %v30, 4294901760
    %2147 = vmatpush1.msra.mxu0 %v2146
    %2148 = vmatprep.subr.mxu0 0.0
    %v2149 = vand.u32 %v31, 4294901760
    %2150 = vmatpush1.msra.mxu0 %v2149
    %2151 = vmatprep.subr.mxu0 0.0
    %2152 = vmatpush1.msra.mxu0 0.0
    %2153 = vmatprep.subr.mxu0 0.0
    %2154 = vmatpush1.msra.mxu0 0.0
    %2155 = vmatprep.subr.mxu0 0.0
    %2156 = vmatpush1.msra.mxu0 0.0
    %2157 = vmatprep.subr.mxu0 0.0
    %2158 = vmatpush1.msra.mxu0 0.0
    %2159 = vmatprep.subr.mxu0 0.0
    %2160 = vmatpush1.msra.mxu0 0.0
    %2161 = vmatprep.subr.mxu0 0.0
    %2162 = vmatpush1.msra.mxu0 0.0
    %2163 = vmatprep.subr.mxu0 0.0
    %2164 = vmatpush1.msra.mxu0 0.0
    %2165 = vmatprep.subr.mxu0 0.0
    %2166 = vmatpush1.msra.mxu0 0.0
    %2167 = vmatprep.subr.mxu0 0.0
    %2168 = vmatpush1.msra.mxu0 0.0
    %2169 = vmatprep.subr.mxu0 0.0
    %2170 = vmatpush1.msra.mxu0 0.0
    %2171 = vmatprep.subr.mxu0 0.0
    %2172 = vmatpush1.msra.mxu0 0.0
    %2173 = vmatprep.subr.mxu0 0.0
    %2174 = vmatpush1.msra.mxu0 0.0
    %2175 = vmatprep.subr.mxu0 0.0
    %2176 = vmatpush1.msra.mxu0 0.0
    %2177 = vmatprep.subr.mxu0 0.0
    %2178 = vmatpush1.msra.mxu0 0.0
    %2179 = vmatprep.subr.mxu0 0.0
    %2180 = vmatpush1.msra.mxu0 0.0
    %2181 = vmatprep.subr.mxu0 0.0
    %2182 = vmatpush1.msra.mxu0 0.0
    %2183 = vmatprep.subr.mxu0 0.0
    %2184 = vmatpush1.msra.mxu0 0.0
    %2185 = vmatprep.subr.mxu0 0.0
    %2186 = vmatpush1.msra.mxu0 0.0
    %2187 = vmatprep.subr.mxu0 0.0
    %2188 = vmatpush1.msra.mxu0 0.0
    %2189 = vmatprep.subr.mxu0 0.0
    %2190 = vmatpush1.msra.mxu0 0.0
    %2191 = vmatprep.subr.mxu0 0.0
    %2192 = vmatpush1.msra.mxu0 0.0
    %2193 = vmatprep.subr.mxu0 0.0
    %2194 = vmatpush1.msra.mxu0 0.0
    %2195 = vmatprep.subr.mxu0 0.0
    %2196 = vmatpush1.msra.mxu0 0.0
    %2197 = vmatprep.subr.mxu0 0.0
    %2198 = vmatpush1.msra.mxu0 0.0
    %2199 = vmatprep.subr.mxu0 0.0
    %2200 = vmatpush1.msra.mxu0 0.0
    %2201 = vmatprep.subr.mxu0 0.0
    %2202 = vmatpush1.msra.mxu0 0.0
    %2203 = vmatprep.subr.mxu0 0.0
    %2204 = vmatpush1.msra.mxu0 0.0
    %2205 = vmatprep.subr.mxu0 0.0
    %2206 = vmatpush1.msra.mxu0 0.0
    %2207 = vmatprep.mubr.f32.mxu0 0.0
    %v2208 = vand.u32 %v2137, 4294901760
    %v2209 = vsub.f32 %v2137, %v2208
    %v2210 = vand.u32 %v2209, 4294901760
    %v2211 = vsub.f32 %v2209, %v2210
    %v2212 = vand.u32 %v2211, 4294901760
    %2213 = vmatmul.mubr.f32.gmra.mrb[0].mxu0 %v2212
    %v2214 = vpop.f32.mrb[0].mxu0
    %v2215 = vadd.f32 0.0, %v2214
    %v2216 = vpop.f32.mrb[0].mxu0
    %2217 = vdwg.mxu0
    %2218 = vmatprep.subr.mxu0 0.0
    %v2219 = vand.u32 %v28, 4294901760
    %v2220 = vsub.f32 %v28, %v2219
    %v2221 = vand.u32 %v2220, 4294901760
    %v2222 = vsub.f32 %v2220, %v2221
    %v2223 = vand.u32 %v2222, 4294901760
    %2224 = vmatpush1.msra.mxu0 %v2223
    %2225 = vmatprep.subr.mxu0 0.0
    %v2226 = vand.u32 %v29, 4294901760
    %v2227 = vsub.f32 %v29, %v2226
    %v2228 = vand.u32 %v2227, 4294901760
    %v2229 = vsub.f32 %v2227, %v2228
    %v2230 = vand.u32 %v2229, 4294901760
    %2231 = vmatpush1.msra.mxu0 %v2230
    %2232 = vmatprep.subr.mxu0 0.0
    %v2233 = vand.u32 %v30, 4294901760
    %v2234 = vsub.f32 %v30, %v2233
    %v2235 = vand.u32 %v2234, 4294901760
    %v2236 = vsub.f32 %v2234, %v2235
    %v2237 = vand.u32 %v2236, 4294901760
    %2238 = vmatpush1.msra.mxu0 %v2237
    %2239 = vmatprep.subr.mxu0 0.0
    %v2240 = vand.u32 %v31, 4294901760
    %v2241 = vsub.f32 %v31, %v2240
    %v2242 = vand.u32 %v2241, 4294901760
    %v2243 = vsub.f32 %v2241, %v2242
    %v2244 = vand.u32 %v2243, 4294901760
    %2245 = vmatpush1.msra.mxu0 %v2244
    %2246 = vmatprep.subr.mxu0 0.0
    %2247 = vmatpush1.msra.mxu0 0.0
    %2248 = vmatprep.subr.mxu0 0.0
    %2249 = vmatpush1.msra.mxu0 0.0
    %2250 = vmatprep.subr.mxu0 0.0
    %2251 = vmatpush1.msra.mxu0 0.0
    %2252 = vmatprep.subr.mxu0 0.0
    %2253 = vmatpush1.msra.mxu0 0.0
    %2254 = vmatprep.subr.mxu0 0.0
    %2255 = vmatpush1.msra.mxu0 0.0
    %2256 = vmatprep.subr.mxu0 0.0
    %2257 = vmatpush1.msra.mxu0 0.0
    %2258 = vmatprep.subr.mxu0 0.0
    %2259 = vmatpush1.msra.mxu0 0.0
    %2260 = vmatprep.subr.mxu0 0.0
    %2261 = vmatpush1.msra.mxu0 0.0
    %2262 = vmatprep.subr.mxu0 0.0
    %2263 = vmatpush1.msra.mxu0 0.0
    %2264 = vmatprep.subr.mxu0 0.0
    %2265 = vmatpush1.msra.mxu0 0.0
    %2266 = vmatprep.subr.mxu0 0.0
    %2267 = vmatpush1.msra.mxu0 0.0
    %2268 = vmatprep.subr.mxu0 0.0
    %2269 = vmatpush1.msra.mxu0 0.0
    %2270 = vmatprep.subr.mxu0 0.0
    %2271 = vmatpush1.msra.mxu0 0.0
    %2272 = vmatprep.subr.mxu0 0.0
    %2273 = vmatpush1.msra.mxu0 0.0
    %2274 = vmatprep.subr.mxu0 0.0
    %2275 = vmatpush1.msra.mxu0 0.0
    %2276 = vmatprep.subr.mxu0 0.0
    %2277 = vmatpush1.msra.mxu0 0.0
    %2278 = vmatprep.subr.mxu0 0.0
    %2279 = vmatpush1.msra.mxu0 0.0
    %2280 = vmatprep.subr.mxu0 0.0
    %2281 = vmatpush1.msra.mxu0 0.0
    %2282 = vmatprep.subr.mxu0 0.0
    %2283 = vmatpush1.msra.mxu0 0.0
    %2284 = vmatprep.subr.mxu0 0.0
    %2285 = vmatpush1.msra.mxu0 0.0
    %2286 = vmatprep.subr.mxu0 0.0
    %2287 = vmatpush1.msra.mxu0 0.0
    %2288 = vmatprep.subr.mxu0 0.0
    %2289 = vmatpush1.msra.mxu0 0.0
    %2290 = vmatprep.subr.mxu0 0.0
    %2291 = vmatpush1.msra.mxu0 0.0
    %2292 = vmatprep.subr.mxu0 0.0
    %2293 = vmatpush1.msra.mxu0 0.0
    %2294 = vmatprep.subr.mxu0 0.0
    %2295 = vmatpush1.msra.mxu0 0.0
    %2296 = vmatprep.subr.mxu0 0.0
    %2297 = vmatpush1.msra.mxu0 0.0
    %2298 = vmatprep.subr.mxu0 0.0
    %2299 = vmatpush1.msra.mxu0 0.0
    %2300 = vmatprep.subr.mxu0 0.0
    %2301 = vmatpush1.msra.mxu0 0.0
    %2302 = vmatprep.mubr.f32.mxu0 0.0
    %v2303 = vand.u32 %v2137, 4294901760
    %2304 = vmatmul.mubr.f32.gmra.mrb[0].mxu0 %v2303
    %v2305 = vpop.f32.mrb[0].mxu0
    %v2306 = vadd.f32 %v2215, %v2305
    %v2307 = vpop.f32.mrb[0].mxu0
    %2308 = vdwg.mxu0
    %2309 = vmatprep.subr.mxu0 0.0
    %v2310 = vand.u32 %v28, 4294901760
    %v2311 = vsub.f32 %v28, %v2310
    %2312 = vmatpush1.msra.mxu0 %v2311
    %2313 = vmatprep.subr.mxu0 0.0
    %v2314 = vand.u32 %v29, 4294901760
    %v2315 = vsub.f32 %v29, %v2314
    %2316 = vmatpush1.msra.mxu0 %v2315
    %2317 = vmatprep.subr.mxu0 0.0
    %v2318 = vand.u32 %v30, 4294901760
    %v2319 = vsub.f32 %v30, %v2318
    %2320 = vmatpush1.msra.mxu0 %v2319
    %2321 = vmatprep.subr.mxu0 0.0
    %v2322 = vand.u32 %v31, 4294901760
    %v2323 = vsub.f32 %v31, %v2322
    %2324 = vmatpush1.msra.mxu0 %v2323
    %2325 = vmatprep.subr.mxu0 0.0
    %2326 = vmatpush1.msra.mxu0 0.0
    %2327 = vmatprep.subr.mxu0 0.0
    %2328 = vmatpush1.msra.mxu0 0.0
    %2329 = vmatprep.subr.mxu0 0.0
    %2330 = vmatpush1.msra.mxu0 0.0
    %2331 = vmatprep.subr.mxu0 0.0
    %2332 = vmatpush1.msra.mxu0 0.0
    %2333 = vmatprep.subr.mxu0 0.0
    %2334 = vmatpush1.msra.mxu0 0.0
    %2335 = vmatprep.subr.mxu0 0.0
    %2336 = vmatpush1.msra.mxu0 0.0
    %2337 = vmatprep.subr.mxu0 0.0
    %2338 = vmatpush1.msra.mxu0 0.0
    %2339 = vmatprep.subr.mxu0 0.0
    %2340 = vmatpush1.msra.mxu0 0.0
    %2341 = vmatprep.subr.mxu0 0.0
    %2342 = vmatpush1.msra.mxu0 0.0
    %2343 = vmatprep.subr.mxu0 0.0
    %2344 = vmatpush1.msra.mxu0 0.0
    %2345 = vmatprep.subr.mxu0 0.0
    %2346 = vmatpush1.msra.mxu0 0.0
    %2347 = vmatprep.subr.mxu0 0.0
    %2348 = vmatpush1.msra.mxu0 0.0
    %2349 = vmatprep.subr.mxu0 0.0
    %2350 = vmatpush1.msra.mxu0 0.0
    %2351 = vmatprep.subr.mxu0 0.0
    %2352 = vmatpush1.msra.mxu0 0.0
    %2353 = vmatprep.subr.mxu0 0.0
    %2354 = vmatpush1.msra.mxu0 0.0
    %2355 = vmatprep.subr.mxu0 0.0
    %2356 = vmatpush1.msra.mxu0 0.0
    %2357 = vmatprep.subr.mxu0 0.0
    %2358 = vmatpush1.msra.mxu0 0.0
    %2359 = vmatprep.subr.mxu0 0.0
    %2360 = vmatpush1.msra.mxu0 0.0
    %2361 = vmatprep.subr.mxu0 0.0
    %2362 = vmatpush1.msra.mxu0 0.0
    %2363 = vmatprep.subr.mxu0 0.0
    %2364 = vmatpush1.msra.mxu0 0.0
    %2365 = vmatprep.subr.mxu0 0.0
    %2366 = vmatpush1.msra.mxu0 0.0
    %2367 = vmatprep.subr.mxu0 0.0
    %2368 = vmatpush1.msra.mxu0 0.0
    %2369 = vmatprep.subr.mxu0 0.0
    %2370 = vmatpush1.msra.mxu0 0.0
    %2371 = vmatprep.subr.mxu0 0.0
    %2372 = vmatpush1.msra.mxu0 0.0
    %2373 = vmatprep.subr.mxu0 0.0
    %2374 = vmatpush1.msra.mxu0 0.0
    %2375 = vmatprep.subr.mxu0 0.0
    %2376 = vmatpush1.msra.mxu0 0.0
    %2377 = vmatprep.subr.mxu0 0.0
    %2378 = vmatpush1.msra.mxu0 0.0
    %2379 = vmatprep.subr.mxu0 0.0
    %2380 = vmatpush1.msra.mxu0 0.0
    %2381 = vmatprep.mubr.f32.mxu0 0.0
    %v2382 = vand.u32 %v2137, 4294901760
    %v2383 = vsub.f32 %v2137, %v2382
    %2384 = vmatmul.mubr.f32.gmra.mrb[0].mxu0 %v2383
    %v2385 = vpop.f32.mrb[0].mxu0
    %v2386 = vadd.f32 %v2306, %v2385
    %v2387 = vpop.f32.mrb[0].mxu0
    %2388 = vdwg.mxu0
    %2389 = vmatprep.subr.mxu0 0.0
    %v2390 = vand.u32 %v28, 4294901760
    %2391 = vmatpush1.msra.mxu0 %v2390
    %2392 = vmatprep.subr.mxu0 0.0
    %v2393 = vand.u32 %v29, 4294901760
    %2394 = vmatpush1.msra.mxu0 %v2393
    %2395 = vmatprep.subr.mxu0 0.0
    %v2396 = vand.u32 %v30, 4294901760
    %2397 = vmatpush1.msra.mxu0 %v2396
    %2398 = vmatprep.subr.mxu0 0.0
    %v2399 = vand.u32 %v31, 4294901760
    %2400 = vmatpush1.msra.mxu0 %v2399
    %2401 = vmatprep.subr.mxu0 0.0
    %2402 = vmatpush1.msra.mxu0 0.0
    %2403 = vmatprep.subr.mxu0 0.0
    %2404 = vmatpush1.msra.mxu0 0.0
    %2405 = vmatprep.subr.mxu0 0.0
    %2406 = vmatpush1.msra.mxu0 0.0
    %2407 = vmatprep.subr.mxu0 0.0
    %2408 = vmatpush1.msra.mxu0 0.0
    %2409 = vmatprep.subr.mxu0 0.0
    %2410 = vmatpush1.msra.mxu0 0.0
    %2411 = vmatprep.subr.mxu0 0.0
    %2412 = vmatpush1.msra.mxu0 0.0
    %2413 = vmatprep.subr.mxu0 0.0
    %2414 = vmatpush1.msra.mxu0 0.0
    %2415 = vmatprep.subr.mxu0 0.0
    %2416 = vmatpush1.msra.mxu0 0.0
    %2417 = vmatprep.subr.mxu0 0.0
    %2418 = vmatpush1.msra.mxu0 0.0
    %2419 = vmatprep.subr.mxu0 0.0
    %2420 = vmatpush1.msra.mxu0 0.0
    %2421 = vmatprep.subr.mxu0 0.0
    %2422 = vmatpush1.msra.mxu0 0.0
    %2423 = vmatprep.subr.mxu0 0.0
    %2424 = vmatpush1.msra.mxu0 0.0
    %2425 = vmatprep.subr.mxu0 0.0
    %2426 = vmatpush1.msra.mxu0 0.0
    %2427 = vmatprep.subr.mxu0 0.0
    %2428 = vmatpush1.msra.mxu0 0.0
    %2429 = vmatprep.subr.mxu0 0.0
    %2430 = vmatpush1.msra.mxu0 0.0
    %2431 = vmatprep.subr.mxu0 0.0
    %2432 = vmatpush1.msra.mxu0 0.0
    %2433 = vmatprep.subr.mxu0 0.0
    %2434 = vmatpush1.msra.mxu0 0.0
    %2435 = vmatprep.subr.mxu0 0.0
    %2436 = vmatpush1.msra.mxu0 0.0
    %2437 = vmatprep.subr.mxu0 0.0
    %2438 = vmatpush1.msra.mxu0 0.0
    %2439 = vmatprep.subr.mxu0 0.0
    %2440 = vmatpush1.msra.mxu0 0.0
    %2441 = vmatprep.subr.mxu0 0.0
    %2442 = vmatpush1.msra.mxu0 0.0
    %2443 = vmatprep.subr.mxu0 0.0
    %2444 = vmatpush1.msra.mxu0 0.0
    %2445 = vmatprep.subr.mxu0 0.0
    %2446 = vmatpush1.msra.mxu0 0.0
    %2447 = vmatprep.subr.mxu0 0.0
    %2448 = vmatpush1.msra.mxu0 0.0
    %2449 = vmatprep.subr.mxu0 0.0
    %2450 = vmatpush1.msra.mxu0 0.0
    %2451 = vmatprep.subr.mxu0 0.0
    %2452 = vmatpush1.msra.mxu0 0.0
    %2453 = vmatprep.subr.mxu0 0.0
    %2454 = vmatpush1.msra.mxu0 0.0
    %2455 = vmatprep.subr.mxu0 0.0
    %2456 = vmatpush1.msra.mxu0 0.0
    %2457 = vmatprep.mubr.f32.mxu0 0.0
    %v2458 = vand.u32 %v2137, 4294901760
    %v2459 = vsub.f32 %v2137, %v2458
    %v2460 = vand.u32 %v2459, 4294901760
    %2461 = vmatmul.mubr.f32.gmra.mrb[0].mxu0 %v2460
    %v2462 = vpop.f32.mrb[0].mxu0
    %v2463 = vadd.f32 %v2386, %v2462
    %v2464 = vpop.f32.mrb[0].mxu0
    %2465 = vdwg.mxu0
    %2466 = vmatprep.subr.mxu0 0.0
    %v2467 = vand.u32 %v28, 4294901760
    %v2468 = vsub.f32 %v28, %v2467
    %v2469 = vand.u32 %v2468, 4294901760
    %2470 = vmatpush1.msra.mxu0 %v2469
    %2471 = vmatprep.subr.mxu0 0.0
    %v2472 = vand.u32 %v29, 4294901760
    %v2473 = vsub.f32 %v29, %v2472
    %v2474 = vand.u32 %v2473, 4294901760
    %2475 = vmatpush1.msra.mxu0 %v2474
    %2476 = vmatprep.subr.mxu0 0.0
    %v2477 = vand.u32 %v30, 4294901760
    %v2478 = vsub.f32 %v30, %v2477
    %v2479 = vand.u32 %v2478, 4294901760
    %2480 = vmatpush1.msra.mxu0 %v2479
    %2481 = vmatprep.subr.mxu0 0.0
    %v2482 = vand.u32 %v31, 4294901760
    %v2483 = vsub.f32 %v31, %v2482
    %v2484 = vand.u32 %v2483, 4294901760
    %2485 = vmatpush1.msra.mxu0 %v2484
    %2486 = vmatprep.subr.mxu0 0.0
    %2487 = vmatpush1.msra.mxu0 0.0
    %2488 = vmatprep.subr.mxu0 0.0
    %2489 = vmatpush1.msra.mxu0 0.0
    %2490 = vmatprep.subr.mxu0 0.0
    %2491 = vmatpush1.msra.mxu0 0.0
    %2492 = vmatprep.subr.mxu0 0.0
    %2493 = vmatpush1.msra.mxu0 0.0
    %2494 = vmatprep.subr.mxu0 0.0
    %2495 = vmatpush1.msra.mxu0 0.0
    %2496 = vmatprep.subr.mxu0 0.0
    %2497 = vmatpush1.msra.mxu0 0.0
    %2498 = vmatprep.subr.mxu0 0.0
    %2499 = vmatpush1.msra.mxu0 0.0
    %2500 = vmatprep.subr.mxu0 0.0
    %2501 = vmatpush1.msra.mxu0 0.0
    %2502 = vmatprep.subr.mxu0 0.0
    %2503 = vmatpush1.msra.mxu0 0.0
    %2504 = vmatprep.subr.mxu0 0.0
    %2505 = vmatpush1.msra.mxu0 0.0
    %2506 = vmatprep.subr.mxu0 0.0
    %2507 = vmatpush1.msra.mxu0 0.0
    %2508 = vmatprep.subr.mxu0 0.0
    %2509 = vmatpush1.msra.mxu0 0.0
    %2510 = vmatprep.subr.mxu0 0.0
    %2511 = vmatpush1.msra.mxu0 0.0
    %2512 = vmatprep.subr.mxu0 0.0
    %2513 = vmatpush1.msra.mxu0 0.0
    %2514 = vmatprep.subr.mxu0 0.0
    %2515 = vmatpush1.msra.mxu0 0.0
    %2516 = vmatprep.subr.mxu0 0.0
    %2517 = vmatpush1.msra.mxu0 0.0
    %2518 = vmatprep.subr.mxu0 0.0
    %2519 = vmatpush1.msra.mxu0 0.0
    %2520 = vmatprep.subr.mxu0 0.0
    %2521 = vmatpush1.msra.mxu0 0.0
    %2522 = vmatprep.subr.mxu0 0.0
    %2523 = vmatpush1.msra.mxu0 0.0
    %2524 = vmatprep.subr.mxu0 0.0
    %2525 = vmatpush1.msra.mxu0 0.0
    %2526 = vmatprep.subr.mxu0 0.0
    %2527 = vmatpush1.msra.mxu0 0.0
    %2528 = vmatprep.subr.mxu0 0.0
    %2529 = vmatpush1.msra.mxu0 0.0
    %2530 = vmatprep.subr.mxu0 0.0
    %2531 = vmatpush1.msra.mxu0 0.0
    %2532 = vmatprep.subr.mxu0 0.0
    %2533 = vmatpush1.msra.mxu0 0.0
    %2534 = vmatprep.subr.mxu0 0.0
    %2535 = vmatpush1.msra.mxu0 0.0
    %2536 = vmatprep.subr.mxu0 0.0
    %2537 = vmatpush1.msra.mxu0 0.0
    %2538 = vmatprep.subr.mxu0 0.0
    %2539 = vmatpush1.msra.mxu0 0.0
    %2540 = vmatprep.subr.mxu0 0.0
    %2541 = vmatpush1.msra.mxu0 0.0
    %2542 = vmatprep.mubr.f32.mxu0 0.0
    %v2543 = vand.u32 %v2137, 4294901760
    %2544 = vmatmul.mubr.f32.gmra.mrb[0].mxu0 %v2543
    %v2545 = vpop.f32.mrb[0].mxu0
    %v2546 = vadd.f32 %v2463, %v2545
    %v2547 = vpop.f32.mrb[0].mxu0
    %2548 = vdwg.mxu0
    %2549 = vmatprep.subr.mxu0 0.0
    %v2550 = vand.u32 %v28, 4294901760
    %2551 = vmatpush1.msra.mxu0 %v2550
    %2552 = vmatprep.subr.mxu0 0.0
    %v2553 = vand.u32 %v29, 4294901760
    %2554 = vmatpush1.msra.mxu0 %v2553
    %2555 = vmatprep.subr.mxu0 0.0
    %v2556 = vand.u32 %v30, 4294901760
    %2557 = vmatpush1.msra.mxu0 %v2556
    %2558 = vmatprep.subr.mxu0 0.0
    %v2559 = vand.u32 %v31, 4294901760
    %2560 = vmatpush1.msra.mxu0 %v2559
    %2561 = vmatprep.subr.mxu0 0.0
    %2562 = vmatpush1.msra.mxu0 0.0
    %2563 = vmatprep.subr.mxu0 0.0
    %2564 = vmatpush1.msra.mxu0 0.0
    %2565 = vmatprep.subr.mxu0 0.0
    %2566 = vmatpush1.msra.mxu0 0.0
    %2567 = vmatprep.subr.mxu0 0.0
    %2568 = vmatpush1.msra.mxu0 0.0
    %2569 = vmatprep.subr.mxu0 0.0
    %2570 = vmatpush1.msra.mxu0 0.0
    %2571 = vmatprep.subr.mxu0 0.0
    %2572 = vmatpush1.msra.mxu0 0.0
    %2573 = vmatprep.subr.mxu0 0.0
    %2574 = vmatpush1.msra.mxu0 0.0
    %2575 = vmatprep.subr.mxu0 0.0
    %2576 = vmatpush1.msra.mxu0 0.0
    %2577 = vmatprep.subr.mxu0 0.0
    %2578 = vmatpush1.msra.mxu0 0.0
    %2579 = vmatprep.subr.mxu0 0.0
    %2580 = vmatpush1.msra.mxu0 0.0
    %2581 = vmatprep.subr.mxu0 0.0
    %2582 = vmatpush1.msra.mxu0 0.0
    %2583 = vmatprep.subr.mxu0 0.0
    %2584 = vmatpush1.msra.mxu0 0.0
    %2585 = vmatprep.subr.mxu0 0.0
    %2586 = vmatpush1.msra.mxu0 0.0
    %2587 = vmatprep.subr.mxu0 0.0
    %2588 = vmatpush1.msra.mxu0 0.0
    %2589 = vmatprep.subr.mxu0 0.0
    %2590 = vmatpush1.msra.mxu0 0.0
    %2591 = vmatprep.subr.mxu0 0.0
    %2592 = vmatpush1.msra.mxu0 0.0
    %2593 = vmatprep.subr.mxu0 0.0
    %2594 = vmatpush1.msra.mxu0 0.0
    %2595 = vmatprep.subr.mxu0 0.0
    %2596 = vmatpush1.msra.mxu0 0.0
    %2597 = vmatprep.subr.mxu0 0.0
    %2598 = vmatpush1.msra.mxu0 0.0
    %2599 = vmatprep.subr.mxu0 0.0
    %2600 = vmatpush1.msra.mxu0 0.0
    %2601 = vmatprep.subr.mxu0 0.0
    %2602 = vmatpush1.msra.mxu0 0.0
    %2603 = vmatprep.subr.mxu0 0.0
    %2604 = vmatpush1.msra.mxu0 0.0
    %2605 = vmatprep.subr.mxu0 0.0
    %2606 = vmatpush1.msra.mxu0 0.0
    %2607 = vmatprep.subr.mxu0 0.0
    %2608 = vmatpush1.msra.mxu0 0.0
    %2609 = vmatprep.subr.mxu0 0.0
    %2610 = vmatpush1.msra.mxu0 0.0
    %2611 = vmatprep.subr.mxu0 0.0
    %2612 = vmatpush1.msra.mxu0 0.0
    %2613 = vmatprep.subr.mxu0 0.0
    %2614 = vmatpush1.msra.mxu0 0.0
    %2615 = vmatprep.subr.mxu0 0.0
    %2616 = vmatpush1.msra.mxu0 0.0
    %2617 = vmatprep.mubr.f32.mxu0 0.0
    %v2618 = vand.u32 %v2137, 4294901760
    %2619 = vmatmul.mubr.f32.gmra.mrb[0].mxu0 %v2618
    %v2620 = vpop.f32.mrb[0].mxu0
    %v2621 = vadd.f32 %v2546, %v2620
    %v2622 = vpop.f32.mrb[0].mxu0
    %2623 = vdwg.mxu0
    %v2624 = vadd.f32 %v540, %v2621
    %v2625 = vxor.u32 %v2624, 2147483648
    %v2626 = vmul.f32 %v2625, 1.442695
    %v2627 = vpow.pop %v2626
    %v2628 = vadd.f32 %v2627, 1.0
    %v2629 = vrcp.pop %v2628
    %v2630 = vmul.f32 1.0, %v2629
    %v2631 = vmul.f32 %v2630, 2.0
    %v2632 = vsub.f32 %v2631, 1.0
    %v2634 = vrot.slane %v2126, 6
    %v2636 = vmul.f32 %v2630, %v2634
    %2638 = vrot.lane.b32.xlu0 %v2632, 64
    %v2639 = vpop.permute.xlu0 %2638
    %v2641 = vmul.f32 %v2630, %v2639
    %2643 = vrot.lane.b32.xlu0 %v2641, 32
    %v2644 = vpop.permute.xlu0 %2643
    %v2646 = vadd.f32 %v2636, %v2644
    %v2647 = vtanh.pop %v2646
    %2649 = vrot.lane.b32.xlu0 %v2647, 64
    %v2650 = vpop.permute.xlu0 %2649
    %v2652 = vmul.f32 %v2630, %v2650
    %2654 = vrot.lane.b32.xlu0 %v2652, 32
    %v2655 = vpop.permute.xlu0 %2654
    %v2656 = vsel %vm565, %v2655, 0
    %2658 = vmatprep.subr.mxu0 0.0
    %v2659 = vand.u32 %v28, 4294901760
    %2660 = vmatpush1.msra.mxu0 %v2659
    %2661 = vmatprep.subr.mxu0 0.0
    %v2662 = vand.u32 %v29, 4294901760
    %2663 = vmatpush1.msra.mxu0 %v2662
    %2664 = vmatprep.subr.mxu0 0.0
    %v2665 = vand.u32 %v30, 4294901760
    %2666 = vmatpush1.msra.mxu0 %v2665
    %2667 = vmatprep.subr.mxu0 0.0
    %v2668 = vand.u32 %v31, 4294901760
    %2669 = vmatpush1.msra.mxu0 %v2668
    %2670 = vmatprep.subr.mxu0 0.0
    %2671 = vmatpush1.msra.mxu0 0.0
    %2672 = vmatprep.subr.mxu0 0.0
    %2673 = vmatpush1.msra.mxu0 0.0
    %2674 = vmatprep.subr.mxu0 0.0
    %2675 = vmatpush1.msra.mxu0 0.0
    %2676 = vmatprep.subr.mxu0 0.0
    %2677 = vmatpush1.msra.mxu0 0.0
    %2678 = vmatprep.subr.mxu0 0.0
    %2679 = vmatpush1.msra.mxu0 0.0
    %2680 = vmatprep.subr.mxu0 0.0
    %2681 = vmatpush1.msra.mxu0 0.0
    %2682 = vmatprep.subr.mxu0 0.0
    %2683 = vmatpush1.msra.mxu0 0.0
    %2684 = vmatprep.subr.mxu0 0.0
    %2685 = vmatpush1.msra.mxu0 0.0
    %2686 = vmatprep.subr.mxu0 0.0
    %2687 = vmatpush1.msra.mxu0 0.0
    %2688 = vmatprep.subr.mxu0 0.0
    %2689 = vmatpush1.msra.mxu0 0.0
    %2690 = vmatprep.subr.mxu0 0.0
    %2691 = vmatpush1.msra.mxu0 0.0
    %2692 = vmatprep.subr.mxu0 0.0
    %2693 = vmatpush1.msra.mxu0 0.0
    %2694 = vmatprep.subr.mxu0 0.0
    %2695 = vmatpush1.msra.mxu0 0.0
    %2696 = vmatprep.subr.mxu0 0.0
    %2697 = vmatpush1.msra.mxu0 0.0
    %2698 = vmatprep.subr.mxu0 0.0
    %2699 = vmatpush1.msra.mxu0 0.0
    %2700 = vmatprep.subr.mxu0 0.0
    %2701 = vmatpush1.msra.mxu0 0.0
    %2702 = vmatprep.subr.mxu0 0.0
    %2703 = vmatpush1.msra.mxu0 0.0
    %2704 = vmatprep.subr.mxu0 0.0
    %2705 = vmatpush1.msra.mxu0 0.0
    %2706 = vmatprep.subr.mxu0 0.0
    %2707 = vmatpush1.msra.mxu0 0.0
    %2708 = vmatprep.subr.mxu0 0.0
    %2709 = vmatpush1.msra.mxu0 0.0
    %2710 = vmatprep.subr.mxu0 0.0
    %2711 = vmatpush1.msra.mxu0 0.0
    %2712 = vmatprep.subr.mxu0 0.0
    %2713 = vmatpush1.msra.mxu0 0.0
    %2714 = vmatprep.subr.mxu0 0.0
    %2715 = vmatpush1.msra.mxu0 0.0
    %2716 = vmatprep.subr.mxu0 0.0
    %2717 = vmatpush1.msra.mxu0 0.0
    %2718 = vmatprep.subr.mxu0 0.0
    %2719 = vmatpush1.msra.mxu0 0.0
    %2720 = vmatprep.subr.mxu0 0.0
    %2721 = vmatpush1.msra.mxu0 0.0
    %2722 = vmatprep.subr.mxu0 0.0
    %2723 = vmatpush1.msra.mxu0 0.0
    %2724 = vmatprep.subr.mxu0 0.0
    %2725 = vmatpush1.msra.mxu0 0.0
    %2726 = vmatprep.mubr.f32.mxu0 0.0
    %v2727 = vand.u32 %v2656, 4294901760
    %v2728 = vsub.f32 %v2656, %v2727
    %v2729 = vand.u32 %v2728, 4294901760
    %v2730 = vsub.f32 %v2728, %v2729
    %v2731 = vand.u32 %v2730, 4294901760
    %2732 = vmatmul.mubr.f32.gmra.mrb[0].mxu0 %v2731
    %v2733 = vpop.f32.mrb[0].mxu0
    %v2734 = vadd.f32 0.0, %v2733
    %v2735 = vpop.f32.mrb[0].mxu0
    %2736 = vdwg.mxu0
    %2737 = vmatprep.subr.mxu0 0.0
    %v2738 = vand.u32 %v28, 4294901760
    %v2739 = vsub.f32 %v28, %v2738
    %v2740 = vand.u32 %v2739, 4294901760
    %v2741 = vsub.f32 %v2739, %v2740
    %v2742 = vand.u32 %v2741, 4294901760
    %2743 = vmatpush1.msra.mxu0 %v2742
    %2744 = vmatprep.subr.mxu0 0.0
    %v2745 = vand.u32 %v29, 4294901760
    %v2746 = vsub.f32 %v29, %v2745
    %v2747 = vand.u32 %v2746, 4294901760
    %v2748 = vsub.f32 %v2746, %v2747
    %v2749 = vand.u32 %v2748, 4294901760
    %2750 = vmatpush1.msra.mxu0 %v2749
    %2751 = vmatprep.subr.mxu0 0.0
    %v2752 = vand.u32 %v30, 4294901760
    %v2753 = vsub.f32 %v30, %v2752
    %v2754 = vand.u32 %v2753, 4294901760
    %v2755 = vsub.f32 %v2753, %v2754
    %v2756 = vand.u32 %v2755, 4294901760
    %2757 = vmatpush1.msra.mxu0 %v2756
    %2758 = vmatprep.subr.mxu0 0.0
    %v2759 = vand.u32 %v31, 4294901760
    %v2760 = vsub.f32 %v31, %v2759
    %v2761 = vand.u32 %v2760, 4294901760
    %v2762 = vsub.f32 %v2760, %v2761
    %v2763 = vand.u32 %v2762, 4294901760
    %2764 = vmatpush1.msra.mxu0 %v2763
    %2765 = vmatprep.subr.mxu0 0.0
    %2766 = vmatpush1.msra.mxu0 0.0
    %2767 = vmatprep.subr.mxu0 0.0
    %2768 = vmatpush1.msra.mxu0 0.0
    %2769 = vmatprep.subr.mxu0 0.0
    %2770 = vmatpush1.msra.mxu0 0.0
    %2771 = vmatprep.subr.mxu0 0.0
    %2772 = vmatpush1.msra.mxu0 0.0
    %2773 = vmatprep.subr.mxu0 0.0
    %2774 = vmatpush1.msra.mxu0 0.0
    %2775 = vmatprep.subr.mxu0 0.0
    %2776 = vmatpush1.msra.mxu0 0.0
    %2777 = vmatprep.subr.mxu0 0.0
    %2778 = vmatpush1.msra.mxu0 0.0
    %2779 = vmatprep.subr.mxu0 0.0
    %2780 = vmatpush1.msra.mxu0 0.0
    %2781 = vmatprep.subr.mxu0 0.0
    %2782 = vmatpush1.msra.mxu0 0.0
    %2783 = vmatprep.subr.mxu0 0.0
    %2784 = vmatpush1.msra.mxu0 0.0
    %2785 = vmatprep.subr.mxu0 0.0
    %2786 = vmatpush1.msra.mxu0 0.0
    %2787 = vmatprep.subr.mxu0 0.0
    %2788 = vmatpush1.msra.mxu0 0.0
    %2789 = vmatprep.subr.mxu0 0.0
    %2790 = vmatpush1.msra.mxu0 0.0
    %2791 = vmatprep.subr.mxu0 0.0
    %2792 = vmatpush1.msra.mxu0 0.0
    %2793 = vmatprep.subr.mxu0 0.0
    %2794 = vmatpush1.msra.mxu0 0.0
    %2795 = vmatprep.subr.mxu0 0.0
    %2796 = vmatpush1.msra.mxu0 0.0
    %2797 = vmatprep.subr.mxu0 0.0
    %2798 = vmatpush1.msra.mxu0 0.0
    %2799 = vmatprep.subr.mxu0 0.0
    %2800 = vmatpush1.msra.mxu0 0.0
    %2801 = vmatprep.subr.mxu0 0.0
    %2802 = vmatpush1.msra.mxu0 0.0
    %2803 = vmatprep.subr.mxu0 0.0
    %2804 = vmatpush1.msra.mxu0 0.0
    %2805 = vmatprep.subr.mxu0 0.0
    %2806 = vmatpush1.msra.mxu0 0.0
    %2807 = vmatprep.subr.mxu0 0.0
    %2808 = vmatpush1.msra.mxu0 0.0
    %2809 = vmatprep.subr.mxu0 0.0
    %2810 = vmatpush1.msra.mxu0 0.0
    %2811 = vmatprep.subr.mxu0 0.0
    %2812 = vmatpush1.msra.mxu0 0.0
    %2813 = vmatprep.subr.mxu0 0.0
    %2814 = vmatpush1.msra.mxu0 0.0
    %2815 = vmatprep.subr.mxu0 0.0
    %2816 = vmatpush1.msra.mxu0 0.0
    %2817 = vmatprep.subr.mxu0 0.0
    %2818 = vmatpush1.msra.mxu0 0.0
    %2819 = vmatprep.subr.mxu0 0.0
    %2820 = vmatpush1.msra.mxu0 0.0
    %2821 = vmatprep.mubr.f32.mxu0 0.0
    %v2822 = vand.u32 %v2656, 4294901760
    %2823 = vmatmul.mubr.f32.gmra.mrb[0].mxu0 %v2822
    %v2824 = vpop.f32.mrb[0].mxu0
    %v2825 = vadd.f32 %v2734, %v2824
    %v2826 = vpop.f32.mrb[0].mxu0
    %2827 = vdwg.mxu0
    %2828 = vmatprep.subr.mxu0 0.0
    %v2829 = vand.u32 %v28, 4294901760
    %v2830 = vsub.f32 %v28, %v2829
    %2831 = vmatpush1.msra.mxu0 %v2830
    %2832 = vmatprep.subr.mxu0 0.0
    %v2833 = vand.u32 %v29, 4294901760
    %v2834 = vsub.f32 %v29, %v2833
    %2835 = vmatpush1.msra.mxu0 %v2834
    %2836 = vmatprep.subr.mxu0 0.0
    %v2837 = vand.u32 %v30, 4294901760
    %v2838 = vsub.f32 %v30, %v2837
    %2839 = vmatpush1.msra.mxu0 %v2838
    %2840 = vmatprep.subr.mxu0 0.0
    %v2841 = vand.u32 %v31, 4294901760
    %v2842 = vsub.f32 %v31, %v2841
    %2843 = vmatpush1.msra.mxu0 %v2842
    %2844 = vmatprep.subr.mxu0 0.0
    %2845 = vmatpush1.msra.mxu0 0.0
    %2846 = vmatprep.subr.mxu0 0.0
    %2847 = vmatpush1.msra.mxu0 0.0
    %2848 = vmatprep.subr.mxu0 0.0
    %2849 = vmatpush1.msra.mxu0 0.0
    %2850 = vmatprep.subr.mxu0 0.0
    %2851 = vmatpush1.msra.mxu0 0.0
    %2852 = vmatprep.subr.mxu0 0.0
    %2853 = vmatpush1.msra.mxu0 0.0
    %2854 = vmatprep.subr.mxu0 0.0
    %2855 = vmatpush1.msra.mxu0 0.0
    %2856 = vmatprep.subr.mxu0 0.0
    %2857 = vmatpush1.msra.mxu0 0.0
    %2858 = vmatprep.subr.mxu0 0.0
    %2859 = vmatpush1.msra.mxu0 0.0
    %2860 = vmatprep.subr.mxu0 0.0
    %2861 = vmatpush1.msra.mxu0 0.0
    %2862 = vmatprep.subr.mxu0 0.0
    %2863 = vmatpush1.msra.mxu0 0.0
    %2864 = vmatprep.subr.mxu0 0.0
    %2865 = vmatpush1.msra.mxu0 0.0
    %2866 = vmatprep.subr.mxu0 0.0
    %2867 = vmatpush1.msra.mxu0 0.0
    %2868 = vmatprep.subr.mxu0 0.0
    %2869 = vmatpush1.msra.mxu0 0.0
    %2870 = vmatprep.subr.mxu0 0.0
    %2871 = vmatpush1.msra.mxu0 0.0
    %2872 = vmatprep.subr.mxu0 0.0
    %2873 = vmatpush1.msra.mxu0 0.0
    %2874 = vmatprep.subr.mxu0 0.0
    %2875 = vmatpush1.msra.mxu0 0.0
    %2876 = vmatprep.subr.mxu0 0.0
    %2877 = vmatpush1.msra.mxu0 0.0
    %2878 = vmatprep.subr.mxu0 0.0
    %2879 = vmatpush1.msra.mxu0 0.0
    %2880 = vmatprep.subr.mxu0 0.0
    %2881 = vmatpush1.msra.mxu0 0.0
    %2882 = vmatprep.subr.mxu0 0.0
    %2883 = vmatpush1.msra.mxu0 0.0
    %2884 = vmatprep.subr.mxu0 0.0
    %2885 = vmatpush1.msra.mxu0 0.0
    %2886 = vmatprep.subr.mxu0 0.0
    %2887 = vmatpush1.msra.mxu0 0.0
    %2888 = vmatprep.subr.mxu0 0.0
    %2889 = vmatpush1.msra.mxu0 0.0
    %2890 = vmatprep.subr.mxu0 0.0
    %2891 = vmatpush1.msra.mxu0 0.0
    %2892 = vmatprep.subr.mxu0 0.0
    %2893 = vmatpush1.msra.mxu0 0.0
    %2894 = vmatprep.subr.mxu0 0.0
    %2895 = vmatpush1.msra.mxu0 0.0
    %2896 = vmatprep.subr.mxu0 0.0
    %2897 = vmatpush1.msra.mxu0 0.0
    %2898 = vmatprep.subr.mxu0 0.0
    %2899 = vmatpush1.msra.mxu0 0.0
    %2900 = vmatprep.mubr.f32.mxu0 0.0
    %v2901 = vand.u32 %v2656, 4294901760
    %v2902 = vsub.f32 %v2656, %v2901
    %2903 = vmatmul.mubr.f32.gmra.mrb[0].mxu0 %v2902
    %v2904 = vpop.f32.mrb[0].mxu0
    %v2905 = vadd.f32 %v2825, %v2904
    %v2906 = vpop.f32.mrb[0].mxu0
    %2907 = vdwg.mxu0
    %2908 = vmatprep.subr.mxu0 0.0
    %v2909 = vand.u32 %v28, 4294901760
    %2910 = vmatpush1.msra.mxu0 %v2909
    %2911 = vmatprep.subr.mxu0 0.0
    %v2912 = vand.u32 %v29, 4294901760
    %2913 = vmatpush1.msra.mxu0 %v2912
    %2914 = vmatprep.subr.mxu0 0.0
    %v2915 = vand.u32 %v30, 4294901760
    %2916 = vmatpush1.msra.mxu0 %v2915
    %2917 = vmatprep.subr.mxu0 0.0
    %v2918 = vand.u32 %v31, 4294901760
    %2919 = vmatpush1.msra.mxu0 %v2918
    %2920 = vmatprep.subr.mxu0 0.0
    %2921 = vmatpush1.msra.mxu0 0.0
    %2922 = vmatprep.subr.mxu0 0.0
    %2923 = vmatpush1.msra.mxu0 0.0
    %2924 = vmatprep.subr.mxu0 0.0
    %2925 = vmatpush1.msra.mxu0 0.0
    %2926 = vmatprep.subr.mxu0 0.0
    %2927 = vmatpush1.msra.mxu0 0.0
    %2928 = vmatprep.subr.mxu0 0.0
    %2929 = vmatpush1.msra.mxu0 0.0
    %2930 = vmatprep.subr.mxu0 0.0
    %2931 = vmatpush1.msra.mxu0 0.0
    %2932 = vmatprep.subr.mxu0 0.0
    %2933 = vmatpush1.msra.mxu0 0.0
    %2934 = vmatprep.subr.mxu0 0.0
    %2935 = vmatpush1.msra.mxu0 0.0
    %2936 = vmatprep.subr.mxu0 0.0
    %2937 = vmatpush1.msra.mxu0 0.0
    %2938 = vmatprep.subr.mxu0 0.0
    %2939 = vmatpush1.msra.mxu0 0.0
    %2940 = vmatprep.subr.mxu0 0.0
    %2941 = vmatpush1.msra.mxu0 0.0
    %2942 = vmatprep.subr.mxu0 0.0
    %2943 = vmatpush1.msra.mxu0 0.0
    %2944 = vmatprep.subr.mxu0 0.0
    %2945 = vmatpush1.msra.mxu0 0.0
    %2946 = vmatprep.subr.mxu0 0.0
    %2947 = vmatpush1.msra.mxu0 0.0
    %2948 = vmatprep.subr.mxu0 0.0
    %2949 = vmatpush1.msra.mxu0 0.0
    %2950 = vmatprep.subr.mxu0 0.0
    %2951 = vmatpush1.msra.mxu0 0.0
    %2952 = vmatprep.subr.mxu0 0.0
    %2953 = vmatpush1.msra.mxu0 0.0
    %2954 = vmatprep.subr.mxu0 0.0
    %2955 = vmatpush1.msra.mxu0 0.0
    %2956 = vmatprep.subr.mxu0 0.0
    %2957 = vmatpush1.msra.mxu0 0.0
    %2958 = vmatprep.subr.mxu0 0.0
    %2959 = vmatpush1.msra.mxu0 0.0
    %2960 = vmatprep.subr.mxu0 0.0
    %2961 = vmatpush1.msra.mxu0 0.0
    %2962 = vmatprep.subr.mxu0 0.0
    %2963 = vmatpush1.msra.mxu0 0.0
    %2964 = vmatprep.subr.mxu0 0.0
    %2965 = vmatpush1.msra.mxu0 0.0
    %2966 = vmatprep.subr.mxu0 0.0
    %2967 = vmatpush1.msra.mxu0 0.0
    %2968 = vmatprep.subr.mxu0 0.0
    %2969 = vmatpush1.msra.mxu0 0.0
    %2970 = vmatprep.subr.mxu0 0.0
    %2971 = vmatpush1.msra.mxu0 0.0
    %2972 = vmatprep.subr.mxu0 0.0
    %2973 = vmatpush1.msra.mxu0 0.0
    %2974 = vmatprep.subr.mxu0 0.0
    %2975 = vmatpush1.msra.mxu0 0.0
    %2976 = vmatprep.mubr.f32.mxu0 0.0
    %v2977 = vand.u32 %v2656, 4294901760
    %v2978 = vsub.f32 %v2656, %v2977
    %v2979 = vand.u32 %v2978, 4294901760
    %2980 = vmatmul.mubr.f32.gmra.mrb[0].mxu0 %v2979
    %v2981 = vpop.f32.mrb[0].mxu0
    %v2982 = vadd.f32 %v2905, %v2981
    %v2983 = vpop.f32.mrb[0].mxu0
    %2984 = vdwg.mxu0
    %2985 = vmatprep.subr.mxu0 0.0
    %v2986 = vand.u32 %v28, 4294901760
    %v2987 = vsub.f32 %v28, %v2986
    %v2988 = vand.u32 %v2987, 4294901760
    %2989 = vmatpush1.msra.mxu0 %v2988
    %2990 = vmatprep.subr.mxu0 0.0
    %v2991 = vand.u32 %v29, 4294901760
    %v2992 = vsub.f32 %v29, %v2991
    %v2993 = vand.u32 %v2992, 4294901760
    %2994 = vmatpush1.msra.mxu0 %v2993
    %2995 = vmatprep.subr.mxu0 0.0
    %v2996 = vand.u32 %v30, 4294901760
    %v2997 = vsub.f32 %v30, %v2996
    %v2998 = vand.u32 %v2997, 4294901760
    %2999 = vmatpush1.msra.mxu0 %v2998
    %3000 = vmatprep.subr.mxu0 0.0
    %v3001 = vand.u32 %v31, 4294901760
    %v3002 = vsub.f32 %v31, %v3001
    %v3003 = vand.u32 %v3002, 4294901760
    %3004 = vmatpush1.msra.mxu0 %v3003
    %3005 = vmatprep.subr.mxu0 0.0
    %3006 = vmatpush1.msra.mxu0 0.0
    %3007 = vmatprep.subr.mxu0 0.0
    %3008 = vmatpush1.msra.mxu0 0.0
    %3009 = vmatprep.subr.mxu0 0.0
    %3010 = vmatpush1.msra.mxu0 0.0
    %3011 = vmatprep.subr.mxu0 0.0
    %3012 = vmatpush1.msra.mxu0 0.0
    %3013 = vmatprep.subr.mxu0 0.0
    %3014 = vmatpush1.msra.mxu0 0.0
    %3015 = vmatprep.subr.mxu0 0.0
    %3016 = vmatpush1.msra.mxu0 0.0
    %3017 = vmatprep.subr.mxu0 0.0
    %3018 = vmatpush1.msra.mxu0 0.0
    %3019 = vmatprep.subr.mxu0 0.0
    %3020 = vmatpush1.msra.mxu0 0.0
    %3021 = vmatprep.subr.mxu0 0.0
    %3022 = vmatpush1.msra.mxu0 0.0
    %3023 = vmatprep.subr.mxu0 0.0
    %3024 = vmatpush1.msra.mxu0 0.0
    %3025 = vmatprep.subr.mxu0 0.0
    %3026 = vmatpush1.msra.mxu0 0.0
    %3027 = vmatprep.subr.mxu0 0.0
    %3028 = vmatpush1.msra.mxu0 0.0
    %3029 = vmatprep.subr.mxu0 0.0
    %3030 = vmatpush1.msra.mxu0 0.0
    %3031 = vmatprep.subr.mxu0 0.0
    %3032 = vmatpush1.msra.mxu0 0.0
    %3033 = vmatprep.subr.mxu0 0.0
    %3034 = vmatpush1.msra.mxu0 0.0
    %3035 = vmatprep.subr.mxu0 0.0
    %3036 = vmatpush1.msra.mxu0 0.0
    %3037 = vmatprep.subr.mxu0 0.0
    %3038 = vmatpush1.msra.mxu0 0.0
    %3039 = vmatprep.subr.mxu0 0.0
    %3040 = vmatpush1.msra.mxu0 0.0
    %3041 = vmatprep.subr.mxu0 0.0
    %3042 = vmatpush1.msra.mxu0 0.0
    %3043 = vmatprep.subr.mxu0 0.0
    %3044 = vmatpush1.msra.mxu0 0.0
    %3045 = vmatprep.subr.mxu0 0.0
    %3046 = vmatpush1.msra.mxu0 0.0
    %3047 = vmatprep.subr.mxu0 0.0
    %3048 = vmatpush1.msra.mxu0 0.0
    %3049 = vmatprep.subr.mxu0 0.0
    %3050 = vmatpush1.msra.mxu0 0.0
    %3051 = vmatprep.subr.mxu0 0.0
    %3052 = vmatpush1.msra.mxu0 0.0
    %3053 = vmatprep.subr.mxu0 0.0
    %3054 = vmatpush1.msra.mxu0 0.0
    %3055 = vmatprep.subr.mxu0 0.0
    %3056 = vmatpush1.msra.mxu0 0.0
    %3057 = vmatprep.subr.mxu0 0.0
    %3058 = vmatpush1.msra.mxu0 0.0
    %3059 = vmatprep.subr.mxu0 0.0
    %3060 = vmatpush1.msra.mxu0 0.0
    %3061 = vmatprep.mubr.f32.mxu0 0.0
    %v3062 = vand.u32 %v2656, 4294901760
    %3063 = vmatmul.mubr.f32.gmra.mrb[0].mxu0 %v3062
    %v3064 = vpop.f32.mrb[0].mxu0
    %v3065 = vadd.f32 %v2982, %v3064
    %v3066 = vpop.f32.mrb[0].mxu0
    %3067 = vdwg.mxu0
    %3068 = vmatprep.subr.mxu0 0.0
    %v3069 = vand.u32 %v28, 4294901760
    %3070 = vmatpush1.msra.mxu0 %v3069
    %3071 = vmatprep.subr.mxu0 0.0
    %v3072 = vand.u32 %v29, 4294901760
    %3073 = vmatpush1.msra.mxu0 %v3072
    %3074 = vmatprep.subr.mxu0 0.0
    %v3075 = vand.u32 %v30, 4294901760
    %3076 = vmatpush1.msra.mxu0 %v3075
    %3077 = vmatprep.subr.mxu0 0.0
    %v3078 = vand.u32 %v31, 4294901760
    %3079 = vmatpush1.msra.mxu0 %v3078
    %3080 = vmatprep.subr.mxu0 0.0
    %3081 = vmatpush1.msra.mxu0 0.0
    %3082 = vmatprep.subr.mxu0 0.0
    %3083 = vmatpush1.msra.mxu0 0.0
    %3084 = vmatprep.subr.mxu0 0.0
    %3085 = vmatpush1.msra.mxu0 0.0
    %3086 = vmatprep.subr.mxu0 0.0
    %3087 = vmatpush1.msra.mxu0 0.0
    %3088 = vmatprep.subr.mxu0 0.0
    %3089 = vmatpush1.msra.mxu0 0.0
    %3090 = vmatprep.subr.mxu0 0.0
    %3091 = vmatpush1.msra.mxu0 0.0
    %3092 = vmatprep.subr.mxu0 0.0
    %3093 = vmatpush1.msra.mxu0 0.0
    %3094 = vmatprep.subr.mxu0 0.0
    %3095 = vmatpush1.msra.mxu0 0.0
    %3096 = vmatprep.subr.mxu0 0.0
    %3097 = vmatpush1.msra.mxu0 0.0
    %3098 = vmatprep.subr.mxu0 0.0
    %3099 = vmatpush1.msra.mxu0 0.0
    %3100 = vmatprep.subr.mxu0 0.0
    %3101 = vmatpush1.msra.mxu0 0.0
    %3102 = vmatprep.subr.mxu0 0.0
    %3103 = vmatpush1.msra.mxu0 0.0
    %3104 = vmatprep.subr.mxu0 0.0
    %3105 = vmatpush1.msra.mxu0 0.0
    %3106 = vmatprep.subr.mxu0 0.0
    %3107 = vmatpush1.msra.mxu0 0.0
    %3108 = vmatprep.subr.mxu0 0.0
    %3109 = vmatpush1.msra.mxu0 0.0
    %3110 = vmatprep.subr.mxu0 0.0
    %3111 = vmatpush1.msra.mxu0 0.0
    %3112 = vmatprep.subr.mxu0 0.0
    %3113 = vmatpush1.msra.mxu0 0.0
    %3114 = vmatprep.subr.mxu0 0.0
    %3115 = vmatpush1.msra.mxu0 0.0
    %3116 = vmatprep.subr.mxu0 0.0
    %3117 = vmatpush1.msra.mxu0 0.0
    %3118 = vmatprep.subr.mxu0 0.0
    %3119 = vmatpush1.msra.mxu0 0.0
    %3120 = vmatprep.subr.mxu0 0.0
    %3121 = vmatpush1.msra.mxu0 0.0
    %3122 = vmatprep.subr.mxu0 0.0
    %3123 = vmatpush1.msra.mxu0 0.0
    %3124 = vmatprep.subr.mxu0 0.0
    %3125 = vmatpush1.msra.mxu0 0.0
    %3126 = vmatprep.subr.mxu0 0.0
    %3127 = vmatpush1.msra.mxu0 0.0
    %3128 = vmatprep.subr.mxu0 0.0
    %3129 = vmatpush1.msra.mxu0 0.0
    %3130 = vmatprep.subr.mxu0 0.0
    %3131 = vmatpush1.msra.mxu0 0.0
    %3132 = vmatprep.subr.mxu0 0.0
    %3133 = vmatpush1.msra.mxu0 0.0
    %3134 = vmatprep.subr.mxu0 0.0
    %3135 = vmatpush1.msra.mxu0 0.0
    %3136 = vmatprep.mubr.f32.mxu0 0.0
    %v3137 = vand.u32 %v2656, 4294901760
    %3138 = vmatmul.mubr.f32.gmra.mrb[0].mxu0 %v3137
    %v3139 = vpop.f32.mrb[0].mxu0
    %v3140 = vadd.f32 %v3065, %v3139
    %v3141 = vpop.f32.mrb[0].mxu0
    %3142 = vdwg.mxu0
    %v3144 = vrot.slane %v3140, 6
    %v3146 = vadd.f32 %v540, %v3144
    %v3147 = vxor.u32 %v3146, 2147483648
    %v3148 = vmul.f32 %v3147, 1.442695
    %v3149 = vpow.pop %v3148
    %v3150 = vadd.f32 %v3149, 1.0
    %v3151 = vrcp.pop %v3150
    %v3152 = vmul.f32 1.0, %v3151
    %v3153 = vmul.f32 %v3152, 2.0
    %v3154 = vsub.f32 %v3153, 1.0
    %v3156 = vrot.slane %v2646, 6
    %v3158 = vmul.f32 %v3152, %v3156
    %3160 = vrot.lane.b32.xlu0 %v3154, 64
    %v3161 = vpop.permute.xlu0 %3160
    %v3163 = vmul.f32 %v3152, %v3161
    %3165 = vrot.lane.b32.xlu0 %v3163, 32
    %v3166 = vpop.permute.xlu0 %3165
    %v3168 = vadd.f32 %v3158, %v3166
    %v3169 = vtanh.pop %v3168
    %3171 = vrot.lane.b32.xlu0 %v3169, 64
    %v3172 = vpop.permute.xlu0 %3171
    %v3174 = vmul.f32 %v3152, %v3172
    %v3176 = vrot.slane %v3174, 2
    %3177 = vrot.lane.b32.xlu0 %v3176, 32
    %v3178 = vpop.permute.xlu0 %3177
    %v3179 = vsel %vm565, %v3178, 0
    %3181 = vmatprep.subr.mxu0 0.0
    %v3182 = vand.u32 %v28, 4294901760
    %3183 = vmatpush1.msra.mxu0 %v3182
    %3184 = vmatprep.subr.mxu0 0.0
    %v3185 = vand.u32 %v29, 4294901760
    %3186 = vmatpush1.msra.mxu0 %v3185
    %3187 = vmatprep.subr.mxu0 0.0
    %v3188 = vand.u32 %v30, 4294901760
    %3189 = vmatpush1.msra.mxu0 %v3188
    %3190 = vmatprep.subr.mxu0 0.0
    %v3191 = vand.u32 %v31, 4294901760
    %3192 = vmatpush1.msra.mxu0 %v3191
    %3193 = vmatprep.subr.mxu0 0.0
    %3194 = vmatpush1.msra.mxu0 0.0
    %3195 = vmatprep.subr.mxu0 0.0
    %3196 = vmatpush1.msra.mxu0 0.0
    %3197 = vmatprep.subr.mxu0 0.0
    %3198 = vmatpush1.msra.mxu0 0.0
    %3199 = vmatprep.subr.mxu0 0.0
    %3200 = vmatpush1.msra.mxu0 0.0
    %3201 = vmatprep.subr.mxu0 0.0
    %3202 = vmatpush1.msra.mxu0 0.0
    %3203 = vmatprep.subr.mxu0 0.0
    %3204 = vmatpush1.msra.mxu0 0.0
    %3205 = vmatprep.subr.mxu0 0.0
    %3206 = vmatpush1.msra.mxu0 0.0
    %3207 = vmatprep.subr.mxu0 0.0
    %3208 = vmatpush1.msra.mxu0 0.0
    %3209 = vmatprep.subr.mxu0 0.0
    %3210 = vmatpush1.msra.mxu0 0.0
    %3211 = vmatprep.subr.mxu0 0.0
    %3212 = vmatpush1.msra.mxu0 0.0
    %3213 = vmatprep.subr.mxu0 0.0
    %3214 = vmatpush1.msra.mxu0 0.0
    %3215 = vmatprep.subr.mxu0 0.0
    %3216 = vmatpush1.msra.mxu0 0.0
    %3217 = vmatprep.subr.mxu0 0.0
    %3218 = vmatpush1.msra.mxu0 0.0
    %3219 = vmatprep.subr.mxu0 0.0
    %3220 = vmatpush1.msra.mxu0 0.0
    %3221 = vmatprep.subr.mxu0 0.0
    %3222 = vmatpush1.msra.mxu0 0.0
    %3223 = vmatprep.subr.mxu0 0.0
    %3224 = vmatpush1.msra.mxu0 0.0
    %3225 = vmatprep.subr.mxu0 0.0
    %3226 = vmatpush1.msra.mxu0 0.0
    %3227 = vmatprep.subr.mxu0 0.0
    %3228 = vmatpush1.msra.mxu0 0.0
    %3229 = vmatprep.subr.mxu0 0.0
    %3230 = vmatpush1.msra.mxu0 0.0
    %3231 = vmatprep.subr.mxu0 0.0
    %3232 = vmatpush1.msra.mxu0 0.0
    %3233 = vmatprep.subr.mxu0 0.0
    %3234 = vmatpush1.msra.mxu0 0.0
    %3235 = vmatprep.subr.mxu0 0.0
    %3236 = vmatpush1.msra.mxu0 0.0
    %3237 = vmatprep.subr.mxu0 0.0
    %3238 = vmatpush1.msra.mxu0 0.0
    %3239 = vmatprep.subr.mxu0 0.0
    %3240 = vmatpush1.msra.mxu0 0.0
    %3241 = vmatprep.subr.mxu0 0.0
    %3242 = vmatpush1.msra.mxu0 0.0
    %3243 = vmatprep.subr.mxu0 0.0
    %3244 = vmatpush1.msra.mxu0 0.0
    %3245 = vmatprep.subr.mxu0 0.0
    %3246 = vmatpush1.msra.mxu0 0.0
    %3247 = vmatprep.subr.mxu0 0.0
    %3248 = vmatpush1.msra.mxu0 0.0
    %3249 = vmatprep.mubr.f32.mxu0 0.0
    %v3250 = vand.u32 %v3179, 4294901760
    %v3251 = vsub.f32 %v3179, %v3250
    %v3252 = vand.u32 %v3251, 4294901760
    %v3253 = vsub.f32 %v3251, %v3252
    %v3254 = vand.u32 %v3253, 4294901760
    %3255 = vmatmul.mubr.f32.gmra.mrb[0].mxu0 %v3254
    %v3256 = vpop.f32.mrb[0].mxu0
    %v3257 = vadd.f32 0.0, %v3256
    %v3258 = vpop.f32.mrb[0].mxu0
    %3259 = vdwg.mxu0
    %3260 = vmatprep.subr.mxu0 0.0
    %v3261 = vand.u32 %v28, 4294901760
    %v3262 = vsub.f32 %v28, %v3261
    %v3263 = vand.u32 %v3262, 4294901760
    %v3264 = vsub.f32 %v3262, %v3263
    %v3265 = vand.u32 %v3264, 4294901760
    %3266 = vmatpush1.msra.mxu0 %v3265
    %3267 = vmatprep.subr.mxu0 0.0
    %v3268 = vand.u32 %v29, 4294901760
    %v3269 = vsub.f32 %v29, %v3268
    %v3270 = vand.u32 %v3269, 4294901760
    %v3271 = vsub.f32 %v3269, %v3270
    %v3272 = vand.u32 %v3271, 4294901760
    %3273 = vmatpush1.msra.mxu0 %v3272
    %3274 = vmatprep.subr.mxu0 0.0
    %v3275 = vand.u32 %v30, 4294901760
    %v3276 = vsub.f32 %v30, %v3275
    %v3277 = vand.u32 %v3276, 4294901760
    %v3278 = vsub.f32 %v3276, %v3277
    %v3279 = vand.u32 %v3278, 4294901760
    %3280 = vmatpush1.msra.mxu0 %v3279
    %3281 = vmatprep.subr.mxu0 0.0
    %v3282 = vand.u32 %v31, 4294901760
    %v3283 = vsub.f32 %v31, %v3282
    %v3284 = vand.u32 %v3283, 4294901760
    %v3285 = vsub.f32 %v3283, %v3284
    %v3286 = vand.u32 %v3285, 4294901760
    %3287 = vmatpush1.msra.mxu0 %v3286
    %3288 = vmatprep.subr.mxu0 0.0
    %3289 = vmatpush1.msra.mxu0 0.0
    %3290 = vmatprep.subr.mxu0 0.0
    %3291 = vmatpush1.msra.mxu0 0.0
    %3292 = vmatprep.subr.mxu0 0.0
    %3293 = vmatpush1.msra.mxu0 0.0
    %3294 = vmatprep.subr.mxu0 0.0
    %3295 = vmatpush1.msra.mxu0 0.0
    %3296 = vmatprep.subr.mxu0 0.0
    %3297 = vmatpush1.msra.mxu0 0.0
    %3298 = vmatprep.subr.mxu0 0.0
    %3299 = vmatpush1.msra.mxu0 0.0
    %3300 = vmatprep.subr.mxu0 0.0
    %3301 = vmatpush1.msra.mxu0 0.0
    %3302 = vmatprep.subr.mxu0 0.0
    %3303 = vmatpush1.msra.mxu0 0.0
    %3304 = vmatprep.subr.mxu0 0.0
    %3305 = vmatpush1.msra.mxu0 0.0
    %3306 = vmatprep.subr.mxu0 0.0
    %3307 = vmatpush1.msra.mxu0 0.0
    %3308 = vmatprep.subr.mxu0 0.0
    %3309 = vmatpush1.msra.mxu0 0.0
    %3310 = vmatprep.subr.mxu0 0.0
    %3311 = vmatpush1.msra.mxu0 0.0
    %3312 = vmatprep.subr.mxu0 0.0
    %3313 = vmatpush1.msra.mxu0 0.0
    %3314 = vmatprep.subr.mxu0 0.0
    %3315 = vmatpush1.msra.mxu0 0.0
    %3316 = vmatprep.subr.mxu0 0.0
    %3317 = vmatpush1.msra.mxu0 0.0
    %3318 = vmatprep.subr.mxu0 0.0
    %3319 = vmatpush1.msra.mxu0 0.0
    %3320 = vmatprep.subr.mxu0 0.0
    %3321 = vmatpush1.msra.mxu0 0.0
    %3322 = vmatprep.subr.mxu0 0.0
    %3323 = vmatpush1.msra.mxu0 0.0
    %3324 = vmatprep.subr.mxu0 0.0
    %3325 = vmatpush1.msra.mxu0 0.0
    %3326 = vmatprep.subr.mxu0 0.0
    %3327 = vmatpush1.msra.mxu0 0.0
    %3328 = vmatprep.subr.mxu0 0.0
    %3329 = vmatpush1.msra.mxu0 0.0
    %3330 = vmatprep.subr.mxu0 0.0
    %3331 = vmatpush1.msra.mxu0 0.0
    %3332 = vmatprep.subr.mxu0 0.0
    %3333 = vmatpush1.msra.mxu0 0.0
    %3334 = vmatprep.subr.mxu0 0.0
    %3335 = vmatpush1.msra.mxu0 0.0
    %3336 = vmatprep.subr.mxu0 0.0
    %3337 = vmatpush1.msra.mxu0 0.0
    %3338 = vmatprep.subr.mxu0 0.0
    %3339 = vmatpush1.msra.mxu0 0.0
    %3340 = vmatprep.subr.mxu0 0.0
    %3341 = vmatpush1.msra.mxu0 0.0
    %3342 = vmatprep.subr.mxu0 0.0
    %3343 = vmatpush1.msra.mxu0 0.0
    %3344 = vmatprep.mubr.f32.mxu0 0.0
    %v3345 = vand.u32 %v3179, 4294901760
    %3346 = vmatmul.mubr.f32.gmra.mrb[0].mxu0 %v3345
    %v3347 = vpop.f32.mrb[0].mxu0
    %v3348 = vadd.f32 %v3257, %v3347
    %v3349 = vpop.f32.mrb[0].mxu0
    %3350 = vdwg.mxu0
    %3351 = vmatprep.subr.mxu0 0.0
    %v3352 = vand.u32 %v28, 4294901760
    %v3353 = vsub.f32 %v28, %v3352
    %3354 = vmatpush1.msra.mxu0 %v3353
    %3355 = vmatprep.subr.mxu0 0.0
    %v3356 = vand.u32 %v29, 4294901760
    %v3357 = vsub.f32 %v29, %v3356
    %3358 = vmatpush1.msra.mxu0 %v3357
    %3359 = vmatprep.subr.mxu0 0.0
    %v3360 = vand.u32 %v30, 4294901760
    %v3361 = vsub.f32 %v30, %v3360
    %3362 = vmatpush1.msra.mxu0 %v3361
    %3363 = vmatprep.subr.mxu0 0.0
    %v3364 = vand.u32 %v31, 4294901760
    %v3365 = vsub.f32 %v31, %v3364
    %3366 = vmatpush1.msra.mxu0 %v3365
    %3367 = vmatprep.subr.mxu0 0.0
    %3368 = vmatpush1.msra.mxu0 0.0
    %3369 = vmatprep.subr.mxu0 0.0
    %3370 = vmatpush1.msra.mxu0 0.0
    %3371 = vmatprep.subr.mxu0 0.0
    %3372 = vmatpush1.msra.mxu0 0.0
    %3373 = vmatprep.subr.mxu0 0.0
    %3374 = vmatpush1.msra.mxu0 0.0
    %3375 = vmatprep.subr.mxu0 0.0
    %3376 = vmatpush1.msra.mxu0 0.0
    %3377 = vmatprep.subr.mxu0 0.0
    %3378 = vmatpush1.msra.mxu0 0.0
    %3379 = vmatprep.subr.mxu0 0.0
    %3380 = vmatpush1.msra.mxu0 0.0
    %3381 = vmatprep.subr.mxu0 0.0
    %3382 = vmatpush1.msra.mxu0 0.0
    %3383 = vmatprep.subr.mxu0 0.0
    %3384 = vmatpush1.msra.mxu0 0.0
    %3385 = vmatprep.subr.mxu0 0.0
    %3386 = vmatpush1.msra.mxu0 0.0
    %3387 = vmatprep.subr.mxu0 0.0
    %3388 = vmatpush1.msra.mxu0 0.0
    %3389 = vmatprep.subr.mxu0 0.0
    %3390 = vmatpush1.msra.mxu0 0.0
    %3391 = vmatprep.subr.mxu0 0.0
    %3392 = vmatpush1.msra.mxu0 0.0
    %3393 = vmatprep.subr.mxu0 0.0
    %3394 = vmatpush1.msra.mxu0 0.0
    %3395 = vmatprep.subr.mxu0 0.0
    %3396 = vmatpush1.msra.mxu0 0.0
    %3397 = vmatprep.subr.mxu0 0.0
    %3398 = vmatpush1.msra.mxu0 0.0
    %3399 = vmatprep.subr.mxu0 0.0
    %3400 = vmatpush1.msra.mxu0 0.0
    %3401 = vmatprep.subr.mxu0 0.0
    %3402 = vmatpush1.msra.mxu0 0.0
    %3403 = vmatprep.subr.mxu0 0.0
    %3404 = vmatpush1.msra.mxu0 0.0
    %3405 = vmatprep.subr.mxu0 0.0
    %3406 = vmatpush1.msra.mxu0 0.0
    %3407 = vmatprep.subr.mxu0 0.0
    %3408 = vmatpush1.msra.mxu0 0.0
    %3409 = vmatprep.subr.mxu0 0.0
    %3410 = vmatpush1.msra.mxu0 0.0
    %3411 = vmatprep.subr.mxu0 0.0
    %3412 = vmatpush1.msra.mxu0 0.0
    %3413 = vmatprep.subr.mxu0 0.0
    %3414 = vmatpush1.msra.mxu0 0.0
    %3415 = vmatprep.subr.mxu0 0.0
    %3416 = vmatpush1.msra.mxu0 0.0
    %3417 = vmatprep.subr.mxu0 0.0
    %3418 = vmatpush1.msra.mxu0 0.0
    %3419 = vmatprep.subr.mxu0 0.0
    %3420 = vmatpush1.msra.mxu0 0.0
    %3421 = vmatprep.subr.mxu0 0.0
    %3422 = vmatpush1.msra.mxu0 0.0
    %3423 = vmatprep.mubr.f32.mxu0 0.0
    %v3424 = vand.u32 %v3179, 4294901760
    %v3425 = vsub.f32 %v3179, %v3424
    %3426 = vmatmul.mubr.f32.gmra.mrb[0].mxu0 %v3425
    %v3427 = vpop.f32.mrb[0].mxu0
    %v3428 = vadd.f32 %v3348, %v3427
    %v3429 = vpop.f32.mrb[0].mxu0
    %3430 = vdwg.mxu0
    %3431 = vmatprep.subr.mxu0 0.0
    %v3432 = vand.u32 %v28, 4294901760
    %3433 = vmatpush1.msra.mxu0 %v3432
    %3434 = vmatprep.subr.mxu0 0.0
    %v3435 = vand.u32 %v29, 4294901760
    %3436 = vmatpush1.msra.mxu0 %v3435
    %3437 = vmatprep.subr.mxu0 0.0
    %v3438 = vand.u32 %v30, 4294901760
    %3439 = vmatpush1.msra.mxu0 %v3438
    %3440 = vmatprep.subr.mxu0 0.0
    %v3441 = vand.u32 %v31, 4294901760
    %3442 = vmatpush1.msra.mxu0 %v3441
    %3443 = vmatprep.subr.mxu0 0.0
    %3444 = vmatpush1.msra.mxu0 0.0
    %3445 = vmatprep.subr.mxu0 0.0
    %3446 = vmatpush1.msra.mxu0 0.0
    %3447 = vmatprep.subr.mxu0 0.0
    %3448 = vmatpush1.msra.mxu0 0.0
    %3449 = vmatprep.subr.mxu0 0.0
    %3450 = vmatpush1.msra.mxu0 0.0
    %3451 = vmatprep.subr.mxu0 0.0
    %3452 = vmatpush1.msra.mxu0 0.0
    %3453 = vmatprep.subr.mxu0 0.0
    %3454 = vmatpush1.msra.mxu0 0.0
    %3455 = vmatprep.subr.mxu0 0.0
    %3456 = vmatpush1.msra.mxu0 0.0
    %3457 = vmatprep.subr.mxu0 0.0
    %3458 = vmatpush1.msra.mxu0 0.0
    %3459 = vmatprep.subr.mxu0 0.0
    %3460 = vmatpush1.msra.mxu0 0.0
    %3461 = vmatprep.subr.mxu0 0.0
    %3462 = vmatpush1.msra.mxu0 0.0
    %3463 = vmatprep.subr.mxu0 0.0
    %3464 = vmatpush1.msra.mxu0 0.0
    %3465 = vmatprep.subr.mxu0 0.0
    %3466 = vmatpush1.msra.mxu0 0.0
    %3467 = vmatprep.subr.mxu0 0.0
    %3468 = vmatpush1.msra.mxu0 0.0
    %3469 = vmatprep.subr.mxu0 0.0
    %3470 = vmatpush1.msra.mxu0 0.0
    %3471 = vmatprep.subr.mxu0 0.0
    %3472 = vmatpush1.msra.mxu0 0.0
    %3473 = vmatprep.subr.mxu0 0.0
    %3474 = vmatpush1.msra.mxu0 0.0
    %3475 = vmatprep.subr.mxu0 0.0
    %3476 = vmatpush1.msra.mxu0 0.0
    %3477 = vmatprep.subr.mxu0 0.0
    %3478 = vmatpush1.msra.mxu0 0.0
    %3479 = vmatprep.subr.mxu0 0.0
    %3480 = vmatpush1.msra.mxu0 0.0
    %3481 = vmatprep.subr.mxu0 0.0
    %3482 = vmatpush1.msra.mxu0 0.0
    %3483 = vmatprep.subr.mxu0 0.0
    %3484 = vmatpush1.msra.mxu0 0.0
    %3485 = vmatprep.subr.mxu0 0.0
    %3486 = vmatpush1.msra.mxu0 0.0
    %3487 = vmatprep.subr.mxu0 0.0
    %3488 = vmatpush1.msra.mxu0 0.0
    %3489 = vmatprep.subr.mxu0 0.0
    %3490 = vmatpush1.msra.mxu0 0.0
    %3491 = vmatprep.subr.mxu0 0.0
    %3492 = vmatpush1.msra.mxu0 0.0
    %3493 = vmatprep.subr.mxu0 0.0
    %3494 = vmatpush1.msra.mxu0 0.0
    %3495 = vmatprep.subr.mxu0 0.0
    %3496 = vmatpush1.msra.mxu0 0.0
    %3497 = vmatprep.subr.mxu0 0.0
    %3498 = vmatpush1.msra.mxu0 0.0
    %3499 = vmatprep.mubr.f32.mxu0 0.0
    %v3500 = vand.u32 %v3179, 4294901760
    %v3501 = vsub.f32 %v3179, %v3500
    %v3502 = vand.u32 %v3501, 4294901760
    %3503 = vmatmul.mubr.f32.gmra.mrb[0].mxu0 %v3502
    %v3504 = vpop.f32.mrb[0].mxu0
    %v3505 = vadd.f32 %v3428, %v3504
    %v3506 = vpop.f32.mrb[0].mxu0
    %3507 = vdwg.mxu0
    %3508 = vmatprep.subr.mxu0 0.0
    %v3509 = vand.u32 %v28, 4294901760
    %v3510 = vsub.f32 %v28, %v3509
    %v3511 = vand.u32 %v3510, 4294901760
    %3512 = vmatpush1.msra.mxu0 %v3511
    %3513 = vmatprep.subr.mxu0 0.0
    %v3514 = vand.u32 %v29, 4294901760
    %v3515 = vsub.f32 %v29, %v3514
    %v3516 = vand.u32 %v3515, 4294901760
    %3517 = vmatpush1.msra.mxu0 %v3516
    %3518 = vmatprep.subr.mxu0 0.0
    %v3519 = vand.u32 %v30, 4294901760
    %v3520 = vsub.f32 %v30, %v3519
    %v3521 = vand.u32 %v3520, 4294901760
    %3522 = vmatpush1.msra.mxu0 %v3521
    %3523 = vmatprep.subr.mxu0 0.0
    %v3524 = vand.u32 %v31, 4294901760
    %v3525 = vsub.f32 %v31, %v3524
    %v3526 = vand.u32 %v3525, 4294901760
    %3527 = vmatpush1.msra.mxu0 %v3526
    %3528 = vmatprep.subr.mxu0 0.0
    %3529 = vmatpush1.msra.mxu0 0.0
    %3530 = vmatprep.subr.mxu0 0.0
    %3531 = vmatpush1.msra.mxu0 0.0
    %3532 = vmatprep.subr.mxu0 0.0
    %3533 = vmatpush1.msra.mxu0 0.0
    %3534 = vmatprep.subr.mxu0 0.0
    %3535 = vmatpush1.msra.mxu0 0.0
    %3536 = vmatprep.subr.mxu0 0.0
    %3537 = vmatpush1.msra.mxu0 0.0
    %3538 = vmatprep.subr.mxu0 0.0
    %3539 = vmatpush1.msra.mxu0 0.0
    %3540 = vmatprep.subr.mxu0 0.0
    %3541 = vmatpush1.msra.mxu0 0.0
    %3542 = vmatprep.subr.mxu0 0.0
    %3543 = vmatpush1.msra.mxu0 0.0
    %3544 = vmatprep.subr.mxu0 0.0
    %3545 = vmatpush1.msra.mxu0 0.0
    %3546 = vmatprep.subr.mxu0 0.0
    %3547 = vmatpush1.msra.mxu0 0.0
    %3548 = vmatprep.subr.mxu0 0.0
    %3549 = vmatpush1.msra.mxu0 0.0
    %3550 = vmatprep.subr.mxu0 0.0
    %3551 = vmatpush1.msra.mxu0 0.0
    %3552 = vmatprep.subr.mxu0 0.0
    %3553 = vmatpush1.msra.mxu0 0.0
    %3554 = vmatprep.subr.mxu0 0.0
    %3555 = vmatpush1.msra.mxu0 0.0
    %3556 = vmatprep.subr.mxu0 0.0
    %3557 = vmatpush1.msra.mxu0 0.0
    %3558 = vmatprep.subr.mxu0 0.0
    %3559 = vmatpush1.msra.mxu0 0.0
    %3560 = vmatprep.subr.mxu0 0.0
    %3561 = vmatpush1.msra.mxu0 0.0
    %3562 = vmatprep.subr.mxu0 0.0
    %3563 = vmatpush1.msra.mxu0 0.0
    %3564 = vmatprep.subr.mxu0 0.0
    %3565 = vmatpush1.msra.mxu0 0.0
    %3566 = vmatprep.subr.mxu0 0.0
    %3567 = vmatpush1.msra.mxu0 0.0
    %3568 = vmatprep.subr.mxu0 0.0
    %3569 = vmatpush1.msra.mxu0 0.0
    %3570 = vmatprep.subr.mxu0 0.0
    %3571 = vmatpush1.msra.mxu0 0.0
    %3572 = vmatprep.subr.mxu0 0.0
    %3573 = vmatpush1.msra.mxu0 0.0
    %3574 = vmatprep.subr.mxu0 0.0
    %3575 = vmatpush1.msra.mxu0 0.0
    %3576 = vmatprep.subr.mxu0 0.0
    %3577 = vmatpush1.msra.mxu0 0.0
    %3578 = vmatprep.subr.mxu0 0.0
    %3579 = vmatpush1.msra.mxu0 0.0
    %3580 = vmatprep.subr.mxu0 0.0
    %3581 = vmatpush1.msra.mxu0 0.0
    %3582 = vmatprep.subr.mxu0 0.0
    %3583 = vmatpush1.msra.mxu0 0.0
    %3584 = vmatprep.mubr.f32.mxu0 0.0
    %v3585 = vand.u32 %v3179, 4294901760
    %3586 = vmatmul.mubr.f32.gmra.mrb[0].mxu0 %v3585
    %v3587 = vpop.f32.mrb[0].mxu0
    %v3588 = vadd.f32 %v3505, %v3587
    %v3589 = vpop.f32.mrb[0].mxu0
    %3590 = vdwg.mxu0
    %3591 = vmatprep.subr.mxu0 0.0
    %v3592 = vand.u32 %v28, 4294901760
    %3593 = vmatpush1.msra.mxu0 %v3592
    %3594 = vmatprep.subr.mxu0 0.0
    %v3595 = vand.u32 %v29, 4294901760
    %3596 = vmatpush1.msra.mxu0 %v3595
    %3597 = vmatprep.subr.mxu0 0.0
    %v3598 = vand.u32 %v30, 4294901760
    %3599 = vmatpush1.msra.mxu0 %v3598
    %3600 = vmatprep.subr.mxu0 0.0
    %v3601 = vand.u32 %v31, 4294901760
    %3602 = vmatpush1.msra.mxu0 %v3601
    %3603 = vmatprep.subr.mxu0 0.0
    %3604 = vmatpush1.msra.mxu0 0.0
    %3605 = vmatprep.subr.mxu0 0.0
    %3606 = vmatpush1.msra.mxu0 0.0
    %3607 = vmatprep.subr.mxu0 0.0
    %3608 = vmatpush1.msra.mxu0 0.0
    %3609 = vmatprep.subr.mxu0 0.0
    %3610 = vmatpush1.msra.mxu0 0.0
    %3611 = vmatprep.subr.mxu0 0.0
    %3612 = vmatpush1.msra.mxu0 0.0
    %3613 = vmatprep.subr.mxu0 0.0
    %3614 = vmatpush1.msra.mxu0 0.0
    %3615 = vmatprep.subr.mxu0 0.0
    %3616 = vmatpush1.msra.mxu0 0.0
    %3617 = vmatprep.subr.mxu0 0.0
    %3618 = vmatpush1.msra.mxu0 0.0
    %3619 = vmatprep.subr.mxu0 0.0
    %3620 = vmatpush1.msra.mxu0 0.0
    %3621 = vmatprep.subr.mxu0 0.0
    %3622 = vmatpush1.msra.mxu0 0.0
    %3623 = vmatprep.subr.mxu0 0.0
    %3624 = vmatpush1.msra.mxu0 0.0
    %3625 = vmatprep.subr.mxu0 0.0
    %3626 = vmatpush1.msra.mxu0 0.0
    %3627 = vmatprep.subr.mxu0 0.0
    %3628 = vmatpush1.msra.mxu0 0.0
    %3629 = vmatprep.subr.mxu0 0.0
    %3630 = vmatpush1.msra.mxu0 0.0
    %3631 = vmatprep.subr.mxu0 0.0
    %3632 = vmatpush1.msra.mxu0 0.0
    %3633 = vmatprep.subr.mxu0 0.0
    %3634 = vmatpush1.msra.mxu0 0.0
    %3635 = vmatprep.subr.mxu0 0.0
    %3636 = vmatpush1.msra.mxu0 0.0
    %3637 = vmatprep.subr.mxu0 0.0
    %3638 = vmatpush1.msra.mxu0 0.0
    %3639 = vmatprep.subr.mxu0 0.0
    %3640 = vmatpush1.msra.mxu0 0.0
    %3641 = vmatprep.subr.mxu0 0.0
    %3642 = vmatpush1.msra.mxu0 0.0
    %3643 = vmatprep.subr.mxu0 0.0
    %3644 = vmatpush1.msra.mxu0 0.0
    %3645 = vmatprep.subr.mxu0 0.0
    %3646 = vmatpush1.msra.mxu0 0.0
    %3647 = vmatprep.subr.mxu0 0.0
    %3648 = vmatpush1.msra.mxu0 0.0
    %3649 = vmatprep.subr.mxu0 0.0
    %3650 = vmatpush1.msra.mxu0 0.0
    %3651 = vmatprep.subr.mxu0 0.0
    %3652 = vmatpush1.msra.mxu0 0.0
    %3653 = vmatprep.subr.mxu0 0.0
    %3654 = vmatpush1.msra.mxu0 0.0
    %3655 = vmatprep.subr.mxu0 0.0
    %3656 = vmatpush1.msra.mxu0 0.0
    %3657 = vmatprep.subr.mxu0 0.0
    %3658 = vmatpush1.msra.mxu0 0.0
    %3659 = vmatprep.mubr.f32.mxu0 0.0
    %v3660 = vand.u32 %v3179, 4294901760
    %3661 = vmatmul.mubr.f32.gmra.mrb[0].mxu0 %v3660
    %v3662 = vpop.f32.mrb[0].mxu0
    %v3663 = vadd.f32 %v3588, %v3662
    %v3664 = vpop.f32.mrb[0].mxu0
    %3665 = vdwg.mxu0
    %v3667 = vrot.slane %v3663, 4
    %v3669 = vadd.f32 %v540, %v3667
    %v3670 = vxor.u32 %v3669, 2147483648
    %v3671 = vmul.f32 %v3670, 1.442695
    %v3672 = vpow.pop %v3671
    %v3673 = vadd.f32 %v3672, 1.0
    %v3674 = vrcp.pop %v3673
    %v3675 = vmul.f32 1.0, %v3674
    %v3676 = vmul.f32 %v3675, 2.0
    %v3677 = vsub.f32 %v3676, 1.0
    %v3679 = vrot.slane %v3168, 6
    %v3681 = vmul.f32 %v3675, %v3679
    %3683 = vrot.lane.b32.xlu0 %v3677, 64
    %v3684 = vpop.permute.xlu0 %3683
    %v3686 = vmul.f32 %v3675, %v3684
    %3688 = vrot.lane.b32.xlu0 %v3686, 32
    %v3689 = vpop.permute.xlu0 %3688
    %v3691 = vadd.f32 %v3681, %v3689
    %v3692 = vtanh.pop %v3691
    %3694 = vrot.lane.b32.xlu0 %v3692, 64
    %v3695 = vpop.permute.xlu0 %3694
    %v3697 = vmul.f32 %v3675, %v3695
    %v3699 = vrot.slane %v3697, 4
    %3700 = vrot.lane.b32.xlu0 %v3699, 32
    %v3701 = vpop.permute.xlu0 %3700
    %v3702 = vsel %vm565, %v3701, 0
    %3704 = vmatprep.subr.mxu0 0.0
    %v3705 = vand.u32 %v28, 4294901760
    %3706 = vmatpush1.msra.mxu0 %v3705
    %3707 = vmatprep.subr.mxu0 0.0
    %v3708 = vand.u32 %v29, 4294901760
    %3709 = vmatpush1.msra.mxu0 %v3708
    %3710 = vmatprep.subr.mxu0 0.0
    %v3711 = vand.u32 %v30, 4294901760
    %3712 = vmatpush1.msra.mxu0 %v3711
    %3713 = vmatprep.subr.mxu0 0.0
    %v3714 = vand.u32 %v31, 4294901760
    %3715 = vmatpush1.msra.mxu0 %v3714
    %3716 = vmatprep.subr.mxu0 0.0
    %3717 = vmatpush1.msra.mxu0 0.0
    %3718 = vmatprep.subr.mxu0 0.0
    %3719 = vmatpush1.msra.mxu0 0.0
    %3720 = vmatprep.subr.mxu0 0.0
    %3721 = vmatpush1.msra.mxu0 0.0
    %3722 = vmatprep.subr.mxu0 0.0
    %3723 = vmatpush1.msra.mxu0 0.0
    %3724 = vmatprep.subr.mxu0 0.0
    %3725 = vmatpush1.msra.mxu0 0.0
    %3726 = vmatprep.subr.mxu0 0.0
    %3727 = vmatpush1.msra.mxu0 0.0
    %3728 = vmatprep.subr.mxu0 0.0
    %3729 = vmatpush1.msra.mxu0 0.0
    %3730 = vmatprep.subr.mxu0 0.0
    %3731 = vmatpush1.msra.mxu0 0.0
    %3732 = vmatprep.subr.mxu0 0.0
    %3733 = vmatpush1.msra.mxu0 0.0
    %3734 = vmatprep.subr.mxu0 0.0
    %3735 = vmatpush1.msra.mxu0 0.0
    %3736 = vmatprep.subr.mxu0 0.0
    %3737 = vmatpush1.msra.mxu0 0.0
    %3738 = vmatprep.subr.mxu0 0.0
    %3739 = vmatpush1.msra.mxu0 0.0
    %3740 = vmatprep.subr.mxu0 0.0
    %3741 = vmatpush1.msra.mxu0 0.0
    %3742 = vmatprep.subr.mxu0 0.0
    %3743 = vmatpush1.msra.mxu0 0.0
    %3744 = vmatprep.subr.mxu0 0.0
    %3745 = vmatpush1.msra.mxu0 0.0
    %3746 = vmatprep.subr.mxu0 0.0
    %3747 = vmatpush1.msra.mxu0 0.0
    %3748 = vmatprep.subr.mxu0 0.0
    %3749 = vmatpush1.msra.mxu0 0.0
    %3750 = vmatprep.subr.mxu0 0.0
    %3751 = vmatpush1.msra.mxu0 0.0
    %3752 = vmatprep.subr.mxu0 0.0
    %3753 = vmatpush1.msra.mxu0 0.0
    %3754 = vmatprep.subr.mxu0 0.0
    %3755 = vmatpush1.msra.mxu0 0.0
    %3756 = vmatprep.subr.mxu0 0.0
    %3757 = vmatpush1.msra.mxu0 0.0
    %3758 = vmatprep.subr.mxu0 0.0
    %3759 = vmatpush1.msra.mxu0 0.0
    %3760 = vmatprep.subr.mxu0 0.0
    %3761 = vmatpush1.msra.mxu0 0.0
    %3762 = vmatprep.subr.mxu0 0.0
    %3763 = vmatpush1.msra.mxu0 0.0
    %3764 = vmatprep.subr.mxu0 0.0
    %3765 = vmatpush1.msra.mxu0 0.0
    %3766 = vmatprep.subr.mxu0 0.0
    %3767 = vmatpush1.msra.mxu0 0.0
    %3768 = vmatprep.subr.mxu0 0.0
    %3769 = vmatpush1.msra.mxu0 0.0
    %3770 = vmatprep.subr.mxu0 0.0
    %3771 = vmatpush1.msra.mxu0 0.0
    %3772 = vmatprep.mubr.f32.mxu0 0.0
    %v3773 = vand.u32 %v3702, 4294901760
    %v3774 = vsub.f32 %v3702, %v3773
    %v3775 = vand.u32 %v3774, 4294901760
    %v3776 = vsub.f32 %v3774, %v3775
    %v3777 = vand.u32 %v3776, 4294901760
    %3778 = vmatmul.mubr.f32.gmra.mrb[0].mxu0 %v3777
    %v3779 = vpop.f32.mrb[0].mxu0
    %v3780 = vadd.f32 0.0, %v3779
    %v3781 = vpop.f32.mrb[0].mxu0
    %3782 = vdwg.mxu0
    %3783 = vmatprep.subr.mxu0 0.0
    %v3784 = vand.u32 %v28, 4294901760
    %v3785 = vsub.f32 %v28, %v3784
    %v3786 = vand.u32 %v3785, 4294901760
    %v3787 = vsub.f32 %v3785, %v3786
    %v3788 = vand.u32 %v3787, 4294901760
    %3789 = vmatpush1.msra.mxu0 %v3788
    %3790 = vmatprep.subr.mxu0 0.0
    %v3791 = vand.u32 %v29, 4294901760
    %v3792 = vsub.f32 %v29, %v3791
    %v3793 = vand.u32 %v3792, 4294901760
    %v3794 = vsub.f32 %v3792, %v3793
    %v3795 = vand.u32 %v3794, 4294901760
    %3796 = vmatpush1.msra.mxu0 %v3795
    %3797 = vmatprep.subr.mxu0 0.0
    %v3798 = vand.u32 %v30, 4294901760
    %v3799 = vsub.f32 %v30, %v3798
    %v3800 = vand.u32 %v3799, 4294901760
    %v3801 = vsub.f32 %v3799, %v3800
    %v3802 = vand.u32 %v3801, 4294901760
    %3803 = vmatpush1.msra.mxu0 %v3802
    %3804 = vmatprep.subr.mxu0 0.0
    %v3805 = vand.u32 %v31, 4294901760
    %v3806 = vsub.f32 %v31, %v3805
    %v3807 = vand.u32 %v3806, 4294901760
    %v3808 = vsub.f32 %v3806, %v3807
    %v3809 = vand.u32 %v3808, 4294901760
    %3810 = vmatpush1.msra.mxu0 %v3809
    %3811 = vmatprep.subr.mxu0 0.0
    %3812 = vmatpush1.msra.mxu0 0.0
    %3813 = vmatprep.subr.mxu0 0.0
    %3814 = vmatpush1.msra.mxu0 0.0
    %3815 = vmatprep.subr.mxu0 0.0
    %3816 = vmatpush1.msra.mxu0 0.0
    %3817 = vmatprep.subr.mxu0 0.0
    %3818 = vmatpush1.msra.mxu0 0.0
    %3819 = vmatprep.subr.mxu0 0.0
    %3820 = vmatpush1.msra.mxu0 0.0
    %3821 = vmatprep.subr.mxu0 0.0
    %3822 = vmatpush1.msra.mxu0 0.0
    %3823 = vmatprep.subr.mxu0 0.0
    %3824 = vmatpush1.msra.mxu0 0.0
    %3825 = vmatprep.subr.mxu0 0.0
    %3826 = vmatpush1.msra.mxu0 0.0
    %3827 = vmatprep.subr.mxu0 0.0
    %3828 = vmatpush1.msra.mxu0 0.0
    %3829 = vmatprep.subr.mxu0 0.0
    %3830 = vmatpush1.msra.mxu0 0.0
    %3831 = vmatprep.subr.mxu0 0.0
    %3832 = vmatpush1.msra.mxu0 0.0
    %3833 = vmatprep.subr.mxu0 0.0
    %3834 = vmatpush1.msra.mxu0 0.0
    %3835 = vmatprep.subr.mxu0 0.0
    %3836 = vmatpush1.msra.mxu0 0.0
    %3837 = vmatprep.subr.mxu0 0.0
    %3838 = vmatpush1.msra.mxu0 0.0
    %3839 = vmatprep.subr.mxu0 0.0
    %3840 = vmatpush1.msra.mxu0 0.0
    %3841 = vmatprep.subr.mxu0 0.0
    %3842 = vmatpush1.msra.mxu0 0.0
    %3843 = vmatprep.subr.mxu0 0.0
    %3844 = vmatpush1.msra.mxu0 0.0
    %3845 = vmatprep.subr.mxu0 0.0
    %3846 = vmatpush1.msra.mxu0 0.0
    %3847 = vmatprep.subr.mxu0 0.0
    %3848 = vmatpush1.msra.mxu0 0.0
    %3849 = vmatprep.subr.mxu0 0.0
    %3850 = vmatpush1.msra.mxu0 0.0
    %3851 = vmatprep.subr.mxu0 0.0
    %3852 = vmatpush1.msra.mxu0 0.0
    %3853 = vmatprep.subr.mxu0 0.0
    %3854 = vmatpush1.msra.mxu0 0.0
    %3855 = vmatprep.subr.mxu0 0.0
    %3856 = vmatpush1.msra.mxu0 0.0
    %3857 = vmatprep.subr.mxu0 0.0
    %3858 = vmatpush1.msra.mxu0 0.0
    %3859 = vmatprep.subr.mxu0 0.0
    %3860 = vmatpush1.msra.mxu0 0.0
    %3861 = vmatprep.subr.mxu0 0.0
    %3862 = vmatpush1.msra.mxu0 0.0
    %3863 = vmatprep.subr.mxu0 0.0
    %3864 = vmatpush1.msra.mxu0 0.0
    %3865 = vmatprep.subr.mxu0 0.0
    %3866 = vmatpush1.msra.mxu0 0.0
    %3867 = vmatprep.mubr.f32.mxu0 0.0
    %v3868 = vand.u32 %v3702, 4294901760
    %3869 = vmatmul.mubr.f32.gmra.mrb[0].mxu0 %v3868
    %v3870 = vpop.f32.mrb[0].mxu0
    %v3871 = vadd.f32 %v3780, %v3870
    %v3872 = vpop.f32.mrb[0].mxu0
    %3873 = vdwg.mxu0
    %3874 = vmatprep.subr.mxu0 0.0
    %v3875 = vand.u32 %v28, 4294901760
    %v3876 = vsub.f32 %v28, %v3875
    %3877 = vmatpush1.msra.mxu0 %v3876
    %3878 = vmatprep.subr.mxu0 0.0
    %v3879 = vand.u32 %v29, 4294901760
    %v3880 = vsub.f32 %v29, %v3879
    %3881 = vmatpush1.msra.mxu0 %v3880
    %3882 = vmatprep.subr.mxu0 0.0
    %v3883 = vand.u32 %v30, 4294901760
    %v3884 = vsub.f32 %v30, %v3883
    %3885 = vmatpush1.msra.mxu0 %v3884
    %3886 = vmatprep.subr.mxu0 0.0
    %v3887 = vand.u32 %v31, 4294901760
    %v3888 = vsub.f32 %v31, %v3887
    %3889 = vmatpush1.msra.mxu0 %v3888
    %3890 = vmatprep.subr.mxu0 0.0
    %3891 = vmatpush1.msra.mxu0 0.0
    %3892 = vmatprep.subr.mxu0 0.0
    %3893 = vmatpush1.msra.mxu0 0.0
    %3894 = vmatprep.subr.mxu0 0.0
    %3895 = vmatpush1.msra.mxu0 0.0
    %3896 = vmatprep.subr.mxu0 0.0
    %3897 = vmatpush1.msra.mxu0 0.0
    %3898 = vmatprep.subr.mxu0 0.0
    %3899 = vmatpush1.msra.mxu0 0.0
    %3900 = vmatprep.subr.mxu0 0.0
    %3901 = vmatpush1.msra.mxu0 0.0
    %3902 = vmatprep.subr.mxu0 0.0
    %3903 = vmatpush1.msra.mxu0 0.0
    %3904 = vmatprep.subr.mxu0 0.0
    %3905 = vmatpush1.msra.mxu0 0.0
    %3906 = vmatprep.subr.mxu0 0.0
    %3907 = vmatpush1.msra.mxu0 0.0
    %3908 = vmatprep.subr.mxu0 0.0
    %3909 = vmatpush1.msra.mxu0 0.0
    %3910 = vmatprep.subr.mxu0 0.0
    %3911 = vmatpush1.msra.mxu0 0.0
    %3912 = vmatprep.subr.mxu0 0.0
    %3913 = vmatpush1.msra.mxu0 0.0
    %3914 = vmatprep.subr.mxu0 0.0
    %3915 = vmatpush1.msra.mxu0 0.0
    %3916 = vmatprep.subr.mxu0 0.0
    %3917 = vmatpush1.msra.mxu0 0.0
    %3918 = vmatprep.subr.mxu0 0.0
    %3919 = vmatpush1.msra.mxu0 0.0
    %3920 = vmatprep.subr.mxu0 0.0
    %3921 = vmatpush1.msra.mxu0 0.0
    %3922 = vmatprep.subr.mxu0 0.0
    %3923 = vmatpush1.msra.mxu0 0.0
    %3924 = vmatprep.subr.mxu0 0.0
    %3925 = vmatpush1.msra.mxu0 0.0
    %3926 = vmatprep.subr.mxu0 0.0
    %3927 = vmatpush1.msra.mxu0 0.0
    %3928 = vmatprep.subr.mxu0 0.0
    %3929 = vmatpush1.msra.mxu0 0.0
    %3930 = vmatprep.subr.mxu0 0.0
    %3931 = vmatpush1.msra.mxu0 0.0
    %3932 = vmatprep.subr.mxu0 0.0
    %3933 = vmatpush1.msra.mxu0 0.0
    %3934 = vmatprep.subr.mxu0 0.0
    %3935 = vmatpush1.msra.mxu0 0.0
    %3936 = vmatprep.subr.mxu0 0.0
    %3937 = vmatpush1.msra.mxu0 0.0
    %3938 = vmatprep.subr.mxu0 0.0
    %3939 = vmatpush1.msra.mxu0 0.0
    %3940 = vmatprep.subr.mxu0 0.0
    %3941 = vmatpush1.msra.mxu0 0.0
    %3942 = vmatprep.subr.mxu0 0.0
    %3943 = vmatpush1.msra.mxu0 0.0
    %3944 = vmatprep.subr.mxu0 0.0
    %3945 = vmatpush1.msra.mxu0 0.0
    %3946 = vmatprep.mubr.f32.mxu0 0.0
    %v3947 = vand.u32 %v3702, 4294901760
    %v3948 = vsub.f32 %v3702, %v3947
    %3949 = vmatmul.mubr.f32.gmra.mrb[0].mxu0 %v3948
    %v3950 = vpop.f32.mrb[0].mxu0
    %v3951 = vadd.f32 %v3871, %v3950
    %v3952 = vpop.f32.mrb[0].mxu0
    %3953 = vdwg.mxu0
    %3954 = vmatprep.subr.mxu0 0.0
    %v3955 = vand.u32 %v28, 4294901760
    %3956 = vmatpush1.msra.mxu0 %v3955
    %3957 = vmatprep.subr.mxu0 0.0
    %v3958 = vand.u32 %v29, 4294901760
    %3959 = vmatpush1.msra.mxu0 %v3958
    %3960 = vmatprep.subr.mxu0 0.0
    %v3961 = vand.u32 %v30, 4294901760
    %3962 = vmatpush1.msra.mxu0 %v3961
    %3963 = vmatprep.subr.mxu0 0.0
    %v3964 = vand.u32 %v31, 4294901760
    %3965 = vmatpush1.msra.mxu0 %v3964
    %3966 = vmatprep.subr.mxu0 0.0
    %3967 = vmatpush1.msra.mxu0 0.0
    %3968 = vmatprep.subr.mxu0 0.0
    %3969 = vmatpush1.msra.mxu0 0.0
    %3970 = vmatprep.subr.mxu0 0.0
    %3971 = vmatpush1.msra.mxu0 0.0
    %3972 = vmatprep.subr.mxu0 0.0
    %3973 = vmatpush1.msra.mxu0 0.0
    %3974 = vmatprep.subr.mxu0 0.0
    %3975 = vmatpush1.msra.mxu0 0.0
    %3976 = vmatprep.subr.mxu0 0.0
    %3977 = vmatpush1.msra.mxu0 0.0
    %3978 = vmatprep.subr.mxu0 0.0
    %3979 = vmatpush1.msra.mxu0 0.0
    %3980 = vmatprep.subr.mxu0 0.0
    %3981 = vmatpush1.msra.mxu0 0.0
    %3982 = vmatprep.subr.mxu0 0.0
    %3983 = vmatpush1.msra.mxu0 0.0
    %3984 = vmatprep.subr.mxu0 0.0
    %3985 = vmatpush1.msra.mxu0 0.0
    %3986 = vmatprep.subr.mxu0 0.0
    %3987 = vmatpush1.msra.mxu0 0.0
    %3988 = vmatprep.subr.mxu0 0.0
    %3989 = vmatpush1.msra.mxu0 0.0
    %3990 = vmatprep.subr.mxu0 0.0
    %3991 = vmatpush1.msra.mxu0 0.0
    %3992 = vmatprep.subr.mxu0 0.0
    %3993 = vmatpush1.msra.mxu0 0.0
    %3994 = vmatprep.subr.mxu0 0.0
    %3995 = vmatpush1.msra.mxu0 0.0
    %3996 = vmatprep.subr.mxu0 0.0
    %3997 = vmatpush1.msra.mxu0 0.0
    %3998 = vmatprep.subr.mxu0 0.0
    %3999 = vmatpush1.msra.mxu0 0.0
    %4000 = vmatprep.subr.mxu0 0.0
    %4001 = vmatpush1.msra.mxu0 0.0
    %4002 = vmatprep.subr.mxu0 0.0
    %4003 = vmatpush1.msra.mxu0 0.0
    %4004 = vmatprep.subr.mxu0 0.0
    %4005 = vmatpush1.msra.mxu0 0.0
    %4006 = vmatprep.subr.mxu0 0.0
    %4007 = vmatpush1.msra.mxu0 0.0
    %4008 = vmatprep.subr.mxu0 0.0
    %4009 = vmatpush1.msra.mxu0 0.0
    %4010 = vmatprep.subr.mxu0 0.0
    %4011 = vmatpush1.msra.mxu0 0.0
    %4012 = vmatprep.subr.mxu0 0.0
    %4013 = vmatpush1.msra.mxu0 0.0
    %4014 = vmatprep.subr.mxu0 0.0
    %4015 = vmatpush1.msra.mxu0 0.0
    %4016 = vmatprep.subr.mxu0 0.0
    %4017 = vmatpush1.msra.mxu0 0.0
    %4018 = vmatprep.subr.mxu0 0.0
    %4019 = vmatpush1.msra.mxu0 0.0
    %4020 = vmatprep.subr.mxu0 0.0
    %4021 = vmatpush1.msra.mxu0 0.0
    %4022 = vmatprep.mubr.f32.mxu0 0.0
    %v4023 = vand.u32 %v3702, 4294901760
    %v4024 = vsub.f32 %v3702, %v4023
    %v4025 = vand.u32 %v4024, 4294901760
    %4026 = vmatmul.mubr.f32.gmra.mrb[0].mxu0 %v4025
    %v4027 = vpop.f32.mrb[0].mxu0
    %v4028 = vadd.f32 %v3951, %v4027
    %v4029 = vpop.f32.mrb[0].mxu0
    %4030 = vdwg.mxu0
    %4031 = vmatprep.subr.mxu0 0.0
    %v4032 = vand.u32 %v28, 4294901760
    %v4033 = vsub.f32 %v28, %v4032
    %v4034 = vand.u32 %v4033, 4294901760
    %4035 = vmatpush1.msra.mxu0 %v4034
    %4036 = vmatprep.subr.mxu0 0.0
    %v4037 = vand.u32 %v29, 4294901760
    %v4038 = vsub.f32 %v29, %v4037
    %v4039 = vand.u32 %v4038, 4294901760
    %4040 = vmatpush1.msra.mxu0 %v4039
    %4041 = vmatprep.subr.mxu0 0.0
    %v4042 = vand.u32 %v30, 4294901760
    %v4043 = vsub.f32 %v30, %v4042
    %v4044 = vand.u32 %v4043, 4294901760
    %4045 = vmatpush1.msra.mxu0 %v4044
    %4046 = vmatprep.subr.mxu0 0.0
    %v4047 = vand.u32 %v31, 4294901760
    %v4048 = vsub.f32 %v31, %v4047
    %v4049 = vand.u32 %v4048, 4294901760
    %4050 = vmatpush1.msra.mxu0 %v4049
    %4051 = vmatprep.subr.mxu0 0.0
    %4052 = vmatpush1.msra.mxu0 0.0
    %4053 = vmatprep.subr.mxu0 0.0
    %4054 = vmatpush1.msra.mxu0 0.0
    %4055 = vmatprep.subr.mxu0 0.0
    %4056 = vmatpush1.msra.mxu0 0.0
    %4057 = vmatprep.subr.mxu0 0.0
    %4058 = vmatpush1.msra.mxu0 0.0
    %4059 = vmatprep.subr.mxu0 0.0
    %4060 = vmatpush1.msra.mxu0 0.0
    %4061 = vmatprep.subr.mxu0 0.0
    %4062 = vmatpush1.msra.mxu0 0.0
    %4063 = vmatprep.subr.mxu0 0.0
    %4064 = vmatpush1.msra.mxu0 0.0
    %4065 = vmatprep.subr.mxu0 0.0
    %4066 = vmatpush1.msra.mxu0 0.0
    %4067 = vmatprep.subr.mxu0 0.0
    %4068 = vmatpush1.msra.mxu0 0.0
    %4069 = vmatprep.subr.mxu0 0.0
    %4070 = vmatpush1.msra.mxu0 0.0
    %4071 = vmatprep.subr.mxu0 0.0
    %4072 = vmatpush1.msra.mxu0 0.0
    %4073 = vmatprep.subr.mxu0 0.0
    %4074 = vmatpush1.msra.mxu0 0.0
    %4075 = vmatprep.subr.mxu0 0.0
    %4076 = vmatpush1.msra.mxu0 0.0
    %4077 = vmatprep.subr.mxu0 0.0
    %4078 = vmatpush1.msra.mxu0 0.0
    %4079 = vmatprep.subr.mxu0 0.0
    %4080 = vmatpush1.msra.mxu0 0.0
    %4081 = vmatprep.subr.mxu0 0.0
    %4082 = vmatpush1.msra.mxu0 0.0
    %4083 = vmatprep.subr.mxu0 0.0
    %4084 = vmatpush1.msra.mxu0 0.0
    %4085 = vmatprep.subr.mxu0 0.0
    %4086 = vmatpush1.msra.mxu0 0.0
    %4087 = vmatprep.subr.mxu0 0.0
    %4088 = vmatpush1.msra.mxu0 0.0
    %4089 = vmatprep.subr.mxu0 0.0
    %4090 = vmatpush1.msra.mxu0 0.0
    %4091 = vmatprep.subr.mxu0 0.0
    %4092 = vmatpush1.msra.mxu0 0.0
    %4093 = vmatprep.subr.mxu0 0.0
    %4094 = vmatpush1.msra.mxu0 0.0
    %4095 = vmatprep.subr.mxu0 0.0
    %4096 = vmatpush1.msra.mxu0 0.0
    %4097 = vmatprep.subr.mxu0 0.0
    %4098 = vmatpush1.msra.mxu0 0.0
    %4099 = vmatprep.subr.mxu0 0.0
    %4100 = vmatpush1.msra.mxu0 0.0
    %4101 = vmatprep.subr.mxu0 0.0
    %4102 = vmatpush1.msra.mxu0 0.0
    %4103 = vmatprep.subr.mxu0 0.0
    %4104 = vmatpush1.msra.mxu0 0.0
    %4105 = vmatprep.subr.mxu0 0.0
    %4106 = vmatpush1.msra.mxu0 0.0
    %4107 = vmatprep.mubr.f32.mxu0 0.0
    %v4108 = vand.u32 %v3702, 4294901760
    %4109 = vmatmul.mubr.f32.gmra.mrb[0].mxu0 %v4108
    %v4110 = vpop.f32.mrb[0].mxu0
    %v4111 = vadd.f32 %v4028, %v4110
    %v4112 = vpop.f32.mrb[0].mxu0
    %4113 = vdwg.mxu0
    %4114 = vmatprep.subr.mxu0 0.0
    %v4115 = vand.u32 %v28, 4294901760
    %4116 = vmatpush1.msra.mxu0 %v4115
    %4117 = vmatprep.subr.mxu0 0.0
    %v4118 = vand.u32 %v29, 4294901760
    %4119 = vmatpush1.msra.mxu0 %v4118
    %4120 = vmatprep.subr.mxu0 0.0
    %v4121 = vand.u32 %v30, 4294901760
    %4122 = vmatpush1.msra.mxu0 %v4121
    %4123 = vmatprep.subr.mxu0 0.0
    %v4124 = vand.u32 %v31, 4294901760
    %4125 = vmatpush1.msra.mxu0 %v4124
    %4126 = vmatprep.subr.mxu0 0.0
    %4127 = vmatpush1.msra.mxu0 0.0
    %4128 = vmatprep.subr.mxu0 0.0
    %4129 = vmatpush1.msra.mxu0 0.0
    %4130 = vmatprep.subr.mxu0 0.0
    %4131 = vmatpush1.msra.mxu0 0.0
    %4132 = vmatprep.subr.mxu0 0.0
    %4133 = vmatpush1.msra.mxu0 0.0
    %4134 = vmatprep.subr.mxu0 0.0
    %4135 = vmatpush1.msra.mxu0 0.0
    %4136 = vmatprep.subr.mxu0 0.0
    %4137 = vmatpush1.msra.mxu0 0.0
    %4138 = vmatprep.subr.mxu0 0.0
    %4139 = vmatpush1.msra.mxu0 0.0
    %4140 = vmatprep.subr.mxu0 0.0
    %4141 = vmatpush1.msra.mxu0 0.0
    %4142 = vmatprep.subr.mxu0 0.0
    %4143 = vmatpush1.msra.mxu0 0.0
    %4144 = vmatprep.subr.mxu0 0.0
    %4145 = vmatpush1.msra.mxu0 0.0
    %4146 = vmatprep.subr.mxu0 0.0
    %4147 = vmatpush1.msra.mxu0 0.0
    %4148 = vmatprep.subr.mxu0 0.0
    %4149 = vmatpush1.msra.mxu0 0.0
    %4150 = vmatprep.subr.mxu0 0.0
    %4151 = vmatpush1.msra.mxu0 0.0
    %4152 = vmatprep.subr.mxu0 0.0
    %4153 = vmatpush1.msra.mxu0 0.0
    %4154 = vmatprep.subr.mxu0 0.0
    %4155 = vmatpush1.msra.mxu0 0.0
    %4156 = vmatprep.subr.mxu0 0.0
    %4157 = vmatpush1.msra.mxu0 0.0
    %4158 = vmatprep.subr.mxu0 0.0
    %4159 = vmatpush1.msra.mxu0 0.0
    %4160 = vmatprep.subr.mxu0 0.0
    %4161 = vmatpush1.msra.mxu0 0.0
    %4162 = vmatprep.subr.mxu0 0.0
    %4163 = vmatpush1.msra.mxu0 0.0
    %4164 = vmatprep.subr.mxu0 0.0
    %4165 = vmatpush1.msra.mxu0 0.0
    %4166 = vmatprep.subr.mxu0 0.0
    %4167 = vmatpush1.msra.mxu0 0.0
    %4168 = vmatprep.subr.mxu0 0.0
    %4169 = vmatpush1.msra.mxu0 0.0
    %4170 = vmatprep.subr.mxu0 0.0
    %4171 = vmatpush1.msra.mxu0 0.0
    %4172 = vmatprep.subr.mxu0 0.0
    %4173 = vmatpush1.msra.mxu0 0.0
    %4174 = vmatprep.subr.mxu0 0.0
    %4175 = vmatpush1.msra.mxu0 0.0
    %4176 = vmatprep.subr.mxu0 0.0
    %4177 = vmatpush1.msra.mxu0 0.0
    %4178 = vmatprep.subr.mxu0 0.0
    %4179 = vmatpush1.msra.mxu0 0.0
    %4180 = vmatprep.subr.mxu0 0.0
    %4181 = vmatpush1.msra.mxu0 0.0
    %4182 = vmatprep.mubr.f32.mxu0 0.0
    %v4183 = vand.u32 %v3702, 4294901760
    %4184 = vmatmul.mubr.f32.gmra.mrb[0].mxu0 %v4183
    %v4185 = vpop.f32.mrb[0].mxu0
    %v4186 = vadd.f32 %v4111, %v4185
    %v4187 = vpop.f32.mrb[0].mxu0
    %4188 = vdwg.mxu0
    %v4190 = vrot.slane %v4186, 2
    %v4192 = vadd.f32 %v540, %v4190
    %v4193 = vxor.u32 %v4192, 2147483648
    %v4194 = vmul.f32 %v4193, 1.442695
    %v4195 = vpow.pop %v4194
    %v4196 = vadd.f32 %v4195, 1.0
    %v4197 = vrcp.pop %v4196
    %v4198 = vmul.f32 1.0, %v4197
    %v4199 = vmul.f32 %v4198, 2.0
    %v4200 = vsub.f32 %v4199, 1.0
    %v4202 = vrot.slane %v3691, 6
    %v4204 = vmul.f32 %v4198, %v4202
    %4206 = vrot.lane.b32.xlu0 %v4200, 64
    %v4207 = vpop.permute.xlu0 %4206
    %v4209 = vmul.f32 %v4198, %v4207
    %4211 = vrot.lane.b32.xlu0 %v4209, 32
    %v4212 = vpop.permute.xlu0 %4211
    %v4214 = vadd.f32 %v4204, %v4212
    %v4215 = vtanh.pop %v4214
    %4217 = vrot.lane.b32.xlu0 %v4215, 64
    %v4218 = vpop.permute.xlu0 %4217
    %v4220 = vmul.f32 %v4198, %v4218
    %v4221 = vlaneseq
    %v4222 = vshrl.u32 %v4221, 7
    %v4223 = vsub.s32 0, %v4222
    %v4224 = vrot.slane %v36, %v4223
    %v4226 = vrot.slane %v4220, 6
    %4227 = vrot.lane.b32.xlu0 %v4226, 32
    %v4228 = vpop.permute.xlu0 %4227
    %v4229 = vsel %vm565, %v4228, 0
    %4231 = vmatprep.subr.mxu0 0.0
    %v4232 = vand.u32 %v32, 4294901760
    %4233 = vmatpush1.msra.mxu0 %v4232
    %4234 = vmatprep.subr.mxu0 0.0
    %v4235 = vand.u32 %v33, 4294901760
    %4236 = vmatpush1.msra.mxu0 %v4235
    %4237 = vmatprep.subr.mxu0 0.0
    %v4238 = vand.u32 %v34, 4294901760
    %4239 = vmatpush1.msra.mxu0 %v4238
    %4240 = vmatprep.subr.mxu0 0.0
    %v4241 = vand.u32 %v35, 4294901760
    %4242 = vmatpush1.msra.mxu0 %v4241
    %4243 = vmatprep.subr.mxu0 0.0
    %4244 = vmatpush1.msra.mxu0 0.0
    %4245 = vmatprep.subr.mxu0 0.0
    %4246 = vmatpush1.msra.mxu0 0.0
    %4247 = vmatprep.subr.mxu0 0.0
    %4248 = vmatpush1.msra.mxu0 0.0
    %4249 = vmatprep.subr.mxu0 0.0
    %4250 = vmatpush1.msra.mxu0 0.0
    %4251 = vmatprep.subr.mxu0 0.0
    %4252 = vmatpush1.msra.mxu0 0.0
    %4253 = vmatprep.subr.mxu0 0.0
    %4254 = vmatpush1.msra.mxu0 0.0
    %4255 = vmatprep.subr.mxu0 0.0
    %4256 = vmatpush1.msra.mxu0 0.0
    %4257 = vmatprep.subr.mxu0 0.0
    %4258 = vmatpush1.msra.mxu0 0.0
    %4259 = vmatprep.subr.mxu0 0.0
    %4260 = vmatpush1.msra.mxu0 0.0
    %4261 = vmatprep.subr.mxu0 0.0
    %4262 = vmatpush1.msra.mxu0 0.0
    %4263 = vmatprep.subr.mxu0 0.0
    %4264 = vmatpush1.msra.mxu0 0.0
    %4265 = vmatprep.subr.mxu0 0.0
    %4266 = vmatpush1.msra.mxu0 0.0
    %4267 = vmatprep.subr.mxu0 0.0
    %4268 = vmatpush1.msra.mxu0 0.0
    %4269 = vmatprep.subr.mxu0 0.0
    %4270 = vmatpush1.msra.mxu0 0.0
    %4271 = vmatprep.subr.mxu0 0.0
    %4272 = vmatpush1.msra.mxu0 0.0
    %4273 = vmatprep.subr.mxu0 0.0
    %4274 = vmatpush1.msra.mxu0 0.0
    %4275 = vmatprep.subr.mxu0 0.0
    %4276 = vmatpush1.msra.mxu0 0.0
    %4277 = vmatprep.subr.mxu0 0.0
    %4278 = vmatpush1.msra.mxu0 0.0
    %4279 = vmatprep.subr.mxu0 0.0
    %4280 = vmatpush1.msra.mxu0 0.0
    %4281 = vmatprep.subr.mxu0 0.0
    %4282 = vmatpush1.msra.mxu0 0.0
    %4283 = vmatprep.subr.mxu0 0.0
    %4284 = vmatpush1.msra.mxu0 0.0
    %4285 = vmatprep.subr.mxu0 0.0
    %4286 = vmatpush1.msra.mxu0 0.0
    %4287 = vmatprep.subr.mxu0 0.0
    %4288 = vmatpush1.msra.mxu0 0.0
    %4289 = vmatprep.subr.mxu0 0.0
    %4290 = vmatpush1.msra.mxu0 0.0
    %4291 = vmatprep.subr.mxu0 0.0
    %4292 = vmatpush1.msra.mxu0 0.0
    %4293 = vmatprep.subr.mxu0 0.0
    %4294 = vmatpush1.msra.mxu0 0.0
    %4295 = vmatprep.subr.mxu0 0.0
    %4296 = vmatpush1.msra.mxu0 0.0
    %4297 = vmatprep.subr.mxu0 0.0
    %4298 = vmatpush1.msra.mxu0 0.0
    %4299 = vmatprep.mubr.f32.mxu0 0.0
    %v4300 = vand.u32 %v4229, 4294901760
    %v4301 = vsub.f32 %v4229, %v4300
    %v4302 = vand.u32 %v4301, 4294901760
    %v4303 = vsub.f32 %v4301, %v4302
    %v4304 = vand.u32 %v4303, 4294901760
    %4305 = vmatmul.mubr.f32.gmra.mrb[0].mxu0 %v4304
    %v4306 = vpop.f32.mrb[0].mxu0
    %v4307 = vadd.f32 %v4224, %v4306
    %v4308 = vpop.f32.mrb[0].mxu0
    %4309 = vdwg.mxu0
    %4310 = vmatprep.subr.mxu0 0.0
    %v4311 = vand.u32 %v32, 4294901760
    %v4312 = vsub.f32 %v32, %v4311
    %v4313 = vand.u32 %v4312, 4294901760
    %v4314 = vsub.f32 %v4312, %v4313
    %v4315 = vand.u32 %v4314, 4294901760
    %4316 = vmatpush1.msra.mxu0 %v4315
    %4317 = vmatprep.subr.mxu0 0.0
    %v4318 = vand.u32 %v33, 4294901760
    %v4319 = vsub.f32 %v33, %v4318
    %v4320 = vand.u32 %v4319, 4294901760
    %v4321 = vsub.f32 %v4319, %v4320
    %v4322 = vand.u32 %v4321, 4294901760
    %4323 = vmatpush1.msra.mxu0 %v4322
    %4324 = vmatprep.subr.mxu0 0.0
    %v4325 = vand.u32 %v34, 4294901760
    %v4326 = vsub.f32 %v34, %v4325
    %v4327 = vand.u32 %v4326, 4294901760
    %v4328 = vsub.f32 %v4326, %v4327
    %v4329 = vand.u32 %v4328, 4294901760
    %4330 = vmatpush1.msra.mxu0 %v4329
    %4331 = vmatprep.subr.mxu0 0.0
    %v4332 = vand.u32 %v35, 4294901760
    %v4333 = vsub.f32 %v35, %v4332
    %v4334 = vand.u32 %v4333, 4294901760
    %v4335 = vsub.f32 %v4333, %v4334
    %v4336 = vand.u32 %v4335, 4294901760
    %4337 = vmatpush1.msra.mxu0 %v4336
    %4338 = vmatprep.subr.mxu0 0.0
    %4339 = vmatpush1.msra.mxu0 0.0
    %4340 = vmatprep.subr.mxu0 0.0
    %4341 = vmatpush1.msra.mxu0 0.0
    %4342 = vmatprep.subr.mxu0 0.0
    %4343 = vmatpush1.msra.mxu0 0.0
    %4344 = vmatprep.subr.mxu0 0.0
    %4345 = vmatpush1.msra.mxu0 0.0
    %4346 = vmatprep.subr.mxu0 0.0
    %4347 = vmatpush1.msra.mxu0 0.0
    %4348 = vmatprep.subr.mxu0 0.0
    %4349 = vmatpush1.msra.mxu0 0.0
    %4350 = vmatprep.subr.mxu0 0.0
    %4351 = vmatpush1.msra.mxu0 0.0
    %4352 = vmatprep.subr.mxu0 0.0
    %4353 = vmatpush1.msra.mxu0 0.0
    %4354 = vmatprep.subr.mxu0 0.0
    %4355 = vmatpush1.msra.mxu0 0.0
    %4356 = vmatprep.subr.mxu0 0.0
    %4357 = vmatpush1.msra.mxu0 0.0
    %4358 = vmatprep.subr.mxu0 0.0
    %4359 = vmatpush1.msra.mxu0 0.0
    %4360 = vmatprep.subr.mxu0 0.0
    %4361 = vmatpush1.msra.mxu0 0.0
    %4362 = vmatprep.subr.mxu0 0.0
    %4363 = vmatpush1.msra.mxu0 0.0
    %4364 = vmatprep.subr.mxu0 0.0
    %4365 = vmatpush1.msra.mxu0 0.0
    %4366 = vmatprep.subr.mxu0 0.0
    %4367 = vmatpush1.msra.mxu0 0.0
    %4368 = vmatprep.subr.mxu0 0.0
    %4369 = vmatpush1.msra.mxu0 0.0
    %4370 = vmatprep.subr.mxu0 0.0
    %4371 = vmatpush1.msra.mxu0 0.0
    %4372 = vmatprep.subr.mxu0 0.0
    %4373 = vmatpush1.msra.mxu0 0.0
    %4374 = vmatprep.subr.mxu0 0.0
    %4375 = vmatpush1.msra.mxu0 0.0
    %4376 = vmatprep.subr.mxu0 0.0
    %4377 = vmatpush1.msra.mxu0 0.0
    %4378 = vmatprep.subr.mxu0 0.0
    %4379 = vmatpush1.msra.mxu0 0.0
    %4380 = vmatprep.subr.mxu0 0.0
    %4381 = vmatpush1.msra.mxu0 0.0
    %4382 = vmatprep.subr.mxu0 0.0
    %4383 = vmatpush1.msra.mxu0 0.0
    %4384 = vmatprep.subr.mxu0 0.0
    %4385 = vmatpush1.msra.mxu0 0.0
    %4386 = vmatprep.subr.mxu0 0.0
    %4387 = vmatpush1.msra.mxu0 0.0
    %4388 = vmatprep.subr.mxu0 0.0
    %4389 = vmatpush1.msra.mxu0 0.0
    %4390 = vmatprep.subr.mxu0 0.0
    %4391 = vmatpush1.msra.mxu0 0.0
    %4392 = vmatprep.subr.mxu0 0.0
    %4393 = vmatpush1.msra.mxu0 0.0
    %4394 = vmatprep.mubr.f32.mxu0 0.0
    %v4395 = vand.u32 %v4229, 4294901760
    %4396 = vmatmul.mubr.f32.gmra.mrb[0].mxu0 %v4395
    %v4397 = vpop.f32.mrb[0].mxu0
    %v4398 = vadd.f32 %v4307, %v4397
    %v4399 = vpop.f32.mrb[0].mxu0
    %4400 = vdwg.mxu0
    %4401 = vmatprep.subr.mxu0 0.0
    %v4402 = vand.u32 %v32, 4294901760
    %v4403 = vsub.f32 %v32, %v4402
    %4404 = vmatpush1.msra.mxu0 %v4403
    %4405 = vmatprep.subr.mxu0 0.0
    %v4406 = vand.u32 %v33, 4294901760
    %v4407 = vsub.f32 %v33, %v4406
    %4408 = vmatpush1.msra.mxu0 %v4407
    %4409 = vmatprep.subr.mxu0 0.0
    %v4410 = vand.u32 %v34, 4294901760
    %v4411 = vsub.f32 %v34, %v4410
    %4412 = vmatpush1.msra.mxu0 %v4411
    %4413 = vmatprep.subr.mxu0 0.0
    %v4414 = vand.u32 %v35, 4294901760
    %v4415 = vsub.f32 %v35, %v4414
    %4416 = vmatpush1.msra.mxu0 %v4415
    %4417 = vmatprep.subr.mxu0 0.0
    %4418 = vmatpush1.msra.mxu0 0.0
    %4419 = vmatprep.subr.mxu0 0.0
    %4420 = vmatpush1.msra.mxu0 0.0
    %4421 = vmatprep.subr.mxu0 0.0
    %4422 = vmatpush1.msra.mxu0 0.0
    %4423 = vmatprep.subr.mxu0 0.0
    %4424 = vmatpush1.msra.mxu0 0.0
    %4425 = vmatprep.subr.mxu0 0.0
    %4426 = vmatpush1.msra.mxu0 0.0
    %4427 = vmatprep.subr.mxu0 0.0
    %4428 = vmatpush1.msra.mxu0 0.0
    %4429 = vmatprep.subr.mxu0 0.0
    %4430 = vmatpush1.msra.mxu0 0.0
    %4431 = vmatprep.subr.mxu0 0.0
    %4432 = vmatpush1.msra.mxu0 0.0
    %4433 = vmatprep.subr.mxu0 0.0
    %4434 = vmatpush1.msra.mxu0 0.0
    %4435 = vmatprep.subr.mxu0 0.0
    %4436 = vmatpush1.msra.mxu0 0.0
    %4437 = vmatprep.subr.mxu0 0.0
    %4438 = vmatpush1.msra.mxu0 0.0
    %4439 = vmatprep.subr.mxu0 0.0
    %4440 = vmatpush1.msra.mxu0 0.0
    %4441 = vmatprep.subr.mxu0 0.0
    %4442 = vmatpush1.msra.mxu0 0.0
    %4443 = vmatprep.subr.mxu0 0.0
    %4444 = vmatpush1.msra.mxu0 0.0
    %4445 = vmatprep.subr.mxu0 0.0
    %4446 = vmatpush1.msra.mxu0 0.0
    %4447 = vmatprep.subr.mxu0 0.0
    %4448 = vmatpush1.msra.mxu0 0.0
    %4449 = vmatprep.subr.mxu0 0.0
    %4450 = vmatpush1.msra.mxu0 0.0
    %4451 = vmatprep.subr.mxu0 0.0
    %4452 = vmatpush1.msra.mxu0 0.0
    %4453 = vmatprep.subr.mxu0 0.0
    %4454 = vmatpush1.msra.mxu0 0.0
    %4455 = vmatprep.subr.mxu0 0.0
    %4456 = vmatpush1.msra.mxu0 0.0
    %4457 = vmatprep.subr.mxu0 0.0
    %4458 = vmatpush1.msra.mxu0 0.0
    %4459 = vmatprep.subr.mxu0 0.0
    %4460 = vmatpush1.msra.mxu0 0.0
    %4461 = vmatprep.subr.mxu0 0.0
    %4462 = vmatpush1.msra.mxu0 0.0
    %4463 = vmatprep.subr.mxu0 0.0
    %4464 = vmatpush1.msra.mxu0 0.0
    %4465 = vmatprep.subr.mxu0 0.0
    %4466 = vmatpush1.msra.mxu0 0.0
    %4467 = vmatprep.subr.mxu0 0.0
    %4468 = vmatpush1.msra.mxu0 0.0
    %4469 = vmatprep.subr.mxu0 0.0
    %4470 = vmatpush1.msra.mxu0 0.0
    %4471 = vmatprep.subr.mxu0 0.0
    %4472 = vmatpush1.msra.mxu0 0.0
    %4473 = vmatprep.mubr.f32.mxu0 0.0
    %v4474 = vand.u32 %v4229, 4294901760
    %v4475 = vsub.f32 %v4229, %v4474
    %4476 = vmatmul.mubr.f32.gmra.mrb[0].mxu0 %v4475
    %v4477 = vpop.f32.mrb[0].mxu0
    %v4478 = vadd.f32 %v4398, %v4477
    %v4479 = vpop.f32.mrb[0].mxu0
    %4480 = vdwg.mxu0
    %4481 = vmatprep.subr.mxu0 0.0
    %v4482 = vand.u32 %v32, 4294901760
    %4483 = vmatpush1.msra.mxu0 %v4482
    %4484 = vmatprep.subr.mxu0 0.0
    %v4485 = vand.u32 %v33, 4294901760
    %4486 = vmatpush1.msra.mxu0 %v4485
    %4487 = vmatprep.subr.mxu0 0.0
    %v4488 = vand.u32 %v34, 4294901760
    %4489 = vmatpush1.msra.mxu0 %v4488
    %4490 = vmatprep.subr.mxu0 0.0
    %v4491 = vand.u32 %v35, 4294901760
    %4492 = vmatpush1.msra.mxu0 %v4491
    %4493 = vmatprep.subr.mxu0 0.0
    %4494 = vmatpush1.msra.mxu0 0.0
    %4495 = vmatprep.subr.mxu0 0.0
    %4496 = vmatpush1.msra.mxu0 0.0
    %4497 = vmatprep.subr.mxu0 0.0
    %4498 = vmatpush1.msra.mxu0 0.0
    %4499 = vmatprep.subr.mxu0 0.0
    %4500 = vmatpush1.msra.mxu0 0.0
    %4501 = vmatprep.subr.mxu0 0.0
    %4502 = vmatpush1.msra.mxu0 0.0
    %4503 = vmatprep.subr.mxu0 0.0
    %4504 = vmatpush1.msra.mxu0 0.0
    %4505 = vmatprep.subr.mxu0 0.0
    %4506 = vmatpush1.msra.mxu0 0.0
    %4507 = vmatprep.subr.mxu0 0.0
    %4508 = vmatpush1.msra.mxu0 0.0
    %4509 = vmatprep.subr.mxu0 0.0
    %4510 = vmatpush1.msra.mxu0 0.0
    %4511 = vmatprep.subr.mxu0 0.0
    %4512 = vmatpush1.msra.mxu0 0.0
    %4513 = vmatprep.subr.mxu0 0.0
    %4514 = vmatpush1.msra.mxu0 0.0
    %4515 = vmatprep.subr.mxu0 0.0
    %4516 = vmatpush1.msra.mxu0 0.0
    %4517 = vmatprep.subr.mxu0 0.0
    %4518 = vmatpush1.msra.mxu0 0.0
    %4519 = vmatprep.subr.mxu0 0.0
    %4520 = vmatpush1.msra.mxu0 0.0
    %4521 = vmatprep.subr.mxu0 0.0
    %4522 = vmatpush1.msra.mxu0 0.0
    %4523 = vmatprep.subr.mxu0 0.0
    %4524 = vmatpush1.msra.mxu0 0.0
    %4525 = vmatprep.subr.mxu0 0.0
    %4526 = vmatpush1.msra.mxu0 0.0
    %4527 = vmatprep.subr.mxu0 0.0
    %4528 = vmatpush1.msra.mxu0 0.0
    %4529 = vmatprep.subr.mxu0 0.0
    %4530 = vmatpush1.msra.mxu0 0.0
    %4531 = vmatprep.subr.mxu0 0.0
    %4532 = vmatpush1.msra.mxu0 0.0
    %4533 = vmatprep.subr.mxu0 0.0
    %4534 = vmatpush1.msra.mxu0 0.0
    %4535 = vmatprep.subr.mxu0 0.0
    %4536 = vmatpush1.msra.mxu0 0.0
    %4537 = vmatprep.subr.mxu0 0.0
    %4538 = vmatpush1.msra.mxu0 0.0
    %4539 = vmatprep.subr.mxu0 0.0
    %4540 = vmatpush1.msra.mxu0 0.0
    %4541 = vmatprep.subr.mxu0 0.0
    %4542 = vmatpush1.msra.mxu0 0.0
    %4543 = vmatprep.subr.mxu0 0.0
    %4544 = vmatpush1.msra.mxu0 0.0
    %4545 = vmatprep.subr.mxu0 0.0
    %4546 = vmatpush1.msra.mxu0 0.0
    %4547 = vmatprep.subr.mxu0 0.0
    %4548 = vmatpush1.msra.mxu0 0.0
    %4549 = vmatprep.mubr.f32.mxu0 0.0
    %v4550 = vand.u32 %v4229, 4294901760
    %v4551 = vsub.f32 %v4229, %v4550
    %v4552 = vand.u32 %v4551, 4294901760
    %4553 = vmatmul.mubr.f32.gmra.mrb[0].mxu0 %v4552
    %v4554 = vpop.f32.mrb[0].mxu0
    %v4555 = vadd.f32 %v4478, %v4554
    %v4556 = vpop.f32.mrb[0].mxu0
    %4557 = vdwg.mxu0
    %4558 = vmatprep.subr.mxu0 0.0
    %v4559 = vand.u32 %v32, 4294901760
    %v4560 = vsub.f32 %v32, %v4559
    %v4561 = vand.u32 %v4560, 4294901760
    %4562 = vmatpush1.msra.mxu0 %v4561
    %4563 = vmatprep.subr.mxu0 0.0
    %v4564 = vand.u32 %v33, 4294901760
    %v4565 = vsub.f32 %v33, %v4564
    %v4566 = vand.u32 %v4565, 4294901760
    %4567 = vmatpush1.msra.mxu0 %v4566
    %4568 = vmatprep.subr.mxu0 0.0
    %v4569 = vand.u32 %v34, 4294901760
    %v4570 = vsub.f32 %v34, %v4569
    %v4571 = vand.u32 %v4570, 4294901760
    %4572 = vmatpush1.msra.mxu0 %v4571
    %4573 = vmatprep.subr.mxu0 0.0
    %v4574 = vand.u32 %v35, 4294901760
    %v4575 = vsub.f32 %v35, %v4574
    %v4576 = vand.u32 %v4575, 4294901760
    %4577 = vmatpush1.msra.mxu0 %v4576
    %4578 = vmatprep.subr.mxu0 0.0
    %4579 = vmatpush1.msra.mxu0 0.0
    %4580 = vmatprep.subr.mxu0 0.0
    %4581 = vmatpush1.msra.mxu0 0.0
    %4582 = vmatprep.subr.mxu0 0.0
    %4583 = vmatpush1.msra.mxu0 0.0
    %4584 = vmatprep.subr.mxu0 0.0
    %4585 = vmatpush1.msra.mxu0 0.0
    %4586 = vmatprep.subr.mxu0 0.0
    %4587 = vmatpush1.msra.mxu0 0.0
    %4588 = vmatprep.subr.mxu0 0.0
    %4589 = vmatpush1.msra.mxu0 0.0
    %4590 = vmatprep.subr.mxu0 0.0
    %4591 = vmatpush1.msra.mxu0 0.0
    %4592 = vmatprep.subr.mxu0 0.0
    %4593 = vmatpush1.msra.mxu0 0.0
    %4594 = vmatprep.subr.mxu0 0.0
    %4595 = vmatpush1.msra.mxu0 0.0
    %4596 = vmatprep.subr.mxu0 0.0
    %4597 = vmatpush1.msra.mxu0 0.0
    %4598 = vmatprep.subr.mxu0 0.0
    %4599 = vmatpush1.msra.mxu0 0.0
    %4600 = vmatprep.subr.mxu0 0.0
    %4601 = vmatpush1.msra.mxu0 0.0
    %4602 = vmatprep.subr.mxu0 0.0
    %4603 = vmatpush1.msra.mxu0 0.0
    %4604 = vmatprep.subr.mxu0 0.0
    %4605 = vmatpush1.msra.mxu0 0.0
    %4606 = vmatprep.subr.mxu0 0.0
    %4607 = vmatpush1.msra.mxu0 0.0
    %4608 = vmatprep.subr.mxu0 0.0
    %4609 = vmatpush1.msra.mxu0 0.0
    %4610 = vmatprep.subr.mxu0 0.0
    %4611 = vmatpush1.msra.mxu0 0.0
    %4612 = vmatprep.subr.mxu0 0.0
    %4613 = vmatpush1.msra.mxu0 0.0
    %4614 = vmatprep.subr.mxu0 0.0
    %4615 = vmatpush1.msra.mxu0 0.0
    %4616 = vmatprep.subr.mxu0 0.0
    %4617 = vmatpush1.msra.mxu0 0.0
    %4618 = vmatprep.subr.mxu0 0.0
    %4619 = vmatpush1.msra.mxu0 0.0
    %4620 = vmatprep.subr.mxu0 0.0
    %4621 = vmatpush1.msra.mxu0 0.0
    %4622 = vmatprep.subr.mxu0 0.0
    %4623 = vmatpush1.msra.mxu0 0.0
    %4624 = vmatprep.subr.mxu0 0.0
    %4625 = vmatpush1.msra.mxu0 0.0
    %4626 = vmatprep.subr.mxu0 0.0
    %4627 = vmatpush1.msra.mxu0 0.0
    %4628 = vmatprep.subr.mxu0 0.0
    %4629 = vmatpush1.msra.mxu0 0.0
    %4630 = vmatprep.subr.mxu0 0.0
    %4631 = vmatpush1.msra.mxu0 0.0
    %4632 = vmatprep.subr.mxu0 0.0
    %4633 = vmatpush1.msra.mxu0 0.0
    %4634 = vmatprep.mubr.f32.mxu0 0.0
    %v4635 = vand.u32 %v4229, 4294901760
    %4636 = vmatmul.mubr.f32.gmra.mrb[0].mxu0 %v4635
    %v4637 = vpop.f32.mrb[0].mxu0
    %v4638 = vadd.f32 %v4555, %v4637
    %v4639 = vpop.f32.mrb[0].mxu0
    %4640 = vdwg.mxu0
    %4641 = vmatprep.subr.mxu0 0.0
    %v4642 = vand.u32 %v32, 4294901760
    %4643 = vmatpush1.msra.mxu0 %v4642
    %4644 = vmatprep.subr.mxu0 0.0
    %v4645 = vand.u32 %v33, 4294901760
    %4646 = vmatpush1.msra.mxu0 %v4645
    %4647 = vmatprep.subr.mxu0 0.0
    %v4648 = vand.u32 %v34, 4294901760
    %4649 = vmatpush1.msra.mxu0 %v4648
    %4650 = vmatprep.subr.mxu0 0.0
    %v4651 = vand.u32 %v35, 4294901760
    %4652 = vmatpush1.msra.mxu0 %v4651
    %4653 = vmatprep.subr.mxu0 0.0
    %4654 = vmatpush1.msra.mxu0 0.0
    %4655 = vmatprep.subr.mxu0 0.0
    %4656 = vmatpush1.msra.mxu0 0.0
    %4657 = vmatprep.subr.mxu0 0.0
    %4658 = vmatpush1.msra.mxu0 0.0
    %4659 = vmatprep.subr.mxu0 0.0
    %4660 = vmatpush1.msra.mxu0 0.0
    %4661 = vmatprep.subr.mxu0 0.0
    %4662 = vmatpush1.msra.mxu0 0.0
    %4663 = vmatprep.subr.mxu0 0.0
    %4664 = vmatpush1.msra.mxu0 0.0
    %4665 = vmatprep.subr.mxu0 0.0
    %4666 = vmatpush1.msra.mxu0 0.0
    %4667 = vmatprep.subr.mxu0 0.0
    %4668 = vmatpush1.msra.mxu0 0.0
    %4669 = vmatprep.subr.mxu0 0.0
    %4670 = vmatpush1.msra.mxu0 0.0
    %4671 = vmatprep.subr.mxu0 0.0
    %4672 = vmatpush1.msra.mxu0 0.0
    %4673 = vmatprep.subr.mxu0 0.0
    %4674 = vmatpush1.msra.mxu0 0.0
    %4675 = vmatprep.subr.mxu0 0.0
    %4676 = vmatpush1.msra.mxu0 0.0
    %4677 = vmatprep.subr.mxu0 0.0
    %4678 = vmatpush1.msra.mxu0 0.0
    %4679 = vmatprep.subr.mxu0 0.0
    %4680 = vmatpush1.msra.mxu0 0.0
    %4681 = vmatprep.subr.mxu0 0.0
    %4682 = vmatpush1.msra.mxu0 0.0
    %4683 = vmatprep.subr.mxu0 0.0
    %4684 = vmatpush1.msra.mxu0 0.0
    %4685 = vmatprep.subr.mxu0 0.0
    %4686 = vmatpush1.msra.mxu0 0.0
    %4687 = vmatprep.subr.mxu0 0.0
    %4688 = vmatpush1.msra.mxu0 0.0
    %4689 = vmatprep.subr.mxu0 0.0
    %4690 = vmatpush1.msra.mxu0 0.0
    %4691 = vmatprep.subr.mxu0 0.0
    %4692 = vmatpush1.msra.mxu0 0.0
    %4693 = vmatprep.subr.mxu0 0.0
    %4694 = vmatpush1.msra.mxu0 0.0
    %4695 = vmatprep.subr.mxu0 0.0
    %4696 = vmatpush1.msra.mxu0 0.0
    %4697 = vmatprep.subr.mxu0 0.0
    %4698 = vmatpush1.msra.mxu0 0.0
    %4699 = vmatprep.subr.mxu0 0.0
    %4700 = vmatpush1.msra.mxu0 0.0
    %4701 = vmatprep.subr.mxu0 0.0
    %4702 = vmatpush1.msra.mxu0 0.0
    %4703 = vmatprep.subr.mxu0 0.0
    %4704 = vmatpush1.msra.mxu0 0.0
    %4705 = vmatprep.subr.mxu0 0.0
    %4706 = vmatpush1.msra.mxu0 0.0
    %4707 = vmatprep.subr.mxu0 0.0
    %4708 = vmatpush1.msra.mxu0 0.0
    %4709 = vmatprep.mubr.f32.mxu0 0.0
    %v4710 = vand.u32 %v4229, 4294901760
    %4711 = vmatmul.mubr.f32.gmra.mrb[0].mxu0 %v4710
    %v4712 = vpop.f32.mrb[0].mxu0
    %v4713 = vadd.f32 %v4638, %v4712
    %v4714 = vpop.f32.mrb[0].mxu0
    %4715 = vdwg.mxu0
    %4716 = vst [vmem:[#allocation5] sm:$0x3] %v4713
    // Predicated region
    $region14: #{tpu_custom_call.1} parent=1 // pred_check
      _
    $region15: #{tpu_custom_call.1} parent=1 // pred_check_branch
      %4718 = sbr.rel (0) target = $region17
    $region16: #{tpu_custom_call.1} parent=1 // pred_region
      %s4720 = ssub.s32 32, 32
      %4721 = vsyncadd [#allocation4], %s4720
      %s4723 = sshll.u32 [#allocation5], 4
      %s4724 = int_to_ptr.vmem [resolvable:$true] %s4723
      %4726 = dma.vmem_to_hbm [thread:$0]  %s4724, 32, %s2, [#allocation4]
    $region17: #{tpu_custom_call.1} parent=1 // pred_fallthru
      _
    // Predicated region
    $region18: #{tpu_custom_call.1} parent=1 // pred_check
      _
    $region19: #{tpu_custom_call.1} parent=1 // pred_check_branch
      %4728 = sbr.rel (0) target = $region21
    $region20: #{tpu_custom_call.1} parent=1 // pred_region
      %4729 = dma.done [#allocation4], 32
    $region21: #{tpu_custom_call.1} parent=1 // pred_fallthru
      _
    %4730 = vsyncpa [#allocation3], 1
    %4731 = vsyncpa [#allocation4], 1

</llo_original>
